<compile_context>
chip_gen: v6e
topology: v6e:2x2x1
jax: 0.10.0
libtpu: 0.0.40
codegen_flags: <defaults>
</compile_context>

<pallas_src>
import functools

import jax
import jax.numpy as jnp
from jax.experimental import pallas as pl
from jax.experimental.pallas import tpu as pltpu

K = 7            # conv kernel size
PAD = K // 2     # 'same' padding

_TARGET_BLOCK_BYTES = 4 * 1024 * 1024   # per-pipelined-block DMA sweet spot


def _round_up(n, m):
    return ((n + m - 1) // m) * m


def _divisors(n):
    out = set()
    d = 1
    while d * d <= n:
        if n % d == 0:
            out.add(d)
            out.add(n // d)
        d += 1
    return sorted(out)


@functools.lru_cache(maxsize=1)
def _vmem_limit_bytes():
    """Scoped-VMEM limit: ~3/4 of per-core capacity (96 MiB v5e/v6e, 48 MiB v7x)."""
    cap = 64 * 1024 * 1024                      # conservative default (v7x)
    try:
        cap = int(pltpu.get_tpu_info().vmem_capacity_bytes) or cap
    except Exception:
        pass
    return int(min(cap * 3 // 4, 96 * 1024 * 1024))


def _pick_channel_tile(C, row_bytes, target):
    """Channel tile dividing C: multiple of 8 (or all of C), ~`target` bytes."""
    if C * row_bytes <= target or C <= 8:
        return C
    cap = max(1, target // max(1, row_bytes))
    aligned = [d for d in _divisors(C) if d % 8 == 0]
    fit = [d for d in aligned if d <= cap]
    if fit:
        return max(fit)
    if aligned:
        return min(aligned)      # bounded overshoot: exactly 8 channel rows min
    return C                     # no multiple-of-8 divisor -> keep full extent


def _pick_hw_tile(HW, esize, target):
    """Spatial (lane) tile dividing HW: multiple of 128 (or all of HW)."""
    if HW * esize <= target:
        return HW
    cap = max(128, target // max(1, esize))
    aligned = [d for d in _divisors(HW) if d % 128 == 0]
    fit = [d for d in aligned if d <= cap]
    if fit:
        return max(fit)
    if aligned:
        return min(aligned)
    return HW


# --------------------------------------------------------------------------
# In-kernel helpers
# --------------------------------------------------------------------------
def _chunked_channel_stats(x_ref, chunk):
    """f32 (sum, max) over the channel axis of a (bt, c, HW) block, streamed in
    `chunk`-sublane slices so no large x value stays live in vregs."""
    bt, c, hw = x_ref.shape
    s = jnp.zeros((bt, hw), jnp.float32)
    m = jnp.full((bt, hw), -jnp.inf, jnp.float32)

    def accum(cs, cm, blk):
        blk = blk.astype(jnp.float32)
        return cs + jnp.sum(blk, axis=1), jnp.maximum(cm, jnp.max(blk, axis=1))

    n_full, rem = divmod(c, chunk)
    if n_full > 0:
        if n_full <= 16:                      # static unroll, static slices
            for k in range(n_full):
                s, m = accum(s, m, x_ref[:, k * chunk:(k + 1) * chunk, :])
        else:
            def body(k, carry):
                cs, cm = carry
                st = pl.multiple_of(k * chunk, chunk)
                return accum(cs, cm, x_ref[:, pl.ds(st, chunk), :])
            s, m = jax.lax.fori_loop(0, n_full, body, (s, m))
    if rem:
        s, m = accum(s, m, x_ref[:, n_full * chunk:c, :])
    return s, m


def _conv7x7_sigmoid(w_ref, cmask_ref, pad_ref, acc_ref, avg, mx, W, HW):
    """sigmoid(conv2d([avg; mx], w, padding=3)) on flattened (bt, H*W) planes.

    pad_ref : (bt, 2, L) f32 scratch, L = round_up((H + 6) * W, 128).  Rows are
              stored flattened with 3 zero rows of top/bottom padding, so row
              shifts need no masking; wholly zeroed each call (parallel-safe).
    acc_ref : (bt, L) f32 scratch accumulator (keeps the 98-tap loop out of vregs).
    cmask_ref : (K, L) f32 source-column masks: zero the columns whose shift by
              (b - 3) would wrap into a neighbouring image row.
    Returns the (bt, HW) f32 attention map.
    """
    L = pad_ref.shape[-1]
    off = PAD * W
    pad_ref[...] = jnp.zeros(pad_ref.shape, jnp.float32)
    pad_ref[:, 0, off:off + HW] = avg
    pad_ref[:, 1, off:off + HW] = mx

    first = True
    for cin in range(2):
        plane = pad_ref[:, cin, :]                       # (bt, L)
        for b in range(K):
            masked = plane * cmask_ref[b:b + 1, :]       # column-shift validity
            for a in range(K):
                shift = (-(a * W + (b - PAD))) % L       # static lane roll (XLU)
                rolled = masked if shift == 0 else pltpu.roll(masked, shift, axis=1)
                tap = w_ref[cin * K * K + a * K + b] * rolled
                if first:
                    acc_ref[...] = tap
                    first = False
                else:
                    acc_ref[...] = acc_ref[...] + tap
    return jax.nn.sigmoid(acc_ref[:, :HW])


# --------------------------------------------------------------------------
# Kernels
# --------------------------------------------------------------------------
def _make_fused_kernel(W, HW, chunk, inv_c):
    """Fused: channel mean/max -> 7x7 conv + sigmoid -> out = x * attn."""
    def kernel(w_ref, cmask_ref, x_ref, o_ref, pad_ref, acc_ref, attn_ref):
        s, m = _chunked_channel_stats(x_ref, chunk)
        attn = _conv7x7_sigmoid(w_ref, cmask_ref, pad_ref, acc_ref,
                                s * inv_c, m, W, HW)
        attn_ref[:, 0, :] = attn.astype(attn_ref.dtype)      # cast once
        a3 = attn_ref[...]                                    # (bt, 1, HW), x.dtype

        bt, c, hw = x_ref.shape
        n_full, rem = divmod(c, chunk)
        if n_full > 0:
            if n_full <= 16:
                for k in range(n_full):
                    sl = slice(k * chunk, (k + 1) * chunk)
                    o_ref[:, sl, :] = x_ref[:, sl, :] * a3
            else:
                def body(k, _):
                    st = pl.multiple_of(k * chunk, chunk)
                    o_ref[:, pl.ds(st, chunk), :] = x_ref[:, pl.ds(st, chunk), :] * a3
                    return 0
                jax.lax.fori_loop(0, n_full, body, 0)
        if rem:
            sl = slice(n_full * chunk, c)
            o_ref[:, sl, :] = x_ref[:, sl, :] * a3
    return kernel


def _make_reduce_conv_kernel(W, HW, chunk, inv_c):
    """Split pass A: channel reduce across channel tiles; conv + sigmoid folded
    into the finalize step (emits attn directly in x.dtype)."""
    def kernel(w_ref, cmask_ref, x_ref, attn_ref, sum_ref, max_ref, pad_ref, acc_ref):
        ci = pl.program_id(1)

        @pl.when(ci == 0)
        def _():
            sum_ref[...] = jnp.zeros(sum_ref.shape, jnp.float32)
            max_ref[...] = jnp.full(max_ref.shape, -jnp.inf, jnp.float32)

        s, m = _chunked_channel_stats(x_ref, chunk)
        sum_ref[...] = sum_ref[...] + s
        max_ref[...] = jnp.maximum(max_ref[...], m)

        @pl.when(ci == pl.num_programs(1) - 1)
        def _():
            attn = _conv7x7_sigmoid(w_ref, cmask_ref, pad_ref, acc_ref,
                                    sum_ref[...] * inv_c, max_ref[...], W, HW)
            attn_ref[:, 0, :] = attn.astype(attn_ref.dtype)
    return kernel


def _apply_kernel(x_ref, a_ref, o_ref):
    # attn is already in x.dtype; lane-dense block, unmasked stores.
    o_ref[...] = x_ref[...] * a_ref[...]


# --------------------------------------------------------------------------
# Wrapper
# --------------------------------------------------------------------------
@functools.partial(jax.jit, static_argnames=("force_path",))
def spatial_attention(x, conv_weight, force_path=None):
    """x: (B, C, H, W); conv_weight: (1, 2, K, K). Returns (B, C, H, W)."""
    assert force_path in (None, "fused", "split")
    B, C, H, W = x.shape
    HW = H * W
    esize = x.dtype.itemsize
    inv_c = 1.0 / C
    L = _round_up((H + 2 * PAD) * W, 128)          # flattened, row-padded plane
    chunk = max(8, 8 * (4 // esize))               # 8 f32 / 16 bf16 sublanes
    vmem_limit = _vmem_limit_bytes()
    budget = int(vmem_limit * 0.85)

    x_flat = x.reshape(B, C, HW)                               # lane-dense view
    w_flat = conv_weight.reshape(-1).astype(jnp.float32)       # (2*K*K,) in SMEM

    # Source-column masks for the flattened 7x7 conv (see _conv7x7_sigmoid):
    # cmask[b, p] = 1 iff shifting column (p % W) by (b - 3) stays inside a row.
    col = jax.lax.broadcasted_iota(jnp.int32, (K, L), 1) % W
    boff = jax.lax.broadcasted_iota(jnp.int32, (K, L), 0) - PAD
    dst_col = col - boff
    cmask = ((dst_col >= 0) & (dst_col < W)).astype(jnp.float32)

    conv_scratch_bytes = 3 * L * 4                 # pad (2L) + acc (L), f32

    def _pick_bt(need_fn):
        """Largest batch tile <= 8 that divides B, keeps >=2 grid points when
        B >= 2 (megacore), and fits the VMEM budget. 0 if nothing fits."""
        best = 0
        for d in _divisors(B):
            if d > 8:
                continue
            if B >= 2 and B // d < 2:
                continue
            if need_fn(d) <= budget:
                best = max(best, d)
        return best

    def fused_need(d):
        return (4 * d * C * HW * esize                       # x + out, dbl-buffered
                + d * (conv_scratch_bytes + HW * esize + 8 * HW * 4)
                + 2 * K * L * 4 + (1 << 20))                 # masks + headroom

    bt_fused = _pick_bt(fused_need)
    use_fused = (force_path == "fused") or (force_path is None and bt_fused > 0)

    if use_fused:
        bt = max(bt_fused, 1)
        out_flat = pl.pallas_call(
            _make_fused_kernel(W, HW, chunk, inv_c),
            out_shape=jax.ShapeDtypeStruct((B, C, HW), x.dtype),
            grid_spec=pltpu.PrefetchScalarGridSpec(
                num_scalar_prefetch=0,
                grid=(B // bt,),
                in_specs=[pl.BlockSpec(memory_space=pltpu.SMEM),
                          pl.BlockSpec((K, L), lambda b: (0, 0)),
                          pl.BlockSpec((bt, C, HW), lambda b: (b, 0, 0))],
                out_specs=pl.BlockSpec((bt, C, HW), lambda b: (b, 0, 0)),
                scratch_shapes=[pltpu.VMEM((bt, 2, L), jnp.float32),
                                pltpu.VMEM((bt, L), jnp.float32),
                                pltpu.VMEM((bt, 1, HW), x.dtype)],
            ),
            compiler_params=pltpu.CompilerParams(
                dimension_semantics=("parallel",),
                vmem_limit_bytes=vmem_limit),
        )(w_flat, cmask, x_flat)
        return out_flat.reshape(B, C, H, W)

    # ---------------- split path: reduce+conv, then tiled apply ----------------
    def split_a_need(d):
        ct_d = _pick_channel_tile(C, d * HW * esize, _TARGET_BLOCK_BYTES)
        return (2 * d * ct_d * HW * esize
                + d * (2 * HW * 4 + conv_scratch_bytes + 2 * HW * esize)
                + 2 * K * L * 4 + (1 << 20))

    bt_a = _pick_bt(split_a_need) or 1
    ct = _pick_channel_tile(C, bt_a * HW * esize, _TARGET_BLOCK_BYTES)

    attn = pl.pallas_call(
        _make_reduce_conv_kernel(W, HW, chunk, inv_c),
        out_shape=jax.ShapeDtypeStruct((B, 1, HW), x.dtype),
        grid_spec=pltpu.PrefetchScalarGridSpec(
            num_scalar_prefetch=0,
            grid=(B // bt_a, C // ct),
            in_specs=[pl.BlockSpec(memory_space=pltpu.SMEM),
                      pl.BlockSpec((K, L), lambda b, c: (0, 0)),
                      pl.BlockSpec((bt_a, ct, HW), lambda b, c: (b, c, 0))],
            out_specs=pl.BlockSpec((bt_a, 1, HW), lambda b, c: (b, 0, 0)),
            scratch_shapes=[pltpu.VMEM((bt_a, HW), jnp.float32),
                            pltpu.VMEM((bt_a, HW), jnp.float32),
                            pltpu.VMEM((bt_a, 2, L), jnp.float32),
                            pltpu.VMEM((bt_a, L), jnp.float32)],
        ),
        compiler_params=pltpu.CompilerParams(
            dimension_semantics=("parallel", "arbitrary"),
            vmem_limit_bytes=vmem_limit),
    )(w_flat, cmask, x_flat)

    # Apply: out = x * attn, lane-dense, channel + spatial tiling, all parallel.
    if HW * esize <= _TARGET_BLOCK_BYTES:
        hwt = HW
    else:
        hwt = _pick_hw_tile(HW, esize, _TARGET_BLOCK_BYTES // 8)
    ctc = _pick_channel_tile(C, hwt * esize, _TARGET_BLOCK_BYTES)
    btc = 1

    out_flat = pl.pallas_call(
        _apply_kernel,
        out_shape=jax.ShapeDtypeStruct((B, C, HW), x.dtype),
        grid_spec=pltpu.PrefetchScalarGridSpec(
            num_scalar_prefetch=0,
            grid=(B // btc, C // ctc, HW // hwt),
            in_specs=[pl.BlockSpec((btc, ctc, hwt), lambda b, c, h: (b, c, h)),
                      pl.BlockSpec((btc, 1, hwt), lambda b, c, h: (b, 0, h))],
            out_specs=pl.BlockSpec((btc, ctc, hwt), lambda b, c, h: (b, c, h)),
        ),
        compiler_params=pltpu.CompilerParams(
            dimension_semantics=("parallel", "parallel", "parallel"),
            vmem_limit_bytes=vmem_limit),
    )(x_flat, attn)

    return out_flat.reshape(B, C, H, W)


def _reference(x, conv_weight):
    """Pure-JAX reference matching the PyTorch module."""
    avg = jnp.mean(x, axis=1, keepdims=True)
    mx = jnp.max(x, axis=1, keepdims=True)
    feat = jnp.concatenate([avg, mx], axis=1)
    conv = jax.lax.conv_general_dilated(
        feat, conv_weight, window_strides=(1, 1),
        padding=[(PAD, PAD), (PAD, PAD)],
        dimension_numbers=("NCHW", "OIHW", "NCHW"))
    return x * jax.nn.sigmoid(conv)


if __name__ == "__main__":
    key = jax.random.PRNGKey(0)
    kx, kw = jax.random.split(key)

    # Deterministic conv weight, Conv2d(2, 1, 7, bias=False) -> (1, 2, 7, 7).
    fan_in = 2 * K * K
    conv_weight = jax.random.uniform(
        kw, (1, 2, K, K), dtype=jnp.float32,
        minval=-(1.0 / fan_in) ** 0.5, maxval=(1.0 / fan_in) ** 0.5)

    # Shape 1: exercises both the fused path and the split fallback.
    B, C, H, W = 2, 4, 16, 16
    x = jax.random.normal(kx, (B, C, H, W), dtype=jnp.float32)
    ref = _reference(x, conv_weight)

    out_fused = jax.block_until_ready(spatial_attention(x, conv_weight))
    assert out_fused.shape == (B, C, H, W)
    assert jnp.allclose(out_fused, ref, atol=1e-5, rtol=1e-5), "fused mismatch"

    out_split = jax.block_until_ready(
        spatial_attention(x, conv_weight, force_path="split"))
    assert jnp.allclose(out_split, ref, atol=1e-5, rtol=1e-5), "split mismatch"

    # Shape 2: ragged channels (12) and non-128-multiple H*W (8*24 = 192).
    x2 = jax.random.normal(kx, (2, 12, 8, 24), dtype=jnp.float32)
    out2 = jax.block_until_ready(spatial_attention(x2, conv_weight))
    assert jnp.allclose(out2, _reference(x2, conv_weight),
                        atol=1e-5, rtol=1e-5), "shape-2 mismatch"

    print("KERNEL_OK")
</pallas_src>

<mosaic_0001>
module attributes {stable_mosaic.version = 11 : i64} {
  func.func @kernel(%arg0: i32, %arg1: memref<98xf32, #tpu.memory_space<smem>>, %arg2: memref<7x384xf32, #tpu.memory_space<vmem>>, %arg3: memref<1x4x256xf32, #tpu.memory_space<vmem>>, %arg4: memref<1x4x256xf32, #tpu.memory_space<vmem>>, %arg5: memref<1x2x384xf32, #tpu.memory_space<vmem>>, %arg6: memref<1x384xf32, #tpu.memory_space<vmem>>, %arg7: memref<1x1x256xf32, #tpu.memory_space<vmem>>) attributes {dimension_semantics = [#tpu.dimension_semantics<parallel>], iteration_bounds = array<i64: 2>, scalar_prefetch = 0 : i64, scratch_operands = 3 : i64, tpu.core_type = #tpu.core_type<tc>, window_params = [{transform_indices = @transform_0, window_bounds = array<i64: 98>}, {pipeline_mode = #tpu.pipeline_mode<synchronous>, transform_indices = @transform_1, window_bounds = array<i64: 7, 384>}, {transform_indices = @transform_2, window_bounds = array<i64: 1, 4, 256>}, {transform_indices = @transform_3, window_bounds = array<i64: 1, 4, 256>}]} {
    %cst = arith.constant 0.000000e+00 : f32
    %0 = vector.broadcast %cst : f32 to vector<1x256xf32>
    %cst_0 = arith.constant 0xFF800000 : f32
    %1 = vector.broadcast %cst_0 : f32 to vector<1x256xf32>
    %c0 = arith.constant 0 : index
    %c0_1 = arith.constant 0 : index
    %c0_2 = arith.constant 0 : index
    %2 = vector.load %arg3[%c0, %c0_1, %c0_2] : memref<1x4x256xf32, #tpu.memory_space<vmem>>, vector<1x4x256xf32>
    %cst_3 = arith.constant dense<0.000000e+00> : vector<1x256xf32>
    %3 = vector.multi_reduction <add>, %2, %cst_3 [1] : vector<1x4x256xf32> to vector<1x256xf32>
    %4 = arith.addf %0, %3 : vector<1x256xf32>
    %cst_4 = arith.constant dense<0xFF800000> : vector<1x256xf32>
    %5 = vector.multi_reduction <maximumf>, %2, %cst_4 [1] : vector<1x4x256xf32> to vector<1x256xf32>
    %6 = arith.maximumf %1, %5 : vector<1x256xf32>
    %cst_5 = arith.constant 2.500000e-01 : f32
    %7 = vector.broadcast %cst_5 : f32 to vector<1x256xf32>
    %8 = arith.mulf %4, %7 : vector<1x256xf32>
    %cst_6 = arith.constant 0.000000e+00 : f32
    %9 = vector.broadcast %cst_6 : f32 to vector<1x2x384xf32>
    %c0_7 = arith.constant 0 : index
    %c0_8 = arith.constant 0 : index
    %c0_9 = arith.constant 0 : index
    %10 = vector.load %arg5[%c0_7, %c0_8, %c0_9] : memref<1x2x384xf32, #tpu.memory_space<vmem>>, vector<1x2x384xf32>
    tpu.vector_store %arg5[%c0_7, %c0_8, %c0_9], %9 {strides = array<i32>} : memref<1x2x384xf32, #tpu.memory_space<vmem>>, vector<1x2x384xf32>,
    %c0_10 = arith.constant 0 : index
    %c0_11 = arith.constant 0 : index
    %c48 = arith.constant 48 : index
    %11 = vector.load %arg5[%c0_10, %c0_11, %c48] : memref<1x2x384xf32, #tpu.memory_space<vmem>>, vector<1x1x256xf32>
    %12 = vector.shape_cast %11 : vector<1x1x256xf32> to vector<1x256xf32>
    %13 = vector.shape_cast %8 : vector<1x256xf32> to vector<1x1x256xf32>
    tpu.vector_store %arg5[%c0_10, %c0_11, %c48], %13 {strides = array<i32>} : memref<1x2x384xf32, #tpu.memory_space<vmem>>, vector<1x1x256xf32>,
    %c0_12 = arith.constant 0 : index
    %c1 = arith.constant 1 : index
    %c48_13 = arith.constant 48 : index
    %14 = vector.load %arg5[%c0_12, %c1, %c48_13] : memref<1x2x384xf32, #tpu.memory_space<vmem>>, vector<1x1x256xf32>
    %15 = vector.shape_cast %14 : vector<1x1x256xf32> to vector<1x256xf32>
    %16 = vector.shape_cast %6 : vector<1x256xf32> to vector<1x1x256xf32>
    tpu.vector_store %arg5[%c0_12, %c1, %c48_13], %16 {strides = array<i32>} : memref<1x2x384xf32, #tpu.memory_space<vmem>>, vector<1x1x256xf32>,
    %c0_14 = arith.constant 0 : index
    %c0_15 = arith.constant 0 : index
    %c0_16 = arith.constant 0 : index
    %17 = vector.load %arg5[%c0_14, %c0_15, %c0_16] : memref<1x2x384xf32, #tpu.memory_space<vmem>>, vector<1x1x384xf32>
    %18 = vector.shape_cast %17 : vector<1x1x384xf32> to vector<1x384xf32>
    %c0_17 = arith.constant 0 : index
    %c0_18 = arith.constant 0 : index
    %19 = vector.load %arg2[%c0_17, %c0_18] : memref<7x384xf32, #tpu.memory_space<vmem>>, vector<1x384xf32>
    %20 = arith.mulf %18, %19 : vector<1x384xf32>
    %c3_i32 = arith.constant 3 : i32
    %21 = tpu.dynamic_rotate %20 by %c3_i32 dim 1 : vector<1x384xf32>, i32 -> vector<1x384xf32>
    %c0_19 = arith.constant 0 : index
    %22 = memref.load %arg1[%c0_19] : memref<98xf32, #tpu.memory_space<smem>>
    %23 = vector.broadcast %22 : f32 to vector<1x384xf32>
    %24 = arith.mulf %23, %21 : vector<1x384xf32>
    %c0_20 = arith.constant 0 : index
    %c0_21 = arith.constant 0 : index
    %25 = vector.load %arg6[%c0_20, %c0_21] : memref<1x384xf32, #tpu.memory_space<vmem>>, vector<1x384xf32>
    tpu.vector_store %arg6[%c0_20, %c0_21], %24 {strides = array<i32>} : memref<1x384xf32, #tpu.memory_space<vmem>>, vector<1x384xf32>,
    %c371_i32 = arith.constant 371 : i32
    %26 = tpu.dynamic_rotate %20 by %c371_i32 dim 1 : vector<1x384xf32>, i32 -> vector<1x384xf32>
    %c7 = arith.constant 7 : index
    %27 = memref.load %arg1[%c7] : memref<98xf32, #tpu.memory_space<smem>>
    %28 = vector.broadcast %27 : f32 to vector<1x384xf32>
    %29 = arith.mulf %28, %26 : vector<1x384xf32>
    %c0_22 = arith.constant 0 : index
    %c0_23 = arith.constant 0 : index
    %30 = vector.load %arg6[%c0_22, %c0_23] : memref<1x384xf32, #tpu.memory_space<vmem>>, vector<1x384xf32>
    %31 = arith.addf %30, %29 : vector<1x384xf32>
    %c0_24 = arith.constant 0 : index
    %c0_25 = arith.constant 0 : index
    %32 = vector.load %arg6[%c0_24, %c0_25] : memref<1x384xf32, #tpu.memory_space<vmem>>, vector<1x384xf32>
    tpu.vector_store %arg6[%c0_24, %c0_25], %31 {strides = array<i32>} : memref<1x384xf32, #tpu.memory_space<vmem>>, vector<1x384xf32>,
    %c355_i32 = arith.constant 355 : i32
    %33 = tpu.dynamic_rotate %20 by %c355_i32 dim 1 : vector<1x384xf32>, i32 -> vector<1x384xf32>
    %c14 = arith.constant 14 : index
    %34 = memref.load %arg1[%c14] : memref<98xf32, #tpu.memory_space<smem>>
    %35 = vector.broadcast %34 : f32 to vector<1x384xf32>
    %36 = arith.mulf %35, %33 : vector<1x384xf32>
    %c0_26 = arith.constant 0 : index
    %c0_27 = arith.constant 0 : index
    %37 = vector.load %arg6[%c0_26, %c0_27] : memref<1x384xf32, #tpu.memory_space<vmem>>, vector<1x384xf32>
    %38 = arith.addf %37, %36 : vector<1x384xf32>
    %c0_28 = arith.constant 0 : index
    %c0_29 = arith.constant 0 : index
    %39 = vector.load %arg6[%c0_28, %c0_29] : memref<1x384xf32, #tpu.memory_space<vmem>>, vector<1x384xf32>
    tpu.vector_store %arg6[%c0_28, %c0_29], %38 {strides = array<i32>} : memref<1x384xf32, #tpu.memory_space<vmem>>, vector<1x384xf32>,
    %c339_i32 = arith.constant 339 : i32
    %40 = tpu.dynamic_rotate %20 by %c339_i32 dim 1 : vector<1x384xf32>, i32 -> vector<1x384xf32>
    %c21 = arith.constant 21 : index
    %41 = memref.load %arg1[%c21] : memref<98xf32, #tpu.memory_space<smem>>
    %42 = vector.broadcast %41 : f32 to vector<1x384xf32>
    %43 = arith.mulf %42, %40 : vector<1x384xf32>
    %c0_30 = arith.constant 0 : index
    %c0_31 = arith.constant 0 : index
    %44 = vector.load %arg6[%c0_30, %c0_31] : memref<1x384xf32, #tpu.memory_space<vmem>>, vector<1x384xf32>
    %45 = arith.addf %44, %43 : vector<1x384xf32>
    %c0_32 = arith.constant 0 : index
    %c0_33 = arith.constant 0 : index
    %46 = vector.load %arg6[%c0_32, %c0_33] : memref<1x384xf32, #tpu.memory_space<vmem>>, vector<1x384xf32>
    tpu.vector_store %arg6[%c0_32, %c0_33], %45 {strides = array<i32>} : memref<1x384xf32, #tpu.memory_space<vmem>>, vector<1x384xf32>,
    %c323_i32 = arith.constant 323 : i32
    %47 = tpu.dynamic_rotate %20 by %c323_i32 dim 1 : vector<1x384xf32>, i32 -> vector<1x384xf32>
    %c28 = arith.constant 28 : index
    %48 = memref.load %arg1[%c28] : memref<98xf32, #tpu.memory_space<smem>>
    %49 = vector.broadcast %48 : f32 to vector<1x384xf32>
    %50 = arith.mulf %49, %47 : vector<1x384xf32>
    %c0_34 = arith.constant 0 : index
    %c0_35 = arith.constant 0 : index
    %51 = vector.load %arg6[%c0_34, %c0_35] : memref<1x384xf32, #tpu.memory_space<vmem>>, vector<1x384xf32>
    %52 = arith.addf %51, %50 : vector<1x384xf32>
    %c0_36 = arith.constant 0 : index
    %c0_37 = arith.constant 0 : index
    %53 = vector.load %arg6[%c0_36, %c0_37] : memref<1x384xf32, #tpu.memory_space<vmem>>, vector<1x384xf32>
    tpu.vector_store %arg6[%c0_36, %c0_37], %52 {strides = array<i32>} : memref<1x384xf32, #tpu.memory_space<vmem>>, vector<1x384xf32>,
    %c307_i32 = arith.constant 307 : i32
    %54 = tpu.dynamic_rotate %20 by %c307_i32 dim 1 : vector<1x384xf32>, i32 -> vector<1x384xf32>
    %c35 = arith.constant 35 : index
    %55 = memref.load %arg1[%c35] : memref<98xf32, #tpu.memory_space<smem>>
    %56 = vector.broadcast %55 : f32 to vector<1x384xf32>
    %57 = arith.mulf %56, %54 : vector<1x384xf32>
    %c0_38 = arith.constant 0 : index
    %c0_39 = arith.constant 0 : index
    %58 = vector.load %arg6[%c0_38, %c0_39] : memref<1x384xf32, #tpu.memory_space<vmem>>, vector<1x384xf32>
    %59 = arith.addf %58, %57 : vector<1x384xf32>
    %c0_40 = arith.constant 0 : index
    %c0_41 = arith.constant 0 : index
    %60 = vector.load %arg6[%c0_40, %c0_41] : memref<1x384xf32, #tpu.memory_space<vmem>>, vector<1x384xf32>
    tpu.vector_store %arg6[%c0_40, %c0_41], %59 {strides = array<i32>} : memref<1x384xf32, #tpu.memory_space<vmem>>, vector<1x384xf32>,
    %c291_i32 = arith.constant 291 : i32
    %61 = tpu.dynamic_rotate %20 by %c291_i32 dim 1 : vector<1x384xf32>, i32 -> vector<1x384xf32>
    %c42 = arith.constant 42 : index
    %62 = memref.load %arg1[%c42] : memref<98xf32, #tpu.memory_space<smem>>
    %63 = vector.broadcast %62 : f32 to vector<1x384xf32>
    %64 = arith.mulf %63, %61 : vector<1x384xf32>
    %c0_42 = arith.constant 0 : index
    %c0_43 = arith.constant 0 : index
    %65 = vector.load %arg6[%c0_42, %c0_43] : memref<1x384xf32, #tpu.memory_space<vmem>>, vector<1x384xf32>
    %66 = arith.addf %65, %64 : vector<1x384xf32>
    %c0_44 = arith.constant 0 : index
    %c0_45 = arith.constant 0 : index
    %67 = vector.load %arg6[%c0_44, %c0_45] : memref<1x384xf32, #tpu.memory_space<vmem>>, vector<1x384xf32>
    tpu.vector_store %arg6[%c0_44, %c0_45], %66 {strides = array<i32>} : memref<1x384xf32, #tpu.memory_space<vmem>>, vector<1x384xf32>,
    %c1_46 = arith.constant 1 : index
    %c0_47 = arith.constant 0 : index
    %68 = vector.load %arg2[%c1_46, %c0_47] : memref<7x384xf32, #tpu.memory_space<vmem>>, vector<1x384xf32>
    %69 = arith.mulf %18, %68 : vector<1x384xf32>
    %c2_i32 = arith.constant 2 : i32
    %70 = tpu.dynamic_rotate %69 by %c2_i32 dim 1 : vector<1x384xf32>, i32 -> vector<1x384xf32>
    %c1_48 = arith.constant 1 : index
    %71 = memref.load %arg1[%c1_48] : memref<98xf32, #tpu.memory_space<smem>>
    %72 = vector.broadcast %71 : f32 to vector<1x384xf32>
    %73 = arith.mulf %72, %70 : vector<1x384xf32>
    %c0_49 = arith.constant 0 : index
    %c0_50 = arith.constant 0 : index
    %74 = vector.load %arg6[%c0_49, %c0_50] : memref<1x384xf32, #tpu.memory_space<vmem>>, vector<1x384xf32>
    %75 = arith.addf %74, %73 : vector<1x384xf32>
    %c0_51 = arith.constant 0 : index
    %c0_52 = arith.constant 0 : index
    %76 = vector.load %arg6[%c0_51, %c0_52] : memref<1x384xf32, #tpu.memory_space<vmem>>, vector<1x384xf32>
    tpu.vector_store %arg6[%c0_51, %c0_52], %75 {strides = array<i32>} : memref<1x384xf32, #tpu.memory_space<vmem>>, vector<1x384xf32>,
    %c370_i32 = arith.constant 370 : i32
    %77 = tpu.dynamic_rotate %69 by %c370_i32 dim 1 : vector<1x384xf32>, i32 -> vector<1x384xf32>
    %c8 = arith.constant 8 : index
    %78 = memref.load %arg1[%c8] : memref<98xf32, #tpu.memory_space<smem>>
    %79 = vector.broadcast %78 : f32 to vector<1x384xf32>
    %80 = arith.mulf %79, %77 : vector<1x384xf32>
    %c0_53 = arith.constant 0 : index
    %c0_54 = arith.constant 0 : index
    %81 = vector.load %arg6[%c0_53, %c0_54] : memref<1x384xf32, #tpu.memory_space<vmem>>, vector<1x384xf32>
    %82 = arith.addf %81, %80 : vector<1x384xf32>
    %c0_55 = arith.constant 0 : index
    %c0_56 = arith.constant 0 : index
    %83 = vector.load %arg6[%c0_55, %c0_56] : memref<1x384xf32, #tpu.memory_space<vmem>>, vector<1x384xf32>
    tpu.vector_store %arg6[%c0_55, %c0_56], %82 {strides = array<i32>} : memref<1x384xf32, #tpu.memory_space<vmem>>, vector<1x384xf32>,
    %c354_i32 = arith.constant 354 : i32
    %84 = tpu.dynamic_rotate %69 by %c354_i32 dim 1 : vector<1x384xf32>, i32 -> vector<1x384xf32>
    %c15 = arith.constant 15 : index
    %85 = memref.load %arg1[%c15] : memref<98xf32, #tpu.memory_space<smem>>
    %86 = vector.broadcast %85 : f32 to vector<1x384xf32>
    %87 = arith.mulf %86, %84 : vector<1x384xf32>
    %c0_57 = arith.constant 0 : index
    %c0_58 = arith.constant 0 : index
    %88 = vector.load %arg6[%c0_57, %c0_58] : memref<1x384xf32, #tpu.memory_space<vmem>>, vector<1x384xf32>
    %89 = arith.addf %88, %87 : vector<1x384xf32>
    %c0_59 = arith.constant 0 : index
    %c0_60 = arith.constant 0 : index
    %90 = vector.load %arg6[%c0_59, %c0_60] : memref<1x384xf32, #tpu.memory_space<vmem>>, vector<1x384xf32>
    tpu.vector_store %arg6[%c0_59, %c0_60], %89 {strides = array<i32>} : memref<1x384xf32, #tpu.memory_space<vmem>>, vector<1x384xf32>,
    %c338_i32 = arith.constant 338 : i32
    %91 = tpu.dynamic_rotate %69 by %c338_i32 dim 1 : vector<1x384xf32>, i32 -> vector<1x384xf32>
    %c22 = arith.constant 22 : index
    %92 = memref.load %arg1[%c22] : memref<98xf32, #tpu.memory_space<smem>>
    %93 = vector.broadcast %92 : f32 to vector<1x384xf32>
    %94 = arith.mulf %93, %91 : vector<1x384xf32>
    %c0_61 = arith.constant 0 : index
    %c0_62 = arith.constant 0 : index
    %95 = vector.load %arg6[%c0_61, %c0_62] : memref<1x384xf32, #tpu.memory_space<vmem>>, vector<1x384xf32>
    %96 = arith.addf %95, %94 : vector<1x384xf32>
    %c0_63 = arith.constant 0 : index
    %c0_64 = arith.constant 0 : index
    %97 = vector.load %arg6[%c0_63, %c0_64] : memref<1x384xf32, #tpu.memory_space<vmem>>, vector<1x384xf32>
    tpu.vector_store %arg6[%c0_63, %c0_64], %96 {strides = array<i32>} : memref<1x384xf32, #tpu.memory_space<vmem>>, vector<1x384xf32>,
    %c322_i32 = arith.constant 322 : i32
    %98 = tpu.dynamic_rotate %69 by %c322_i32 dim 1 : vector<1x384xf32>, i32 -> vector<1x384xf32>
    %c29 = arith.constant 29 : index
    %99 = memref.load %arg1[%c29] : memref<98xf32, #tpu.memory_space<smem>>
    %100 = vector.broadcast %99 : f32 to vector<1x384xf32>
    %101 = arith.mulf %100, %98 : vector<1x384xf32>
    %c0_65 = arith.constant 0 : index
    %c0_66 = arith.constant 0 : index
    %102 = vector.load %arg6[%c0_65, %c0_66] : memref<1x384xf32, #tpu.memory_space<vmem>>, vector<1x384xf32>
    %103 = arith.addf %102, %101 : vector<1x384xf32>
    %c0_67 = arith.constant 0 : index
    %c0_68 = arith.constant 0 : index
    %104 = vector.load %arg6[%c0_67, %c0_68] : memref<1x384xf32, #tpu.memory_space<vmem>>, vector<1x384xf32>
    tpu.vector_store %arg6[%c0_67, %c0_68], %103 {strides = array<i32>} : memref<1x384xf32, #tpu.memory_space<vmem>>, vector<1x384xf32>,
    %c306_i32 = arith.constant 306 : i32
    %105 = tpu.dynamic_rotate %69 by %c306_i32 dim 1 : vector<1x384xf32>, i32 -> vector<1x384xf32>
    %c36 = arith.constant 36 : index
    %106 = memref.load %arg1[%c36] : memref<98xf32, #tpu.memory_space<smem>>
    %107 = vector.broadcast %106 : f32 to vector<1x384xf32>
    %108 = arith.mulf %107, %105 : vector<1x384xf32>
    %c0_69 = arith.constant 0 : index
    %c0_70 = arith.constant 0 : index
    %109 = vector.load %arg6[%c0_69, %c0_70] : memref<1x384xf32, #tpu.memory_space<vmem>>, vector<1x384xf32>
    %110 = arith.addf %109, %108 : vector<1x384xf32>
    %c0_71 = arith.constant 0 : index
    %c0_72 = arith.constant 0 : index
    %111 = vector.load %arg6[%c0_71, %c0_72] : memref<1x384xf32, #tpu.memory_space<vmem>>, vector<1x384xf32>
    tpu.vector_store %arg6[%c0_71, %c0_72], %110 {strides = array<i32>} : memref<1x384xf32, #tpu.memory_space<vmem>>, vector<1x384xf32>,
    %c290_i32 = arith.constant 290 : i32
    %112 = tpu.dynamic_rotate %69 by %c290_i32 dim 1 : vector<1x384xf32>, i32 -> vector<1x384xf32>
    %c43 = arith.constant 43 : index
    %113 = memref.load %arg1[%c43] : memref<98xf32, #tpu.memory_space<smem>>
    %114 = vector.broadcast %113 : f32 to vector<1x384xf32>
    %115 = arith.mulf %114, %112 : vector<1x384xf32>
    %c0_73 = arith.constant 0 : index
    %c0_74 = arith.constant 0 : index
    %116 = vector.load %arg6[%c0_73, %c0_74] : memref<1x384xf32, #tpu.memory_space<vmem>>, vector<1x384xf32>
    %117 = arith.addf %116, %115 : vector<1x384xf32>
    %c0_75 = arith.constant 0 : index
    %c0_76 = arith.constant 0 : index
    %118 = vector.load %arg6[%c0_75, %c0_76] : memref<1x384xf32, #tpu.memory_space<vmem>>, vector<1x384xf32>
    tpu.vector_store %arg6[%c0_75, %c0_76], %117 {strides = array<i32>} : memref<1x384xf32, #tpu.memory_space<vmem>>, vector<1x384xf32>,
    %c2 = arith.constant 2 : index
    %c0_77 = arith.constant 0 : index
    %119 = vector.load %arg2[%c2, %c0_77] : memref<7x384xf32, #tpu.memory_space<vmem>>, vector<1x384xf32>
    %120 = arith.mulf %18, %119 : vector<1x384xf32>
    %c1_i32 = arith.constant 1 : i32
    %121 = tpu.dynamic_rotate %120 by %c1_i32 dim 1 : vector<1x384xf32>, i32 -> vector<1x384xf32>
    %c2_78 = arith.constant 2 : index
    %122 = memref.load %arg1[%c2_78] : memref<98xf32, #tpu.memory_space<smem>>
    %123 = vector.broadcast %122 : f32 to vector<1x384xf32>
    %124 = arith.mulf %123, %121 : vector<1x384xf32>
    %c0_79 = arith.constant 0 : index
    %c0_80 = arith.constant 0 : index
    %125 = vector.load %arg6[%c0_79, %c0_80] : memref<1x384xf32, #tpu.memory_space<vmem>>, vector<1x384xf32>
    %126 = arith.addf %125, %124 : vector<1x384xf32>
    %c0_81 = arith.constant 0 : index
    %c0_82 = arith.constant 0 : index
    %127 = vector.load %arg6[%c0_81, %c0_82] : memref<1x384xf32, #tpu.memory_space<vmem>>, vector<1x384xf32>
    tpu.vector_store %arg6[%c0_81, %c0_82], %126 {strides = array<i32>} : memref<1x384xf32, #tpu.memory_space<vmem>>, vector<1x384xf32>,
    %c369_i32 = arith.constant 369 : i32
    %128 = tpu.dynamic_rotate %120 by %c369_i32 dim 1 : vector<1x384xf32>, i32 -> vector<1x384xf32>
    %c9 = arith.constant 9 : index
    %129 = memref.load %arg1[%c9] : memref<98xf32, #tpu.memory_space<smem>>
    %130 = vector.broadcast %129 : f32 to vector<1x384xf32>
    %131 = arith.mulf %130, %128 : vector<1x384xf32>
    %c0_83 = arith.constant 0 : index
    %c0_84 = arith.constant 0 : index
    %132 = vector.load %arg6[%c0_83, %c0_84] : memref<1x384xf32, #tpu.memory_space<vmem>>, vector<1x384xf32>
    %133 = arith.addf %132, %131 : vector<1x384xf32>
    %c0_85 = arith.constant 0 : index
    %c0_86 = arith.constant 0 : index
    %134 = vector.load %arg6[%c0_85, %c0_86] : memref<1x384xf32, #tpu.memory_space<vmem>>, vector<1x384xf32>
    tpu.vector_store %arg6[%c0_85, %c0_86], %133 {strides = array<i32>} : memref<1x384xf32, #tpu.memory_space<vmem>>, vector<1x384xf32>,
    %c353_i32 = arith.constant 353 : i32
    %135 = tpu.dynamic_rotate %120 by %c353_i32 dim 1 : vector<1x384xf32>, i32 -> vector<1x384xf32>
    %c16 = arith.constant 16 : index
    %136 = memref.load %arg1[%c16] : memref<98xf32, #tpu.memory_space<smem>>
    %137 = vector.broadcast %136 : f32 to vector<1x384xf32>
    %138 = arith.mulf %137, %135 : vector<1x384xf32>
    %c0_87 = arith.constant 0 : index
    %c0_88 = arith.constant 0 : index
    %139 = vector.load %arg6[%c0_87, %c0_88] : memref<1x384xf32, #tpu.memory_space<vmem>>, vector<1x384xf32>
    %140 = arith.addf %139, %138 : vector<1x384xf32>
    %c0_89 = arith.constant 0 : index
    %c0_90 = arith.constant 0 : index
    %141 = vector.load %arg6[%c0_89, %c0_90] : memref<1x384xf32, #tpu.memory_space<vmem>>, vector<1x384xf32>
    tpu.vector_store %arg6[%c0_89, %c0_90], %140 {strides = array<i32>} : memref<1x384xf32, #tpu.memory_space<vmem>>, vector<1x384xf32>,
    %c337_i32 = arith.constant 337 : i32
    %142 = tpu.dynamic_rotate %120 by %c337_i32 dim 1 : vector<1x384xf32>, i32 -> vector<1x384xf32>
    %c23 = arith.constant 23 : index
    %143 = memref.load %arg1[%c23] : memref<98xf32, #tpu.memory_space<smem>>
    %144 = vector.broadcast %143 : f32 to vector<1x384xf32>
    %145 = arith.mulf %144, %142 : vector<1x384xf32>
    %c0_91 = arith.constant 0 : index
    %c0_92 = arith.constant 0 : index
    %146 = vector.load %arg6[%c0_91, %c0_92] : memref<1x384xf32, #tpu.memory_space<vmem>>, vector<1x384xf32>
    %147 = arith.addf %146, %145 : vector<1x384xf32>
    %c0_93 = arith.constant 0 : index
    %c0_94 = arith.constant 0 : index
    %148 = vector.load %arg6[%c0_93, %c0_94] : memref<1x384xf32, #tpu.memory_space<vmem>>, vector<1x384xf32>
    tpu.vector_store %arg6[%c0_93, %c0_94], %147 {strides = array<i32>} : memref<1x384xf32, #tpu.memory_space<vmem>>, vector<1x384xf32>,
    %c321_i32 = arith.constant 321 : i32
    %149 = tpu.dynamic_rotate %120 by %c321_i32 dim 1 : vector<1x384xf32>, i32 -> vector<1x384xf32>
    %c30 = arith.constant 30 : index
    %150 = memref.load %arg1[%c30] : memref<98xf32, #tpu.memory_space<smem>>
    %151 = vector.broadcast %150 : f32 to vector<1x384xf32>
    %152 = arith.mulf %151, %149 : vector<1x384xf32>
    %c0_95 = arith.constant 0 : index
    %c0_96 = arith.constant 0 : index
    %153 = vector.load %arg6[%c0_95, %c0_96] : memref<1x384xf32, #tpu.memory_space<vmem>>, vector<1x384xf32>
    %154 = arith.addf %153, %152 : vector<1x384xf32>
    %c0_97 = arith.constant 0 : index
    %c0_98 = arith.constant 0 : index
    %155 = vector.load %arg6[%c0_97, %c0_98] : memref<1x384xf32, #tpu.memory_space<vmem>>, vector<1x384xf32>
    tpu.vector_store %arg6[%c0_97, %c0_98], %154 {strides = array<i32>} : memref<1x384xf32, #tpu.memory_space<vmem>>, vector<1x384xf32>,
    %c305_i32 = arith.constant 305 : i32
    %156 = tpu.dynamic_rotate %120 by %c305_i32 dim 1 : vector<1x384xf32>, i32 -> vector<1x384xf32>
    %c37 = arith.constant 37 : index
    %157 = memref.load %arg1[%c37] : memref<98xf32, #tpu.memory_space<smem>>
    %158 = vector.broadcast %157 : f32 to vector<1x384xf32>
    %159 = arith.mulf %158, %156 : vector<1x384xf32>
    %c0_99 = arith.constant 0 : index
    %c0_100 = arith.constant 0 : index
    %160 = vector.load %arg6[%c0_99, %c0_100] : memref<1x384xf32, #tpu.memory_space<vmem>>, vector<1x384xf32>
    %161 = arith.addf %160, %159 : vector<1x384xf32>
    %c0_101 = arith.constant 0 : index
    %c0_102 = arith.constant 0 : index
    %162 = vector.load %arg6[%c0_101, %c0_102] : memref<1x384xf32, #tpu.memory_space<vmem>>, vector<1x384xf32>
    tpu.vector_store %arg6[%c0_101, %c0_102], %161 {strides = array<i32>} : memref<1x384xf32, #tpu.memory_space<vmem>>, vector<1x384xf32>,
    %c289_i32 = arith.constant 289 : i32
    %163 = tpu.dynamic_rotate %120 by %c289_i32 dim 1 : vector<1x384xf32>, i32 -> vector<1x384xf32>
    %c44 = arith.constant 44 : index
    %164 = memref.load %arg1[%c44] : memref<98xf32, #tpu.memory_space<smem>>
    %165 = vector.broadcast %164 : f32 to vector<1x384xf32>
    %166 = arith.mulf %165, %163 : vector<1x384xf32>
    %c0_103 = arith.constant 0 : index
    %c0_104 = arith.constant 0 : index
    %167 = vector.load %arg6[%c0_103, %c0_104] : memref<1x384xf32, #tpu.memory_space<vmem>>, vector<1x384xf32>
    %168 = arith.addf %167, %166 : vector<1x384xf32>
    %c0_105 = arith.constant 0 : index
    %c0_106 = arith.constant 0 : index
    %169 = vector.load %arg6[%c0_105, %c0_106] : memref<1x384xf32, #tpu.memory_space<vmem>>, vector<1x384xf32>
    tpu.vector_store %arg6[%c0_105, %c0_106], %168 {strides = array<i32>} : memref<1x384xf32, #tpu.memory_space<vmem>>, vector<1x384xf32>,
    %c3 = arith.constant 3 : index
    %c0_107 = arith.constant 0 : index
    %170 = vector.load %arg2[%c3, %c0_107] : memref<7x384xf32, #tpu.memory_space<vmem>>, vector<1x384xf32>
    %171 = arith.mulf %18, %170 : vector<1x384xf32>
    %c3_108 = arith.constant 3 : index
    %172 = memref.load %arg1[%c3_108] : memref<98xf32, #tpu.memory_space<smem>>
    %173 = vector.broadcast %172 : f32 to vector<1x384xf32>
    %174 = arith.mulf %173, %171 : vector<1x384xf32>
    %c0_109 = arith.constant 0 : index
    %c0_110 = arith.constant 0 : index
    %175 = vector.load %arg6[%c0_109, %c0_110] : memref<1x384xf32, #tpu.memory_space<vmem>>, vector<1x384xf32>
    %176 = arith.addf %175, %174 : vector<1x384xf32>
    %c0_111 = arith.constant 0 : index
    %c0_112 = arith.constant 0 : index
    %177 = vector.load %arg6[%c0_111, %c0_112] : memref<1x384xf32, #tpu.memory_space<vmem>>, vector<1x384xf32>
    tpu.vector_store %arg6[%c0_111, %c0_112], %176 {strides = array<i32>} : memref<1x384xf32, #tpu.memory_space<vmem>>, vector<1x384xf32>,
    %c368_i32 = arith.constant 368 : i32
    %178 = tpu.dynamic_rotate %171 by %c368_i32 dim 1 : vector<1x384xf32>, i32 -> vector<1x384xf32>
    %c10 = arith.constant 10 : index
    %179 = memref.load %arg1[%c10] : memref<98xf32, #tpu.memory_space<smem>>
    %180 = vector.broadcast %179 : f32 to vector<1x384xf32>
    %181 = arith.mulf %180, %178 : vector<1x384xf32>
    %c0_113 = arith.constant 0 : index
    %c0_114 = arith.constant 0 : index
    %182 = vector.load %arg6[%c0_113, %c0_114] : memref<1x384xf32, #tpu.memory_space<vmem>>, vector<1x384xf32>
    %183 = arith.addf %182, %181 : vector<1x384xf32>
    %c0_115 = arith.constant 0 : index
    %c0_116 = arith.constant 0 : index
    %184 = vector.load %arg6[%c0_115, %c0_116] : memref<1x384xf32, #tpu.memory_space<vmem>>, vector<1x384xf32>
    tpu.vector_store %arg6[%c0_115, %c0_116], %183 {strides = array<i32>} : memref<1x384xf32, #tpu.memory_space<vmem>>, vector<1x384xf32>,
    %c352_i32 = arith.constant 352 : i32
    %185 = tpu.dynamic_rotate %171 by %c352_i32 dim 1 : vector<1x384xf32>, i32 -> vector<1x384xf32>
    %c17 = arith.constant 17 : index
    %186 = memref.load %arg1[%c17] : memref<98xf32, #tpu.memory_space<smem>>
    %187 = vector.broadcast %186 : f32 to vector<1x384xf32>
    %188 = arith.mulf %187, %185 : vector<1x384xf32>
    %c0_117 = arith.constant 0 : index
    %c0_118 = arith.constant 0 : index
    %189 = vector.load %arg6[%c0_117, %c0_118] : memref<1x384xf32, #tpu.memory_space<vmem>>, vector<1x384xf32>
    %190 = arith.addf %189, %188 : vector<1x384xf32>
    %c0_119 = arith.constant 0 : index
    %c0_120 = arith.constant 0 : index
    %191 = vector.load %arg6[%c0_119, %c0_120] : memref<1x384xf32, #tpu.memory_space<vmem>>, vector<1x384xf32>
    tpu.vector_store %arg6[%c0_119, %c0_120], %190 {strides = array<i32>} : memref<1x384xf32, #tpu.memory_space<vmem>>, vector<1x384xf32>,
    %c336_i32 = arith.constant 336 : i32
    %192 = tpu.dynamic_rotate %171 by %c336_i32 dim 1 : vector<1x384xf32>, i32 -> vector<1x384xf32>
    %c24 = arith.constant 24 : index
    %193 = memref.load %arg1[%c24] : memref<98xf32, #tpu.memory_space<smem>>
    %194 = vector.broadcast %193 : f32 to vector<1x384xf32>
    %195 = arith.mulf %194, %192 : vector<1x384xf32>
    %c0_121 = arith.constant 0 : index
    %c0_122 = arith.constant 0 : index
    %196 = vector.load %arg6[%c0_121, %c0_122] : memref<1x384xf32, #tpu.memory_space<vmem>>, vector<1x384xf32>
    %197 = arith.addf %196, %195 : vector<1x384xf32>
    %c0_123 = arith.constant 0 : index
    %c0_124 = arith.constant 0 : index
    %198 = vector.load %arg6[%c0_123, %c0_124] : memref<1x384xf32, #tpu.memory_space<vmem>>, vector<1x384xf32>
    tpu.vector_store %arg6[%c0_123, %c0_124], %197 {strides = array<i32>} : memref<1x384xf32, #tpu.memory_space<vmem>>, vector<1x384xf32>,
    %c320_i32 = arith.constant 320 : i32
    %199 = tpu.dynamic_rotate %171 by %c320_i32 dim 1 : vector<1x384xf32>, i32 -> vector<1x384xf32>
    %c31 = arith.constant 31 : index
    %200 = memref.load %arg1[%c31] : memref<98xf32, #tpu.memory_space<smem>>
    %201 = vector.broadcast %200 : f32 to vector<1x384xf32>
    %202 = arith.mulf %201, %199 : vector<1x384xf32>
    %c0_125 = arith.constant 0 : index
    %c0_126 = arith.constant 0 : index
    %203 = vector.load %arg6[%c0_125, %c0_126] : memref<1x384xf32, #tpu.memory_space<vmem>>, vector<1x384xf32>
    %204 = arith.addf %203, %202 : vector<1x384xf32>
    %c0_127 = arith.constant 0 : index
    %c0_128 = arith.constant 0 : index
    %205 = vector.load %arg6[%c0_127, %c0_128] : memref<1x384xf32, #tpu.memory_space<vmem>>, vector<1x384xf32>
    tpu.vector_store %arg6[%c0_127, %c0_128], %204 {strides = array<i32>} : memref<1x384xf32, #tpu.memory_space<vmem>>, vector<1x384xf32>,
    %c304_i32 = arith.constant 304 : i32
    %206 = tpu.dynamic_rotate %171 by %c304_i32 dim 1 : vector<1x384xf32>, i32 -> vector<1x384xf32>
    %c38 = arith.constant 38 : index
    %207 = memref.load %arg1[%c38] : memref<98xf32, #tpu.memory_space<smem>>
    %208 = vector.broadcast %207 : f32 to vector<1x384xf32>
    %209 = arith.mulf %208, %206 : vector<1x384xf32>
    %c0_129 = arith.constant 0 : index
    %c0_130 = arith.constant 0 : index
    %210 = vector.load %arg6[%c0_129, %c0_130] : memref<1x384xf32, #tpu.memory_space<vmem>>, vector<1x384xf32>
    %211 = arith.addf %210, %209 : vector<1x384xf32>
    %c0_131 = arith.constant 0 : index
    %c0_132 = arith.constant 0 : index
    %212 = vector.load %arg6[%c0_131, %c0_132] : memref<1x384xf32, #tpu.memory_space<vmem>>, vector<1x384xf32>
    tpu.vector_store %arg6[%c0_131, %c0_132], %211 {strides = array<i32>} : memref<1x384xf32, #tpu.memory_space<vmem>>, vector<1x384xf32>,
    %c288_i32 = arith.constant 288 : i32
    %213 = tpu.dynamic_rotate %171 by %c288_i32 dim 1 : vector<1x384xf32>, i32 -> vector<1x384xf32>
    %c45 = arith.constant 45 : index
    %214 = memref.load %arg1[%c45] : memref<98xf32, #tpu.memory_space<smem>>
    %215 = vector.broadcast %214 : f32 to vector<1x384xf32>
    %216 = arith.mulf %215, %213 : vector<1x384xf32>
    %c0_133 = arith.constant 0 : index
    %c0_134 = arith.constant 0 : index
    %217 = vector.load %arg6[%c0_133, %c0_134] : memref<1x384xf32, #tpu.memory_space<vmem>>, vector<1x384xf32>
    %218 = arith.addf %217, %216 : vector<1x384xf32>
    %c0_135 = arith.constant 0 : index
    %c0_136 = arith.constant 0 : index
    %219 = vector.load %arg6[%c0_135, %c0_136] : memref<1x384xf32, #tpu.memory_space<vmem>>, vector<1x384xf32>
    tpu.vector_store %arg6[%c0_135, %c0_136], %218 {strides = array<i32>} : memref<1x384xf32, #tpu.memory_space<vmem>>, vector<1x384xf32>,
    %c4 = arith.constant 4 : index
    %c0_137 = arith.constant 0 : index
    %220 = vector.load %arg2[%c4, %c0_137] : memref<7x384xf32, #tpu.memory_space<vmem>>, vector<1x384xf32>
    %221 = arith.mulf %18, %220 : vector<1x384xf32>
    %c383_i32 = arith.constant 383 : i32
    %222 = tpu.dynamic_rotate %221 by %c383_i32 dim 1 : vector<1x384xf32>, i32 -> vector<1x384xf32>
    %c4_138 = arith.constant 4 : index
    %223 = memref.load %arg1[%c4_138] : memref<98xf32, #tpu.memory_space<smem>>
    %224 = vector.broadcast %223 : f32 to vector<1x384xf32>
    %225 = arith.mulf %224, %222 : vector<1x384xf32>
    %c0_139 = arith.constant 0 : index
    %c0_140 = arith.constant 0 : index
    %226 = vector.load %arg6[%c0_139, %c0_140] : memref<1x384xf32, #tpu.memory_space<vmem>>, vector<1x384xf32>
    %227 = arith.addf %226, %225 : vector<1x384xf32>
    %c0_141 = arith.constant 0 : index
    %c0_142 = arith.constant 0 : index
    %228 = vector.load %arg6[%c0_141, %c0_142] : memref<1x384xf32, #tpu.memory_space<vmem>>, vector<1x384xf32>
    tpu.vector_store %arg6[%c0_141, %c0_142], %227 {strides = array<i32>} : memref<1x384xf32, #tpu.memory_space<vmem>>, vector<1x384xf32>,
    %c367_i32 = arith.constant 367 : i32
    %229 = tpu.dynamic_rotate %221 by %c367_i32 dim 1 : vector<1x384xf32>, i32 -> vector<1x384xf32>
    %c11 = arith.constant 11 : index
    %230 = memref.load %arg1[%c11] : memref<98xf32, #tpu.memory_space<smem>>
    %231 = vector.broadcast %230 : f32 to vector<1x384xf32>
    %232 = arith.mulf %231, %229 : vector<1x384xf32>
    %c0_143 = arith.constant 0 : index
    %c0_144 = arith.constant 0 : index
    %233 = vector.load %arg6[%c0_143, %c0_144] : memref<1x384xf32, #tpu.memory_space<vmem>>, vector<1x384xf32>
    %234 = arith.addf %233, %232 : vector<1x384xf32>
    %c0_145 = arith.constant 0 : index
    %c0_146 = arith.constant 0 : index
    %235 = vector.load %arg6[%c0_145, %c0_146] : memref<1x384xf32, #tpu.memory_space<vmem>>, vector<1x384xf32>
    tpu.vector_store %arg6[%c0_145, %c0_146], %234 {strides = array<i32>} : memref<1x384xf32, #tpu.memory_space<vmem>>, vector<1x384xf32>,
    %c351_i32 = arith.constant 351 : i32
    %236 = tpu.dynamic_rotate %221 by %c351_i32 dim 1 : vector<1x384xf32>, i32 -> vector<1x384xf32>
    %c18 = arith.constant 18 : index
    %237 = memref.load %arg1[%c18] : memref<98xf32, #tpu.memory_space<smem>>
    %238 = vector.broadcast %237 : f32 to vector<1x384xf32>
    %239 = arith.mulf %238, %236 : vector<1x384xf32>
    %c0_147 = arith.constant 0 : index
    %c0_148 = arith.constant 0 : index
    %240 = vector.load %arg6[%c0_147, %c0_148] : memref<1x384xf32, #tpu.memory_space<vmem>>, vector<1x384xf32>
    %241 = arith.addf %240, %239 : vector<1x384xf32>
    %c0_149 = arith.constant 0 : index
    %c0_150 = arith.constant 0 : index
    %242 = vector.load %arg6[%c0_149, %c0_150] : memref<1x384xf32, #tpu.memory_space<vmem>>, vector<1x384xf32>
    tpu.vector_store %arg6[%c0_149, %c0_150], %241 {strides = array<i32>} : memref<1x384xf32, #tpu.memory_space<vmem>>, vector<1x384xf32>,
    %c335_i32 = arith.constant 335 : i32
    %243 = tpu.dynamic_rotate %221 by %c335_i32 dim 1 : vector<1x384xf32>, i32 -> vector<1x384xf32>
    %c25 = arith.constant 25 : index
    %244 = memref.load %arg1[%c25] : memref<98xf32, #tpu.memory_space<smem>>
    %245 = vector.broadcast %244 : f32 to vector<1x384xf32>
    %246 = arith.mulf %245, %243 : vector<1x384xf32>
    %c0_151 = arith.constant 0 : index
    %c0_152 = arith.constant 0 : index
    %247 = vector.load %arg6[%c0_151, %c0_152] : memref<1x384xf32, #tpu.memory_space<vmem>>, vector<1x384xf32>
    %248 = arith.addf %247, %246 : vector<1x384xf32>
    %c0_153 = arith.constant 0 : index
    %c0_154 = arith.constant 0 : index
    %249 = vector.load %arg6[%c0_153, %c0_154] : memref<1x384xf32, #tpu.memory_space<vmem>>, vector<1x384xf32>
    tpu.vector_store %arg6[%c0_153, %c0_154], %248 {strides = array<i32>} : memref<1x384xf32, #tpu.memory_space<vmem>>, vector<1x384xf32>,
    %c319_i32 = arith.constant 319 : i32
    %250 = tpu.dynamic_rotate %221 by %c319_i32 dim 1 : vector<1x384xf32>, i32 -> vector<1x384xf32>
    %c32 = arith.constant 32 : index
    %251 = memref.load %arg1[%c32] : memref<98xf32, #tpu.memory_space<smem>>
    %252 = vector.broadcast %251 : f32 to vector<1x384xf32>
    %253 = arith.mulf %252, %250 : vector<1x384xf32>
    %c0_155 = arith.constant 0 : index
    %c0_156 = arith.constant 0 : index
    %254 = vector.load %arg6[%c0_155, %c0_156] : memref<1x384xf32, #tpu.memory_space<vmem>>, vector<1x384xf32>
    %255 = arith.addf %254, %253 : vector<1x384xf32>
    %c0_157 = arith.constant 0 : index
    %c0_158 = arith.constant 0 : index
    %256 = vector.load %arg6[%c0_157, %c0_158] : memref<1x384xf32, #tpu.memory_space<vmem>>, vector<1x384xf32>
    tpu.vector_store %arg6[%c0_157, %c0_158], %255 {strides = array<i32>} : memref<1x384xf32, #tpu.memory_space<vmem>>, vector<1x384xf32>,
    %c303_i32 = arith.constant 303 : i32
    %257 = tpu.dynamic_rotate %221 by %c303_i32 dim 1 : vector<1x384xf32>, i32 -> vector<1x384xf32>
    %c39 = arith.constant 39 : index
    %258 = memref.load %arg1[%c39] : memref<98xf32, #tpu.memory_space<smem>>
    %259 = vector.broadcast %258 : f32 to vector<1x384xf32>
    %260 = arith.mulf %259, %257 : vector<1x384xf32>
    %c0_159 = arith.constant 0 : index
    %c0_160 = arith.constant 0 : index
    %261 = vector.load %arg6[%c0_159, %c0_160] : memref<1x384xf32, #tpu.memory_space<vmem>>, vector<1x384xf32>
    %262 = arith.addf %261, %260 : vector<1x384xf32>
    %c0_161 = arith.constant 0 : index
    %c0_162 = arith.constant 0 : index
    %263 = vector.load %arg6[%c0_161, %c0_162] : memref<1x384xf32, #tpu.memory_space<vmem>>, vector<1x384xf32>
    tpu.vector_store %arg6[%c0_161, %c0_162], %262 {strides = array<i32>} : memref<1x384xf32, #tpu.memory_space<vmem>>, vector<1x384xf32>,
    %c287_i32 = arith.constant 287 : i32
    %264 = tpu.dynamic_rotate %221 by %c287_i32 dim 1 : vector<1x384xf32>, i32 -> vector<1x384xf32>
    %c46 = arith.constant 46 : index
    %265 = memref.load %arg1[%c46] : memref<98xf32, #tpu.memory_space<smem>>
    %266 = vector.broadcast %265 : f32 to vector<1x384xf32>
    %267 = arith.mulf %266, %264 : vector<1x384xf32>
    %c0_163 = arith.constant 0 : index
    %c0_164 = arith.constant 0 : index
    %268 = vector.load %arg6[%c0_163, %c0_164] : memref<1x384xf32, #tpu.memory_space<vmem>>, vector<1x384xf32>
    %269 = arith.addf %268, %267 : vector<1x384xf32>
    %c0_165 = arith.constant 0 : index
    %c0_166 = arith.constant 0 : index
    %270 = vector.load %arg6[%c0_165, %c0_166] : memref<1x384xf32, #tpu.memory_space<vmem>>, vector<1x384xf32>
    tpu.vector_store %arg6[%c0_165, %c0_166], %269 {strides = array<i32>} : memref<1x384xf32, #tpu.memory_space<vmem>>, vector<1x384xf32>,
    %c5 = arith.constant 5 : index
    %c0_167 = arith.constant 0 : index
    %271 = vector.load %arg2[%c5, %c0_167] : memref<7x384xf32, #tpu.memory_space<vmem>>, vector<1x384xf32>
    %272 = arith.mulf %18, %271 : vector<1x384xf32>
    %c382_i32 = arith.constant 382 : i32
    %273 = tpu.dynamic_rotate %272 by %c382_i32 dim 1 : vector<1x384xf32>, i32 -> vector<1x384xf32>
    %c5_168 = arith.constant 5 : index
    %274 = memref.load %arg1[%c5_168] : memref<98xf32, #tpu.memory_space<smem>>
    %275 = vector.broadcast %274 : f32 to vector<1x384xf32>
    %276 = arith.mulf %275, %273 : vector<1x384xf32>
    %c0_169 = arith.constant 0 : index
    %c0_170 = arith.constant 0 : index
    %277 = vector.load %arg6[%c0_169, %c0_170] : memref<1x384xf32, #tpu.memory_space<vmem>>, vector<1x384xf32>
    %278 = arith.addf %277, %276 : vector<1x384xf32>
    %c0_171 = arith.constant 0 : index
    %c0_172 = arith.constant 0 : index
    %279 = vector.load %arg6[%c0_171, %c0_172] : memref<1x384xf32, #tpu.memory_space<vmem>>, vector<1x384xf32>
    tpu.vector_store %arg6[%c0_171, %c0_172], %278 {strides = array<i32>} : memref<1x384xf32, #tpu.memory_space<vmem>>, vector<1x384xf32>,
    %c366_i32 = arith.constant 366 : i32
    %280 = tpu.dynamic_rotate %272 by %c366_i32 dim 1 : vector<1x384xf32>, i32 -> vector<1x384xf32>
    %c12 = arith.constant 12 : index
    %281 = memref.load %arg1[%c12] : memref<98xf32, #tpu.memory_space<smem>>
    %282 = vector.broadcast %281 : f32 to vector<1x384xf32>
    %283 = arith.mulf %282, %280 : vector<1x384xf32>
    %c0_173 = arith.constant 0 : index
    %c0_174 = arith.constant 0 : index
    %284 = vector.load %arg6[%c0_173, %c0_174] : memref<1x384xf32, #tpu.memory_space<vmem>>, vector<1x384xf32>
    %285 = arith.addf %284, %283 : vector<1x384xf32>
    %c0_175 = arith.constant 0 : index
    %c0_176 = arith.constant 0 : index
    %286 = vector.load %arg6[%c0_175, %c0_176] : memref<1x384xf32, #tpu.memory_space<vmem>>, vector<1x384xf32>
    tpu.vector_store %arg6[%c0_175, %c0_176], %285 {strides = array<i32>} : memref<1x384xf32, #tpu.memory_space<vmem>>, vector<1x384xf32>,
    %c350_i32 = arith.constant 350 : i32
    %287 = tpu.dynamic_rotate %272 by %c350_i32 dim 1 : vector<1x384xf32>, i32 -> vector<1x384xf32>
    %c19 = arith.constant 19 : index
    %288 = memref.load %arg1[%c19] : memref<98xf32, #tpu.memory_space<smem>>
    %289 = vector.broadcast %288 : f32 to vector<1x384xf32>
    %290 = arith.mulf %289, %287 : vector<1x384xf32>
    %c0_177 = arith.constant 0 : index
    %c0_178 = arith.constant 0 : index
    %291 = vector.load %arg6[%c0_177, %c0_178] : memref<1x384xf32, #tpu.memory_space<vmem>>, vector<1x384xf32>
    %292 = arith.addf %291, %290 : vector<1x384xf32>
    %c0_179 = arith.constant 0 : index
    %c0_180 = arith.constant 0 : index
    %293 = vector.load %arg6[%c0_179, %c0_180] : memref<1x384xf32, #tpu.memory_space<vmem>>, vector<1x384xf32>
    tpu.vector_store %arg6[%c0_179, %c0_180], %292 {strides = array<i32>} : memref<1x384xf32, #tpu.memory_space<vmem>>, vector<1x384xf32>,
    %c334_i32 = arith.constant 334 : i32
    %294 = tpu.dynamic_rotate %272 by %c334_i32 dim 1 : vector<1x384xf32>, i32 -> vector<1x384xf32>
    %c26 = arith.constant 26 : index
    %295 = memref.load %arg1[%c26] : memref<98xf32, #tpu.memory_space<smem>>
    %296 = vector.broadcast %295 : f32 to vector<1x384xf32>
    %297 = arith.mulf %296, %294 : vector<1x384xf32>
    %c0_181 = arith.constant 0 : index
    %c0_182 = arith.constant 0 : index
    %298 = vector.load %arg6[%c0_181, %c0_182] : memref<1x384xf32, #tpu.memory_space<vmem>>, vector<1x384xf32>
    %299 = arith.addf %298, %297 : vector<1x384xf32>
    %c0_183 = arith.constant 0 : index
    %c0_184 = arith.constant 0 : index
    %300 = vector.load %arg6[%c0_183, %c0_184] : memref<1x384xf32, #tpu.memory_space<vmem>>, vector<1x384xf32>
    tpu.vector_store %arg6[%c0_183, %c0_184], %299 {strides = array<i32>} : memref<1x384xf32, #tpu.memory_space<vmem>>, vector<1x384xf32>,
    %c318_i32 = arith.constant 318 : i32
    %301 = tpu.dynamic_rotate %272 by %c318_i32 dim 1 : vector<1x384xf32>, i32 -> vector<1x384xf32>
    %c33 = arith.constant 33 : index
    %302 = memref.load %arg1[%c33] : memref<98xf32, #tpu.memory_space<smem>>
    %303 = vector.broadcast %302 : f32 to vector<1x384xf32>
    %304 = arith.mulf %303, %301 : vector<1x384xf32>
    %c0_185 = arith.constant 0 : index
    %c0_186 = arith.constant 0 : index
    %305 = vector.load %arg6[%c0_185, %c0_186] : memref<1x384xf32, #tpu.memory_space<vmem>>, vector<1x384xf32>
    %306 = arith.addf %305, %304 : vector<1x384xf32>
    %c0_187 = arith.constant 0 : index
    %c0_188 = arith.constant 0 : index
    %307 = vector.load %arg6[%c0_187, %c0_188] : memref<1x384xf32, #tpu.memory_space<vmem>>, vector<1x384xf32>
    tpu.vector_store %arg6[%c0_187, %c0_188], %306 {strides = array<i32>} : memref<1x384xf32, #tpu.memory_space<vmem>>, vector<1x384xf32>,
    %c302_i32 = arith.constant 302 : i32
    %308 = tpu.dynamic_rotate %272 by %c302_i32 dim 1 : vector<1x384xf32>, i32 -> vector<1x384xf32>
    %c40 = arith.constant 40 : index
    %309 = memref.load %arg1[%c40] : memref<98xf32, #tpu.memory_space<smem>>
    %310 = vector.broadcast %309 : f32 to vector<1x384xf32>
    %311 = arith.mulf %310, %308 : vector<1x384xf32>
    %c0_189 = arith.constant 0 : index
    %c0_190 = arith.constant 0 : index
    %312 = vector.load %arg6[%c0_189, %c0_190] : memref<1x384xf32, #tpu.memory_space<vmem>>, vector<1x384xf32>
    %313 = arith.addf %312, %311 : vector<1x384xf32>
    %c0_191 = arith.constant 0 : index
    %c0_192 = arith.constant 0 : index
    %314 = vector.load %arg6[%c0_191, %c0_192] : memref<1x384xf32, #tpu.memory_space<vmem>>, vector<1x384xf32>
    tpu.vector_store %arg6[%c0_191, %c0_192], %313 {strides = array<i32>} : memref<1x384xf32, #tpu.memory_space<vmem>>, vector<1x384xf32>,
    %c286_i32 = arith.constant 286 : i32
    %315 = tpu.dynamic_rotate %272 by %c286_i32 dim 1 : vector<1x384xf32>, i32 -> vector<1x384xf32>
    %c47 = arith.constant 47 : index
    %316 = memref.load %arg1[%c47] : memref<98xf32, #tpu.memory_space<smem>>
    %317 = vector.broadcast %316 : f32 to vector<1x384xf32>
    %318 = arith.mulf %317, %315 : vector<1x384xf32>
    %c0_193 = arith.constant 0 : index
    %c0_194 = arith.constant 0 : index
    %319 = vector.load %arg6[%c0_193, %c0_194] : memref<1x384xf32, #tpu.memory_space<vmem>>, vector<1x384xf32>
    %320 = arith.addf %319, %318 : vector<1x384xf32>
    %c0_195 = arith.constant 0 : index
    %c0_196 = arith.constant 0 : index
    %321 = vector.load %arg6[%c0_195, %c0_196] : memref<1x384xf32, #tpu.memory_space<vmem>>, vector<1x384xf32>
    tpu.vector_store %arg6[%c0_195, %c0_196], %320 {strides = array<i32>} : memref<1x384xf32, #tpu.memory_space<vmem>>, vector<1x384xf32>,
    %c6 = arith.constant 6 : index
    %c0_197 = arith.constant 0 : index
    %322 = vector.load %arg2[%c6, %c0_197] : memref<7x384xf32, #tpu.memory_space<vmem>>, vector<1x384xf32>
    %323 = arith.mulf %18, %322 : vector<1x384xf32>
    %c381_i32 = arith.constant 381 : i32
    %324 = tpu.dynamic_rotate %323 by %c381_i32 dim 1 : vector<1x384xf32>, i32 -> vector<1x384xf32>
    %c6_198 = arith.constant 6 : index
    %325 = memref.load %arg1[%c6_198] : memref<98xf32, #tpu.memory_space<smem>>
    %326 = vector.broadcast %325 : f32 to vector<1x384xf32>
    %327 = arith.mulf %326, %324 : vector<1x384xf32>
    %c0_199 = arith.constant 0 : index
    %c0_200 = arith.constant 0 : index
    %328 = vector.load %arg6[%c0_199, %c0_200] : memref<1x384xf32, #tpu.memory_space<vmem>>, vector<1x384xf32>
    %329 = arith.addf %328, %327 : vector<1x384xf32>
    %c0_201 = arith.constant 0 : index
    %c0_202 = arith.constant 0 : index
    %330 = vector.load %arg6[%c0_201, %c0_202] : memref<1x384xf32, #tpu.memory_space<vmem>>, vector<1x384xf32>
    tpu.vector_store %arg6[%c0_201, %c0_202], %329 {strides = array<i32>} : memref<1x384xf32, #tpu.memory_space<vmem>>, vector<1x384xf32>,
    %c365_i32 = arith.constant 365 : i32
    %331 = tpu.dynamic_rotate %323 by %c365_i32 dim 1 : vector<1x384xf32>, i32 -> vector<1x384xf32>
    %c13 = arith.constant 13 : index
    %332 = memref.load %arg1[%c13] : memref<98xf32, #tpu.memory_space<smem>>
    %333 = vector.broadcast %332 : f32 to vector<1x384xf32>
    %334 = arith.mulf %333, %331 : vector<1x384xf32>
    %c0_203 = arith.constant 0 : index
    %c0_204 = arith.constant 0 : index
    %335 = vector.load %arg6[%c0_203, %c0_204] : memref<1x384xf32, #tpu.memory_space<vmem>>, vector<1x384xf32>
    %336 = arith.addf %335, %334 : vector<1x384xf32>
    %c0_205 = arith.constant 0 : index
    %c0_206 = arith.constant 0 : index
    %337 = vector.load %arg6[%c0_205, %c0_206] : memref<1x384xf32, #tpu.memory_space<vmem>>, vector<1x384xf32>
    tpu.vector_store %arg6[%c0_205, %c0_206], %336 {strides = array<i32>} : memref<1x384xf32, #tpu.memory_space<vmem>>, vector<1x384xf32>,
    %c349_i32 = arith.constant 349 : i32
    %338 = tpu.dynamic_rotate %323 by %c349_i32 dim 1 : vector<1x384xf32>, i32 -> vector<1x384xf32>
    %c20 = arith.constant 20 : index
    %339 = memref.load %arg1[%c20] : memref<98xf32, #tpu.memory_space<smem>>
    %340 = vector.broadcast %339 : f32 to vector<1x384xf32>
    %341 = arith.mulf %340, %338 : vector<1x384xf32>
    %c0_207 = arith.constant 0 : index
    %c0_208 = arith.constant 0 : index
    %342 = vector.load %arg6[%c0_207, %c0_208] : memref<1x384xf32, #tpu.memory_space<vmem>>, vector<1x384xf32>
    %343 = arith.addf %342, %341 : vector<1x384xf32>
    %c0_209 = arith.constant 0 : index
    %c0_210 = arith.constant 0 : index
    %344 = vector.load %arg6[%c0_209, %c0_210] : memref<1x384xf32, #tpu.memory_space<vmem>>, vector<1x384xf32>
    tpu.vector_store %arg6[%c0_209, %c0_210], %343 {strides = array<i32>} : memref<1x384xf32, #tpu.memory_space<vmem>>, vector<1x384xf32>,
    %c333_i32 = arith.constant 333 : i32
    %345 = tpu.dynamic_rotate %323 by %c333_i32 dim 1 : vector<1x384xf32>, i32 -> vector<1x384xf32>
    %c27 = arith.constant 27 : index
    %346 = memref.load %arg1[%c27] : memref<98xf32, #tpu.memory_space<smem>>
    %347 = vector.broadcast %346 : f32 to vector<1x384xf32>
    %348 = arith.mulf %347, %345 : vector<1x384xf32>
    %c0_211 = arith.constant 0 : index
    %c0_212 = arith.constant 0 : index
    %349 = vector.load %arg6[%c0_211, %c0_212] : memref<1x384xf32, #tpu.memory_space<vmem>>, vector<1x384xf32>
    %350 = arith.addf %349, %348 : vector<1x384xf32>
    %c0_213 = arith.constant 0 : index
    %c0_214 = arith.constant 0 : index
    %351 = vector.load %arg6[%c0_213, %c0_214] : memref<1x384xf32, #tpu.memory_space<vmem>>, vector<1x384xf32>
    tpu.vector_store %arg6[%c0_213, %c0_214], %350 {strides = array<i32>} : memref<1x384xf32, #tpu.memory_space<vmem>>, vector<1x384xf32>,
    %c317_i32 = arith.constant 317 : i32
    %352 = tpu.dynamic_rotate %323 by %c317_i32 dim 1 : vector<1x384xf32>, i32 -> vector<1x384xf32>
    %c34 = arith.constant 34 : index
    %353 = memref.load %arg1[%c34] : memref<98xf32, #tpu.memory_space<smem>>
    %354 = vector.broadcast %353 : f32 to vector<1x384xf32>
    %355 = arith.mulf %354, %352 : vector<1x384xf32>
    %c0_215 = arith.constant 0 : index
    %c0_216 = arith.constant 0 : index
    %356 = vector.load %arg6[%c0_215, %c0_216] : memref<1x384xf32, #tpu.memory_space<vmem>>, vector<1x384xf32>
    %357 = arith.addf %356, %355 : vector<1x384xf32>
    %c0_217 = arith.constant 0 : index
    %c0_218 = arith.constant 0 : index
    %358 = vector.load %arg6[%c0_217, %c0_218] : memref<1x384xf32, #tpu.memory_space<vmem>>, vector<1x384xf32>
    tpu.vector_store %arg6[%c0_217, %c0_218], %357 {strides = array<i32>} : memref<1x384xf32, #tpu.memory_space<vmem>>, vector<1x384xf32>,
    %c301_i32 = arith.constant 301 : i32
    %359 = tpu.dynamic_rotate %323 by %c301_i32 dim 1 : vector<1x384xf32>, i32 -> vector<1x384xf32>
    %c41 = arith.constant 41 : index
    %360 = memref.load %arg1[%c41] : memref<98xf32, #tpu.memory_space<smem>>
    %361 = vector.broadcast %360 : f32 to vector<1x384xf32>
    %362 = arith.mulf %361, %359 : vector<1x384xf32>
    %c0_219 = arith.constant 0 : index
    %c0_220 = arith.constant 0 : index
    %363 = vector.load %arg6[%c0_219, %c0_220] : memref<1x384xf32, #tpu.memory_space<vmem>>, vector<1x384xf32>
    %364 = arith.addf %363, %362 : vector<1x384xf32>
    %c0_221 = arith.constant 0 : index
    %c0_222 = arith.constant 0 : index
    %365 = vector.load %arg6[%c0_221, %c0_222] : memref<1x384xf32, #tpu.memory_space<vmem>>, vector<1x384xf32>
    tpu.vector_store %arg6[%c0_221, %c0_222], %364 {strides = array<i32>} : memref<1x384xf32, #tpu.memory_space<vmem>>, vector<1x384xf32>,
    %c285_i32 = arith.constant 285 : i32
    %366 = tpu.dynamic_rotate %323 by %c285_i32 dim 1 : vector<1x384xf32>, i32 -> vector<1x384xf32>
    %c48_223 = arith.constant 48 : index
    %367 = memref.load %arg1[%c48_223] : memref<98xf32, #tpu.memory_space<smem>>
    %368 = vector.broadcast %367 : f32 to vector<1x384xf32>
    %369 = arith.mulf %368, %366 : vector<1x384xf32>
    %c0_224 = arith.constant 0 : index
    %c0_225 = arith.constant 0 : index
    %370 = vector.load %arg6[%c0_224, %c0_225] : memref<1x384xf32, #tpu.memory_space<vmem>>, vector<1x384xf32>
    %371 = arith.addf %370, %369 : vector<1x384xf32>
    %c0_226 = arith.constant 0 : index
    %c0_227 = arith.constant 0 : index
    %372 = vector.load %arg6[%c0_226, %c0_227] : memref<1x384xf32, #tpu.memory_space<vmem>>, vector<1x384xf32>
    tpu.vector_store %arg6[%c0_226, %c0_227], %371 {strides = array<i32>} : memref<1x384xf32, #tpu.memory_space<vmem>>, vector<1x384xf32>,
    %c0_228 = arith.constant 0 : index
    %c1_229 = arith.constant 1 : index
    %c0_230 = arith.constant 0 : index
    %373 = vector.load %arg5[%c0_228, %c1_229, %c0_230] : memref<1x2x384xf32, #tpu.memory_space<vmem>>, vector<1x1x384xf32>
    %374 = vector.shape_cast %373 : vector<1x1x384xf32> to vector<1x384xf32>
    %c0_231 = arith.constant 0 : index
    %c0_232 = arith.constant 0 : index
    %375 = vector.load %arg2[%c0_231, %c0_232] : memref<7x384xf32, #tpu.memory_space<vmem>>, vector<1x384xf32>
    %376 = arith.mulf %374, %375 : vector<1x384xf32>
    %c3_i32_233 = arith.constant 3 : i32
    %377 = tpu.dynamic_rotate %376 by %c3_i32_233 dim 1 : vector<1x384xf32>, i32 -> vector<1x384xf32>
    %c49 = arith.constant 49 : index
    %378 = memref.load %arg1[%c49] : memref<98xf32, #tpu.memory_space<smem>>
    %379 = vector.broadcast %378 : f32 to vector<1x384xf32>
    %380 = arith.mulf %379, %377 : vector<1x384xf32>
    %c0_234 = arith.constant 0 : index
    %c0_235 = arith.constant 0 : index
    %381 = vector.load %arg6[%c0_234, %c0_235] : memref<1x384xf32, #tpu.memory_space<vmem>>, vector<1x384xf32>
    %382 = arith.addf %381, %380 : vector<1x384xf32>
    %c0_236 = arith.constant 0 : index
    %c0_237 = arith.constant 0 : index
    %383 = vector.load %arg6[%c0_236, %c0_237] : memref<1x384xf32, #tpu.memory_space<vmem>>, vector<1x384xf32>
    tpu.vector_store %arg6[%c0_236, %c0_237], %382 {strides = array<i32>} : memref<1x384xf32, #tpu.memory_space<vmem>>, vector<1x384xf32>,
    %c371_i32_238 = arith.constant 371 : i32
    %384 = tpu.dynamic_rotate %376 by %c371_i32_238 dim 1 : vector<1x384xf32>, i32 -> vector<1x384xf32>
    %c56 = arith.constant 56 : index
    %385 = memref.load %arg1[%c56] : memref<98xf32, #tpu.memory_space<smem>>
    %386 = vector.broadcast %385 : f32 to vector<1x384xf32>
    %387 = arith.mulf %386, %384 : vector<1x384xf32>
    %c0_239 = arith.constant 0 : index
    %c0_240 = arith.constant 0 : index
    %388 = vector.load %arg6[%c0_239, %c0_240] : memref<1x384xf32, #tpu.memory_space<vmem>>, vector<1x384xf32>
    %389 = arith.addf %388, %387 : vector<1x384xf32>
    %c0_241 = arith.constant 0 : index
    %c0_242 = arith.constant 0 : index
    %390 = vector.load %arg6[%c0_241, %c0_242] : memref<1x384xf32, #tpu.memory_space<vmem>>, vector<1x384xf32>
    tpu.vector_store %arg6[%c0_241, %c0_242], %389 {strides = array<i32>} : memref<1x384xf32, #tpu.memory_space<vmem>>, vector<1x384xf32>,
    %c355_i32_243 = arith.constant 355 : i32
    %391 = tpu.dynamic_rotate %376 by %c355_i32_243 dim 1 : vector<1x384xf32>, i32 -> vector<1x384xf32>
    %c63 = arith.constant 63 : index
    %392 = memref.load %arg1[%c63] : memref<98xf32, #tpu.memory_space<smem>>
    %393 = vector.broadcast %392 : f32 to vector<1x384xf32>
    %394 = arith.mulf %393, %391 : vector<1x384xf32>
    %c0_244 = arith.constant 0 : index
    %c0_245 = arith.constant 0 : index
    %395 = vector.load %arg6[%c0_244, %c0_245] : memref<1x384xf32, #tpu.memory_space<vmem>>, vector<1x384xf32>
    %396 = arith.addf %395, %394 : vector<1x384xf32>
    %c0_246 = arith.constant 0 : index
    %c0_247 = arith.constant 0 : index
    %397 = vector.load %arg6[%c0_246, %c0_247] : memref<1x384xf32, #tpu.memory_space<vmem>>, vector<1x384xf32>
    tpu.vector_store %arg6[%c0_246, %c0_247], %396 {strides = array<i32>} : memref<1x384xf32, #tpu.memory_space<vmem>>, vector<1x384xf32>,
    %c339_i32_248 = arith.constant 339 : i32
    %398 = tpu.dynamic_rotate %376 by %c339_i32_248 dim 1 : vector<1x384xf32>, i32 -> vector<1x384xf32>
    %c70 = arith.constant 70 : index
    %399 = memref.load %arg1[%c70] : memref<98xf32, #tpu.memory_space<smem>>
    %400 = vector.broadcast %399 : f32 to vector<1x384xf32>
    %401 = arith.mulf %400, %398 : vector<1x384xf32>
    %c0_249 = arith.constant 0 : index
    %c0_250 = arith.constant 0 : index
    %402 = vector.load %arg6[%c0_249, %c0_250] : memref<1x384xf32, #tpu.memory_space<vmem>>, vector<1x384xf32>
    %403 = arith.addf %402, %401 : vector<1x384xf32>
    %c0_251 = arith.constant 0 : index
    %c0_252 = arith.constant 0 : index
    %404 = vector.load %arg6[%c0_251, %c0_252] : memref<1x384xf32, #tpu.memory_space<vmem>>, vector<1x384xf32>
    tpu.vector_store %arg6[%c0_251, %c0_252], %403 {strides = array<i32>} : memref<1x384xf32, #tpu.memory_space<vmem>>, vector<1x384xf32>,
    %c323_i32_253 = arith.constant 323 : i32
    %405 = tpu.dynamic_rotate %376 by %c323_i32_253 dim 1 : vector<1x384xf32>, i32 -> vector<1x384xf32>
    %c77 = arith.constant 77 : index
    %406 = memref.load %arg1[%c77] : memref<98xf32, #tpu.memory_space<smem>>
    %407 = vector.broadcast %406 : f32 to vector<1x384xf32>
    %408 = arith.mulf %407, %405 : vector<1x384xf32>
    %c0_254 = arith.constant 0 : index
    %c0_255 = arith.constant 0 : index
    %409 = vector.load %arg6[%c0_254, %c0_255] : memref<1x384xf32, #tpu.memory_space<vmem>>, vector<1x384xf32>
    %410 = arith.addf %409, %408 : vector<1x384xf32>
    %c0_256 = arith.constant 0 : index
    %c0_257 = arith.constant 0 : index
    %411 = vector.load %arg6[%c0_256, %c0_257] : memref<1x384xf32, #tpu.memory_space<vmem>>, vector<1x384xf32>
    tpu.vector_store %arg6[%c0_256, %c0_257], %410 {strides = array<i32>} : memref<1x384xf32, #tpu.memory_space<vmem>>, vector<1x384xf32>,
    %c307_i32_258 = arith.constant 307 : i32
    %412 = tpu.dynamic_rotate %376 by %c307_i32_258 dim 1 : vector<1x384xf32>, i32 -> vector<1x384xf32>
    %c84 = arith.constant 84 : index
    %413 = memref.load %arg1[%c84] : memref<98xf32, #tpu.memory_space<smem>>
    %414 = vector.broadcast %413 : f32 to vector<1x384xf32>
    %415 = arith.mulf %414, %412 : vector<1x384xf32>
    %c0_259 = arith.constant 0 : index
    %c0_260 = arith.constant 0 : index
    %416 = vector.load %arg6[%c0_259, %c0_260] : memref<1x384xf32, #tpu.memory_space<vmem>>, vector<1x384xf32>
    %417 = arith.addf %416, %415 : vector<1x384xf32>
    %c0_261 = arith.constant 0 : index
    %c0_262 = arith.constant 0 : index
    %418 = vector.load %arg6[%c0_261, %c0_262] : memref<1x384xf32, #tpu.memory_space<vmem>>, vector<1x384xf32>
    tpu.vector_store %arg6[%c0_261, %c0_262], %417 {strides = array<i32>} : memref<1x384xf32, #tpu.memory_space<vmem>>, vector<1x384xf32>,
    %c291_i32_263 = arith.constant 291 : i32
    %419 = tpu.dynamic_rotate %376 by %c291_i32_263 dim 1 : vector<1x384xf32>, i32 -> vector<1x384xf32>
    %c91 = arith.constant 91 : index
    %420 = memref.load %arg1[%c91] : memref<98xf32, #tpu.memory_space<smem>>
    %421 = vector.broadcast %420 : f32 to vector<1x384xf32>
    %422 = arith.mulf %421, %419 : vector<1x384xf32>
    %c0_264 = arith.constant 0 : index
    %c0_265 = arith.constant 0 : index
    %423 = vector.load %arg6[%c0_264, %c0_265] : memref<1x384xf32, #tpu.memory_space<vmem>>, vector<1x384xf32>
    %424 = arith.addf %423, %422 : vector<1x384xf32>
    %c0_266 = arith.constant 0 : index
    %c0_267 = arith.constant 0 : index
    %425 = vector.load %arg6[%c0_266, %c0_267] : memref<1x384xf32, #tpu.memory_space<vmem>>, vector<1x384xf32>
    tpu.vector_store %arg6[%c0_266, %c0_267], %424 {strides = array<i32>} : memref<1x384xf32, #tpu.memory_space<vmem>>, vector<1x384xf32>,
    %c1_268 = arith.constant 1 : index
    %c0_269 = arith.constant 0 : index
    %426 = vector.load %arg2[%c1_268, %c0_269] : memref<7x384xf32, #tpu.memory_space<vmem>>, vector<1x384xf32>
    %427 = arith.mulf %374, %426 : vector<1x384xf32>
    %c2_i32_270 = arith.constant 2 : i32
    %428 = tpu.dynamic_rotate %427 by %c2_i32_270 dim 1 : vector<1x384xf32>, i32 -> vector<1x384xf32>
    %c50 = arith.constant 50 : index
    %429 = memref.load %arg1[%c50] : memref<98xf32, #tpu.memory_space<smem>>
    %430 = vector.broadcast %429 : f32 to vector<1x384xf32>
    %431 = arith.mulf %430, %428 : vector<1x384xf32>
    %c0_271 = arith.constant 0 : index
    %c0_272 = arith.constant 0 : index
    %432 = vector.load %arg6[%c0_271, %c0_272] : memref<1x384xf32, #tpu.memory_space<vmem>>, vector<1x384xf32>
    %433 = arith.addf %432, %431 : vector<1x384xf32>
    %c0_273 = arith.constant 0 : index
    %c0_274 = arith.constant 0 : index
    %434 = vector.load %arg6[%c0_273, %c0_274] : memref<1x384xf32, #tpu.memory_space<vmem>>, vector<1x384xf32>
    tpu.vector_store %arg6[%c0_273, %c0_274], %433 {strides = array<i32>} : memref<1x384xf32, #tpu.memory_space<vmem>>, vector<1x384xf32>,
    %c370_i32_275 = arith.constant 370 : i32
    %435 = tpu.dynamic_rotate %427 by %c370_i32_275 dim 1 : vector<1x384xf32>, i32 -> vector<1x384xf32>
    %c57 = arith.constant 57 : index
    %436 = memref.load %arg1[%c57] : memref<98xf32, #tpu.memory_space<smem>>
    %437 = vector.broadcast %436 : f32 to vector<1x384xf32>
    %438 = arith.mulf %437, %435 : vector<1x384xf32>
    %c0_276 = arith.constant 0 : index
    %c0_277 = arith.constant 0 : index
    %439 = vector.load %arg6[%c0_276, %c0_277] : memref<1x384xf32, #tpu.memory_space<vmem>>, vector<1x384xf32>
    %440 = arith.addf %439, %438 : vector<1x384xf32>
    %c0_278 = arith.constant 0 : index
    %c0_279 = arith.constant 0 : index
    %441 = vector.load %arg6[%c0_278, %c0_279] : memref<1x384xf32, #tpu.memory_space<vmem>>, vector<1x384xf32>
    tpu.vector_store %arg6[%c0_278, %c0_279], %440 {strides = array<i32>} : memref<1x384xf32, #tpu.memory_space<vmem>>, vector<1x384xf32>,
    %c354_i32_280 = arith.constant 354 : i32
    %442 = tpu.dynamic_rotate %427 by %c354_i32_280 dim 1 : vector<1x384xf32>, i32 -> vector<1x384xf32>
    %c64 = arith.constant 64 : index
    %443 = memref.load %arg1[%c64] : memref<98xf32, #tpu.memory_space<smem>>
    %444 = vector.broadcast %443 : f32 to vector<1x384xf32>
    %445 = arith.mulf %444, %442 : vector<1x384xf32>
    %c0_281 = arith.constant 0 : index
    %c0_282 = arith.constant 0 : index
    %446 = vector.load %arg6[%c0_281, %c0_282] : memref<1x384xf32, #tpu.memory_space<vmem>>, vector<1x384xf32>
    %447 = arith.addf %446, %445 : vector<1x384xf32>
    %c0_283 = arith.constant 0 : index
    %c0_284 = arith.constant 0 : index
    %448 = vector.load %arg6[%c0_283, %c0_284] : memref<1x384xf32, #tpu.memory_space<vmem>>, vector<1x384xf32>
    tpu.vector_store %arg6[%c0_283, %c0_284], %447 {strides = array<i32>} : memref<1x384xf32, #tpu.memory_space<vmem>>, vector<1x384xf32>,
    %c338_i32_285 = arith.constant 338 : i32
    %449 = tpu.dynamic_rotate %427 by %c338_i32_285 dim 1 : vector<1x384xf32>, i32 -> vector<1x384xf32>
    %c71 = arith.constant 71 : index
    %450 = memref.load %arg1[%c71] : memref<98xf32, #tpu.memory_space<smem>>
    %451 = vector.broadcast %450 : f32 to vector<1x384xf32>
    %452 = arith.mulf %451, %449 : vector<1x384xf32>
    %c0_286 = arith.constant 0 : index
    %c0_287 = arith.constant 0 : index
    %453 = vector.load %arg6[%c0_286, %c0_287] : memref<1x384xf32, #tpu.memory_space<vmem>>, vector<1x384xf32>
    %454 = arith.addf %453, %452 : vector<1x384xf32>
    %c0_288 = arith.constant 0 : index
    %c0_289 = arith.constant 0 : index
    %455 = vector.load %arg6[%c0_288, %c0_289] : memref<1x384xf32, #tpu.memory_space<vmem>>, vector<1x384xf32>
    tpu.vector_store %arg6[%c0_288, %c0_289], %454 {strides = array<i32>} : memref<1x384xf32, #tpu.memory_space<vmem>>, vector<1x384xf32>,
    %c322_i32_290 = arith.constant 322 : i32
    %456 = tpu.dynamic_rotate %427 by %c322_i32_290 dim 1 : vector<1x384xf32>, i32 -> vector<1x384xf32>
    %c78 = arith.constant 78 : index
    %457 = memref.load %arg1[%c78] : memref<98xf32, #tpu.memory_space<smem>>
    %458 = vector.broadcast %457 : f32 to vector<1x384xf32>
    %459 = arith.mulf %458, %456 : vector<1x384xf32>
    %c0_291 = arith.constant 0 : index
    %c0_292 = arith.constant 0 : index
    %460 = vector.load %arg6[%c0_291, %c0_292] : memref<1x384xf32, #tpu.memory_space<vmem>>, vector<1x384xf32>
    %461 = arith.addf %460, %459 : vector<1x384xf32>
    %c0_293 = arith.constant 0 : index
    %c0_294 = arith.constant 0 : index
    %462 = vector.load %arg6[%c0_293, %c0_294] : memref<1x384xf32, #tpu.memory_space<vmem>>, vector<1x384xf32>
    tpu.vector_store %arg6[%c0_293, %c0_294], %461 {strides = array<i32>} : memref<1x384xf32, #tpu.memory_space<vmem>>, vector<1x384xf32>,
    %c306_i32_295 = arith.constant 306 : i32
    %463 = tpu.dynamic_rotate %427 by %c306_i32_295 dim 1 : vector<1x384xf32>, i32 -> vector<1x384xf32>
    %c85 = arith.constant 85 : index
    %464 = memref.load %arg1[%c85] : memref<98xf32, #tpu.memory_space<smem>>
    %465 = vector.broadcast %464 : f32 to vector<1x384xf32>
    %466 = arith.mulf %465, %463 : vector<1x384xf32>
    %c0_296 = arith.constant 0 : index
    %c0_297 = arith.constant 0 : index
    %467 = vector.load %arg6[%c0_296, %c0_297] : memref<1x384xf32, #tpu.memory_space<vmem>>, vector<1x384xf32>
    %468 = arith.addf %467, %466 : vector<1x384xf32>
    %c0_298 = arith.constant 0 : index
    %c0_299 = arith.constant 0 : index
    %469 = vector.load %arg6[%c0_298, %c0_299] : memref<1x384xf32, #tpu.memory_space<vmem>>, vector<1x384xf32>
    tpu.vector_store %arg6[%c0_298, %c0_299], %468 {strides = array<i32>} : memref<1x384xf32, #tpu.memory_space<vmem>>, vector<1x384xf32>,
    %c290_i32_300 = arith.constant 290 : i32
    %470 = tpu.dynamic_rotate %427 by %c290_i32_300 dim 1 : vector<1x384xf32>, i32 -> vector<1x384xf32>
    %c92 = arith.constant 92 : index
    %471 = memref.load %arg1[%c92] : memref<98xf32, #tpu.memory_space<smem>>
    %472 = vector.broadcast %471 : f32 to vector<1x384xf32>
    %473 = arith.mulf %472, %470 : vector<1x384xf32>
    %c0_301 = arith.constant 0 : index
    %c0_302 = arith.constant 0 : index
    %474 = vector.load %arg6[%c0_301, %c0_302] : memref<1x384xf32, #tpu.memory_space<vmem>>, vector<1x384xf32>
    %475 = arith.addf %474, %473 : vector<1x384xf32>
    %c0_303 = arith.constant 0 : index
    %c0_304 = arith.constant 0 : index
    %476 = vector.load %arg6[%c0_303, %c0_304] : memref<1x384xf32, #tpu.memory_space<vmem>>, vector<1x384xf32>
    tpu.vector_store %arg6[%c0_303, %c0_304], %475 {strides = array<i32>} : memref<1x384xf32, #tpu.memory_space<vmem>>, vector<1x384xf32>,
    %c2_305 = arith.constant 2 : index
    %c0_306 = arith.constant 0 : index
    %477 = vector.load %arg2[%c2_305, %c0_306] : memref<7x384xf32, #tpu.memory_space<vmem>>, vector<1x384xf32>
    %478 = arith.mulf %374, %477 : vector<1x384xf32>
    %c1_i32_307 = arith.constant 1 : i32
    %479 = tpu.dynamic_rotate %478 by %c1_i32_307 dim 1 : vector<1x384xf32>, i32 -> vector<1x384xf32>
    %c51 = arith.constant 51 : index
    %480 = memref.load %arg1[%c51] : memref<98xf32, #tpu.memory_space<smem>>
    %481 = vector.broadcast %480 : f32 to vector<1x384xf32>
    %482 = arith.mulf %481, %479 : vector<1x384xf32>
    %c0_308 = arith.constant 0 : index
    %c0_309 = arith.constant 0 : index
    %483 = vector.load %arg6[%c0_308, %c0_309] : memref<1x384xf32, #tpu.memory_space<vmem>>, vector<1x384xf32>
    %484 = arith.addf %483, %482 : vector<1x384xf32>
    %c0_310 = arith.constant 0 : index
    %c0_311 = arith.constant 0 : index
    %485 = vector.load %arg6[%c0_310, %c0_311] : memref<1x384xf32, #tpu.memory_space<vmem>>, vector<1x384xf32>
    tpu.vector_store %arg6[%c0_310, %c0_311], %484 {strides = array<i32>} : memref<1x384xf32, #tpu.memory_space<vmem>>, vector<1x384xf32>,
    %c369_i32_312 = arith.constant 369 : i32
    %486 = tpu.dynamic_rotate %478 by %c369_i32_312 dim 1 : vector<1x384xf32>, i32 -> vector<1x384xf32>
    %c58 = arith.constant 58 : index
    %487 = memref.load %arg1[%c58] : memref<98xf32, #tpu.memory_space<smem>>
    %488 = vector.broadcast %487 : f32 to vector<1x384xf32>
    %489 = arith.mulf %488, %486 : vector<1x384xf32>
    %c0_313 = arith.constant 0 : index
    %c0_314 = arith.constant 0 : index
    %490 = vector.load %arg6[%c0_313, %c0_314] : memref<1x384xf32, #tpu.memory_space<vmem>>, vector<1x384xf32>
    %491 = arith.addf %490, %489 : vector<1x384xf32>
    %c0_315 = arith.constant 0 : index
    %c0_316 = arith.constant 0 : index
    %492 = vector.load %arg6[%c0_315, %c0_316] : memref<1x384xf32, #tpu.memory_space<vmem>>, vector<1x384xf32>
    tpu.vector_store %arg6[%c0_315, %c0_316], %491 {strides = array<i32>} : memref<1x384xf32, #tpu.memory_space<vmem>>, vector<1x384xf32>,
    %c353_i32_317 = arith.constant 353 : i32
    %493 = tpu.dynamic_rotate %478 by %c353_i32_317 dim 1 : vector<1x384xf32>, i32 -> vector<1x384xf32>
    %c65 = arith.constant 65 : index
    %494 = memref.load %arg1[%c65] : memref<98xf32, #tpu.memory_space<smem>>
    %495 = vector.broadcast %494 : f32 to vector<1x384xf32>
    %496 = arith.mulf %495, %493 : vector<1x384xf32>
    %c0_318 = arith.constant 0 : index
    %c0_319 = arith.constant 0 : index
    %497 = vector.load %arg6[%c0_318, %c0_319] : memref<1x384xf32, #tpu.memory_space<vmem>>, vector<1x384xf32>
    %498 = arith.addf %497, %496 : vector<1x384xf32>
    %c0_320 = arith.constant 0 : index
    %c0_321 = arith.constant 0 : index
    %499 = vector.load %arg6[%c0_320, %c0_321] : memref<1x384xf32, #tpu.memory_space<vmem>>, vector<1x384xf32>
    tpu.vector_store %arg6[%c0_320, %c0_321], %498 {strides = array<i32>} : memref<1x384xf32, #tpu.memory_space<vmem>>, vector<1x384xf32>,
    %c337_i32_322 = arith.constant 337 : i32
    %500 = tpu.dynamic_rotate %478 by %c337_i32_322 dim 1 : vector<1x384xf32>, i32 -> vector<1x384xf32>
    %c72 = arith.constant 72 : index
    %501 = memref.load %arg1[%c72] : memref<98xf32, #tpu.memory_space<smem>>
    %502 = vector.broadcast %501 : f32 to vector<1x384xf32>
    %503 = arith.mulf %502, %500 : vector<1x384xf32>
    %c0_323 = arith.constant 0 : index
    %c0_324 = arith.constant 0 : index
    %504 = vector.load %arg6[%c0_323, %c0_324] : memref<1x384xf32, #tpu.memory_space<vmem>>, vector<1x384xf32>
    %505 = arith.addf %504, %503 : vector<1x384xf32>
    %c0_325 = arith.constant 0 : index
    %c0_326 = arith.constant 0 : index
    %506 = vector.load %arg6[%c0_325, %c0_326] : memref<1x384xf32, #tpu.memory_space<vmem>>, vector<1x384xf32>
    tpu.vector_store %arg6[%c0_325, %c0_326], %505 {strides = array<i32>} : memref<1x384xf32, #tpu.memory_space<vmem>>, vector<1x384xf32>,
    %c321_i32_327 = arith.constant 321 : i32
    %507 = tpu.dynamic_rotate %478 by %c321_i32_327 dim 1 : vector<1x384xf32>, i32 -> vector<1x384xf32>
    %c79 = arith.constant 79 : index
    %508 = memref.load %arg1[%c79] : memref<98xf32, #tpu.memory_space<smem>>
    %509 = vector.broadcast %508 : f32 to vector<1x384xf32>
    %510 = arith.mulf %509, %507 : vector<1x384xf32>
    %c0_328 = arith.constant 0 : index
    %c0_329 = arith.constant 0 : index
    %511 = vector.load %arg6[%c0_328, %c0_329] : memref<1x384xf32, #tpu.memory_space<vmem>>, vector<1x384xf32>
    %512 = arith.addf %511, %510 : vector<1x384xf32>
    %c0_330 = arith.constant 0 : index
    %c0_331 = arith.constant 0 : index
    %513 = vector.load %arg6[%c0_330, %c0_331] : memref<1x384xf32, #tpu.memory_space<vmem>>, vector<1x384xf32>
    tpu.vector_store %arg6[%c0_330, %c0_331], %512 {strides = array<i32>} : memref<1x384xf32, #tpu.memory_space<vmem>>, vector<1x384xf32>,
    %c305_i32_332 = arith.constant 305 : i32
    %514 = tpu.dynamic_rotate %478 by %c305_i32_332 dim 1 : vector<1x384xf32>, i32 -> vector<1x384xf32>
    %c86 = arith.constant 86 : index
    %515 = memref.load %arg1[%c86] : memref<98xf32, #tpu.memory_space<smem>>
    %516 = vector.broadcast %515 : f32 to vector<1x384xf32>
    %517 = arith.mulf %516, %514 : vector<1x384xf32>
    %c0_333 = arith.constant 0 : index
    %c0_334 = arith.constant 0 : index
    %518 = vector.load %arg6[%c0_333, %c0_334] : memref<1x384xf32, #tpu.memory_space<vmem>>, vector<1x384xf32>
    %519 = arith.addf %518, %517 : vector<1x384xf32>
    %c0_335 = arith.constant 0 : index
    %c0_336 = arith.constant 0 : index
    %520 = vector.load %arg6[%c0_335, %c0_336] : memref<1x384xf32, #tpu.memory_space<vmem>>, vector<1x384xf32>
    tpu.vector_store %arg6[%c0_335, %c0_336], %519 {strides = array<i32>} : memref<1x384xf32, #tpu.memory_space<vmem>>, vector<1x384xf32>,
    %c289_i32_337 = arith.constant 289 : i32
    %521 = tpu.dynamic_rotate %478 by %c289_i32_337 dim 1 : vector<1x384xf32>, i32 -> vector<1x384xf32>
    %c93 = arith.constant 93 : index
    %522 = memref.load %arg1[%c93] : memref<98xf32, #tpu.memory_space<smem>>
    %523 = vector.broadcast %522 : f32 to vector<1x384xf32>
    %524 = arith.mulf %523, %521 : vector<1x384xf32>
    %c0_338 = arith.constant 0 : index
    %c0_339 = arith.constant 0 : index
    %525 = vector.load %arg6[%c0_338, %c0_339] : memref<1x384xf32, #tpu.memory_space<vmem>>, vector<1x384xf32>
    %526 = arith.addf %525, %524 : vector<1x384xf32>
    %c0_340 = arith.constant 0 : index
    %c0_341 = arith.constant 0 : index
    %527 = vector.load %arg6[%c0_340, %c0_341] : memref<1x384xf32, #tpu.memory_space<vmem>>, vector<1x384xf32>
    tpu.vector_store %arg6[%c0_340, %c0_341], %526 {strides = array<i32>} : memref<1x384xf32, #tpu.memory_space<vmem>>, vector<1x384xf32>,
    %c3_342 = arith.constant 3 : index
    %c0_343 = arith.constant 0 : index
    %528 = vector.load %arg2[%c3_342, %c0_343] : memref<7x384xf32, #tpu.memory_space<vmem>>, vector<1x384xf32>
    %529 = arith.mulf %374, %528 : vector<1x384xf32>
    %c52 = arith.constant 52 : index
    %530 = memref.load %arg1[%c52] : memref<98xf32, #tpu.memory_space<smem>>
    %531 = vector.broadcast %530 : f32 to vector<1x384xf32>
    %532 = arith.mulf %531, %529 : vector<1x384xf32>
    %c0_344 = arith.constant 0 : index
    %c0_345 = arith.constant 0 : index
    %533 = vector.load %arg6[%c0_344, %c0_345] : memref<1x384xf32, #tpu.memory_space<vmem>>, vector<1x384xf32>
    %534 = arith.addf %533, %532 : vector<1x384xf32>
    %c0_346 = arith.constant 0 : index
    %c0_347 = arith.constant 0 : index
    %535 = vector.load %arg6[%c0_346, %c0_347] : memref<1x384xf32, #tpu.memory_space<vmem>>, vector<1x384xf32>
    tpu.vector_store %arg6[%c0_346, %c0_347], %534 {strides = array<i32>} : memref<1x384xf32, #tpu.memory_space<vmem>>, vector<1x384xf32>,
    %c368_i32_348 = arith.constant 368 : i32
    %536 = tpu.dynamic_rotate %529 by %c368_i32_348 dim 1 : vector<1x384xf32>, i32 -> vector<1x384xf32>
    %c59 = arith.constant 59 : index
    %537 = memref.load %arg1[%c59] : memref<98xf32, #tpu.memory_space<smem>>
    %538 = vector.broadcast %537 : f32 to vector<1x384xf32>
    %539 = arith.mulf %538, %536 : vector<1x384xf32>
    %c0_349 = arith.constant 0 : index
    %c0_350 = arith.constant 0 : index
    %540 = vector.load %arg6[%c0_349, %c0_350] : memref<1x384xf32, #tpu.memory_space<vmem>>, vector<1x384xf32>
    %541 = arith.addf %540, %539 : vector<1x384xf32>
    %c0_351 = arith.constant 0 : index
    %c0_352 = arith.constant 0 : index
    %542 = vector.load %arg6[%c0_351, %c0_352] : memref<1x384xf32, #tpu.memory_space<vmem>>, vector<1x384xf32>
    tpu.vector_store %arg6[%c0_351, %c0_352], %541 {strides = array<i32>} : memref<1x384xf32, #tpu.memory_space<vmem>>, vector<1x384xf32>,
    %c352_i32_353 = arith.constant 352 : i32
    %543 = tpu.dynamic_rotate %529 by %c352_i32_353 dim 1 : vector<1x384xf32>, i32 -> vector<1x384xf32>
    %c66 = arith.constant 66 : index
    %544 = memref.load %arg1[%c66] : memref<98xf32, #tpu.memory_space<smem>>
    %545 = vector.broadcast %544 : f32 to vector<1x384xf32>
    %546 = arith.mulf %545, %543 : vector<1x384xf32>
    %c0_354 = arith.constant 0 : index
    %c0_355 = arith.constant 0 : index
    %547 = vector.load %arg6[%c0_354, %c0_355] : memref<1x384xf32, #tpu.memory_space<vmem>>, vector<1x384xf32>
    %548 = arith.addf %547, %546 : vector<1x384xf32>
    %c0_356 = arith.constant 0 : index
    %c0_357 = arith.constant 0 : index
    %549 = vector.load %arg6[%c0_356, %c0_357] : memref<1x384xf32, #tpu.memory_space<vmem>>, vector<1x384xf32>
    tpu.vector_store %arg6[%c0_356, %c0_357], %548 {strides = array<i32>} : memref<1x384xf32, #tpu.memory_space<vmem>>, vector<1x384xf32>,
    %c336_i32_358 = arith.constant 336 : i32
    %550 = tpu.dynamic_rotate %529 by %c336_i32_358 dim 1 : vector<1x384xf32>, i32 -> vector<1x384xf32>
    %c73 = arith.constant 73 : index
    %551 = memref.load %arg1[%c73] : memref<98xf32, #tpu.memory_space<smem>>
    %552 = vector.broadcast %551 : f32 to vector<1x384xf32>
    %553 = arith.mulf %552, %550 : vector<1x384xf32>
    %c0_359 = arith.constant 0 : index
    %c0_360 = arith.constant 0 : index
    %554 = vector.load %arg6[%c0_359, %c0_360] : memref<1x384xf32, #tpu.memory_space<vmem>>, vector<1x384xf32>
    %555 = arith.addf %554, %553 : vector<1x384xf32>
    %c0_361 = arith.constant 0 : index
    %c0_362 = arith.constant 0 : index
    %556 = vector.load %arg6[%c0_361, %c0_362] : memref<1x384xf32, #tpu.memory_space<vmem>>, vector<1x384xf32>
    tpu.vector_store %arg6[%c0_361, %c0_362], %555 {strides = array<i32>} : memref<1x384xf32, #tpu.memory_space<vmem>>, vector<1x384xf32>,
    %c320_i32_363 = arith.constant 320 : i32
    %557 = tpu.dynamic_rotate %529 by %c320_i32_363 dim 1 : vector<1x384xf32>, i32 -> vector<1x384xf32>
    %c80 = arith.constant 80 : index
    %558 = memref.load %arg1[%c80] : memref<98xf32, #tpu.memory_space<smem>>
    %559 = vector.broadcast %558 : f32 to vector<1x384xf32>
    %560 = arith.mulf %559, %557 : vector<1x384xf32>
    %c0_364 = arith.constant 0 : index
    %c0_365 = arith.constant 0 : index
    %561 = vector.load %arg6[%c0_364, %c0_365] : memref<1x384xf32, #tpu.memory_space<vmem>>, vector<1x384xf32>
    %562 = arith.addf %561, %560 : vector<1x384xf32>
    %c0_366 = arith.constant 0 : index
    %c0_367 = arith.constant 0 : index
    %563 = vector.load %arg6[%c0_366, %c0_367] : memref<1x384xf32, #tpu.memory_space<vmem>>, vector<1x384xf32>
    tpu.vector_store %arg6[%c0_366, %c0_367], %562 {strides = array<i32>} : memref<1x384xf32, #tpu.memory_space<vmem>>, vector<1x384xf32>,
    %c304_i32_368 = arith.constant 304 : i32
    %564 = tpu.dynamic_rotate %529 by %c304_i32_368 dim 1 : vector<1x384xf32>, i32 -> vector<1x384xf32>
    %c87 = arith.constant 87 : index
    %565 = memref.load %arg1[%c87] : memref<98xf32, #tpu.memory_space<smem>>
    %566 = vector.broadcast %565 : f32 to vector<1x384xf32>
    %567 = arith.mulf %566, %564 : vector<1x384xf32>
    %c0_369 = arith.constant 0 : index
    %c0_370 = arith.constant 0 : index
    %568 = vector.load %arg6[%c0_369, %c0_370] : memref<1x384xf32, #tpu.memory_space<vmem>>, vector<1x384xf32>
    %569 = arith.addf %568, %567 : vector<1x384xf32>
    %c0_371 = arith.constant 0 : index
    %c0_372 = arith.constant 0 : index
    %570 = vector.load %arg6[%c0_371, %c0_372] : memref<1x384xf32, #tpu.memory_space<vmem>>, vector<1x384xf32>
    tpu.vector_store %arg6[%c0_371, %c0_372], %569 {strides = array<i32>} : memref<1x384xf32, #tpu.memory_space<vmem>>, vector<1x384xf32>,
    %c288_i32_373 = arith.constant 288 : i32
    %571 = tpu.dynamic_rotate %529 by %c288_i32_373 dim 1 : vector<1x384xf32>, i32 -> vector<1x384xf32>
    %c94 = arith.constant 94 : index
    %572 = memref.load %arg1[%c94] : memref<98xf32, #tpu.memory_space<smem>>
    %573 = vector.broadcast %572 : f32 to vector<1x384xf32>
    %574 = arith.mulf %573, %571 : vector<1x384xf32>
    %c0_374 = arith.constant 0 : index
    %c0_375 = arith.constant 0 : index
    %575 = vector.load %arg6[%c0_374, %c0_375] : memref<1x384xf32, #tpu.memory_space<vmem>>, vector<1x384xf32>
    %576 = arith.addf %575, %574 : vector<1x384xf32>
    %c0_376 = arith.constant 0 : index
    %c0_377 = arith.constant 0 : index
    %577 = vector.load %arg6[%c0_376, %c0_377] : memref<1x384xf32, #tpu.memory_space<vmem>>, vector<1x384xf32>
    tpu.vector_store %arg6[%c0_376, %c0_377], %576 {strides = array<i32>} : memref<1x384xf32, #tpu.memory_space<vmem>>, vector<1x384xf32>,
    %c4_378 = arith.constant 4 : index
    %c0_379 = arith.constant 0 : index
    %578 = vector.load %arg2[%c4_378, %c0_379] : memref<7x384xf32, #tpu.memory_space<vmem>>, vector<1x384xf32>
    %579 = arith.mulf %374, %578 : vector<1x384xf32>
    %c383_i32_380 = arith.constant 383 : i32
    %580 = tpu.dynamic_rotate %579 by %c383_i32_380 dim 1 : vector<1x384xf32>, i32 -> vector<1x384xf32>
    %c53 = arith.constant 53 : index
    %581 = memref.load %arg1[%c53] : memref<98xf32, #tpu.memory_space<smem>>
    %582 = vector.broadcast %581 : f32 to vector<1x384xf32>
    %583 = arith.mulf %582, %580 : vector<1x384xf32>
    %c0_381 = arith.constant 0 : index
    %c0_382 = arith.constant 0 : index
    %584 = vector.load %arg6[%c0_381, %c0_382] : memref<1x384xf32, #tpu.memory_space<vmem>>, vector<1x384xf32>
    %585 = arith.addf %584, %583 : vector<1x384xf32>
    %c0_383 = arith.constant 0 : index
    %c0_384 = arith.constant 0 : index
    %586 = vector.load %arg6[%c0_383, %c0_384] : memref<1x384xf32, #tpu.memory_space<vmem>>, vector<1x384xf32>
    tpu.vector_store %arg6[%c0_383, %c0_384], %585 {strides = array<i32>} : memref<1x384xf32, #tpu.memory_space<vmem>>, vector<1x384xf32>,
    %c367_i32_385 = arith.constant 367 : i32
    %587 = tpu.dynamic_rotate %579 by %c367_i32_385 dim 1 : vector<1x384xf32>, i32 -> vector<1x384xf32>
    %c60 = arith.constant 60 : index
    %588 = memref.load %arg1[%c60] : memref<98xf32, #tpu.memory_space<smem>>
    %589 = vector.broadcast %588 : f32 to vector<1x384xf32>
    %590 = arith.mulf %589, %587 : vector<1x384xf32>
    %c0_386 = arith.constant 0 : index
    %c0_387 = arith.constant 0 : index
    %591 = vector.load %arg6[%c0_386, %c0_387] : memref<1x384xf32, #tpu.memory_space<vmem>>, vector<1x384xf32>
    %592 = arith.addf %591, %590 : vector<1x384xf32>
    %c0_388 = arith.constant 0 : index
    %c0_389 = arith.constant 0 : index
    %593 = vector.load %arg6[%c0_388, %c0_389] : memref<1x384xf32, #tpu.memory_space<vmem>>, vector<1x384xf32>
    tpu.vector_store %arg6[%c0_388, %c0_389], %592 {strides = array<i32>} : memref<1x384xf32, #tpu.memory_space<vmem>>, vector<1x384xf32>,
    %c351_i32_390 = arith.constant 351 : i32
    %594 = tpu.dynamic_rotate %579 by %c351_i32_390 dim 1 : vector<1x384xf32>, i32 -> vector<1x384xf32>
    %c67 = arith.constant 67 : index
    %595 = memref.load %arg1[%c67] : memref<98xf32, #tpu.memory_space<smem>>
    %596 = vector.broadcast %595 : f32 to vector<1x384xf32>
    %597 = arith.mulf %596, %594 : vector<1x384xf32>
    %c0_391 = arith.constant 0 : index
    %c0_392 = arith.constant 0 : index
    %598 = vector.load %arg6[%c0_391, %c0_392] : memref<1x384xf32, #tpu.memory_space<vmem>>, vector<1x384xf32>
    %599 = arith.addf %598, %597 : vector<1x384xf32>
    %c0_393 = arith.constant 0 : index
    %c0_394 = arith.constant 0 : index
    %600 = vector.load %arg6[%c0_393, %c0_394] : memref<1x384xf32, #tpu.memory_space<vmem>>, vector<1x384xf32>
    tpu.vector_store %arg6[%c0_393, %c0_394], %599 {strides = array<i32>} : memref<1x384xf32, #tpu.memory_space<vmem>>, vector<1x384xf32>,
    %c335_i32_395 = arith.constant 335 : i32
    %601 = tpu.dynamic_rotate %579 by %c335_i32_395 dim 1 : vector<1x384xf32>, i32 -> vector<1x384xf32>
    %c74 = arith.constant 74 : index
    %602 = memref.load %arg1[%c74] : memref<98xf32, #tpu.memory_space<smem>>
    %603 = vector.broadcast %602 : f32 to vector<1x384xf32>
    %604 = arith.mulf %603, %601 : vector<1x384xf32>
    %c0_396 = arith.constant 0 : index
    %c0_397 = arith.constant 0 : index
    %605 = vector.load %arg6[%c0_396, %c0_397] : memref<1x384xf32, #tpu.memory_space<vmem>>, vector<1x384xf32>
    %606 = arith.addf %605, %604 : vector<1x384xf32>
    %c0_398 = arith.constant 0 : index
    %c0_399 = arith.constant 0 : index
    %607 = vector.load %arg6[%c0_398, %c0_399] : memref<1x384xf32, #tpu.memory_space<vmem>>, vector<1x384xf32>
    tpu.vector_store %arg6[%c0_398, %c0_399], %606 {strides = array<i32>} : memref<1x384xf32, #tpu.memory_space<vmem>>, vector<1x384xf32>,
    %c319_i32_400 = arith.constant 319 : i32
    %608 = tpu.dynamic_rotate %579 by %c319_i32_400 dim 1 : vector<1x384xf32>, i32 -> vector<1x384xf32>
    %c81 = arith.constant 81 : index
    %609 = memref.load %arg1[%c81] : memref<98xf32, #tpu.memory_space<smem>>
    %610 = vector.broadcast %609 : f32 to vector<1x384xf32>
    %611 = arith.mulf %610, %608 : vector<1x384xf32>
    %c0_401 = arith.constant 0 : index
    %c0_402 = arith.constant 0 : index
    %612 = vector.load %arg6[%c0_401, %c0_402] : memref<1x384xf32, #tpu.memory_space<vmem>>, vector<1x384xf32>
    %613 = arith.addf %612, %611 : vector<1x384xf32>
    %c0_403 = arith.constant 0 : index
    %c0_404 = arith.constant 0 : index
    %614 = vector.load %arg6[%c0_403, %c0_404] : memref<1x384xf32, #tpu.memory_space<vmem>>, vector<1x384xf32>
    tpu.vector_store %arg6[%c0_403, %c0_404], %613 {strides = array<i32>} : memref<1x384xf32, #tpu.memory_space<vmem>>, vector<1x384xf32>,
    %c303_i32_405 = arith.constant 303 : i32
    %615 = tpu.dynamic_rotate %579 by %c303_i32_405 dim 1 : vector<1x384xf32>, i32 -> vector<1x384xf32>
    %c88 = arith.constant 88 : index
    %616 = memref.load %arg1[%c88] : memref<98xf32, #tpu.memory_space<smem>>
    %617 = vector.broadcast %616 : f32 to vector<1x384xf32>
    %618 = arith.mulf %617, %615 : vector<1x384xf32>
    %c0_406 = arith.constant 0 : index
    %c0_407 = arith.constant 0 : index
    %619 = vector.load %arg6[%c0_406, %c0_407] : memref<1x384xf32, #tpu.memory_space<vmem>>, vector<1x384xf32>
    %620 = arith.addf %619, %618 : vector<1x384xf32>
    %c0_408 = arith.constant 0 : index
    %c0_409 = arith.constant 0 : index
    %621 = vector.load %arg6[%c0_408, %c0_409] : memref<1x384xf32, #tpu.memory_space<vmem>>, vector<1x384xf32>
    tpu.vector_store %arg6[%c0_408, %c0_409], %620 {strides = array<i32>} : memref<1x384xf32, #tpu.memory_space<vmem>>, vector<1x384xf32>,
    %c287_i32_410 = arith.constant 287 : i32
    %622 = tpu.dynamic_rotate %579 by %c287_i32_410 dim 1 : vector<1x384xf32>, i32 -> vector<1x384xf32>
    %c95 = arith.constant 95 : index
    %623 = memref.load %arg1[%c95] : memref<98xf32, #tpu.memory_space<smem>>
    %624 = vector.broadcast %623 : f32 to vector<1x384xf32>
    %625 = arith.mulf %624, %622 : vector<1x384xf32>
    %c0_411 = arith.constant 0 : index
    %c0_412 = arith.constant 0 : index
    %626 = vector.load %arg6[%c0_411, %c0_412] : memref<1x384xf32, #tpu.memory_space<vmem>>, vector<1x384xf32>
    %627 = arith.addf %626, %625 : vector<1x384xf32>
    %c0_413 = arith.constant 0 : index
    %c0_414 = arith.constant 0 : index
    %628 = vector.load %arg6[%c0_413, %c0_414] : memref<1x384xf32, #tpu.memory_space<vmem>>, vector<1x384xf32>
    tpu.vector_store %arg6[%c0_413, %c0_414], %627 {strides = array<i32>} : memref<1x384xf32, #tpu.memory_space<vmem>>, vector<1x384xf32>,
    %c5_415 = arith.constant 5 : index
    %c0_416 = arith.constant 0 : index
    %629 = vector.load %arg2[%c5_415, %c0_416] : memref<7x384xf32, #tpu.memory_space<vmem>>, vector<1x384xf32>
    %630 = arith.mulf %374, %629 : vector<1x384xf32>
    %c382_i32_417 = arith.constant 382 : i32
    %631 = tpu.dynamic_rotate %630 by %c382_i32_417 dim 1 : vector<1x384xf32>, i32 -> vector<1x384xf32>
    %c54 = arith.constant 54 : index
    %632 = memref.load %arg1[%c54] : memref<98xf32, #tpu.memory_space<smem>>
    %633 = vector.broadcast %632 : f32 to vector<1x384xf32>
    %634 = arith.mulf %633, %631 : vector<1x384xf32>
    %c0_418 = arith.constant 0 : index
    %c0_419 = arith.constant 0 : index
    %635 = vector.load %arg6[%c0_418, %c0_419] : memref<1x384xf32, #tpu.memory_space<vmem>>, vector<1x384xf32>
    %636 = arith.addf %635, %634 : vector<1x384xf32>
    %c0_420 = arith.constant 0 : index
    %c0_421 = arith.constant 0 : index
    %637 = vector.load %arg6[%c0_420, %c0_421] : memref<1x384xf32, #tpu.memory_space<vmem>>, vector<1x384xf32>
    tpu.vector_store %arg6[%c0_420, %c0_421], %636 {strides = array<i32>} : memref<1x384xf32, #tpu.memory_space<vmem>>, vector<1x384xf32>,
    %c366_i32_422 = arith.constant 366 : i32
    %638 = tpu.dynamic_rotate %630 by %c366_i32_422 dim 1 : vector<1x384xf32>, i32 -> vector<1x384xf32>
    %c61 = arith.constant 61 : index
    %639 = memref.load %arg1[%c61] : memref<98xf32, #tpu.memory_space<smem>>
    %640 = vector.broadcast %639 : f32 to vector<1x384xf32>
    %641 = arith.mulf %640, %638 : vector<1x384xf32>
    %c0_423 = arith.constant 0 : index
    %c0_424 = arith.constant 0 : index
    %642 = vector.load %arg6[%c0_423, %c0_424] : memref<1x384xf32, #tpu.memory_space<vmem>>, vector<1x384xf32>
    %643 = arith.addf %642, %641 : vector<1x384xf32>
    %c0_425 = arith.constant 0 : index
    %c0_426 = arith.constant 0 : index
    %644 = vector.load %arg6[%c0_425, %c0_426] : memref<1x384xf32, #tpu.memory_space<vmem>>, vector<1x384xf32>
    tpu.vector_store %arg6[%c0_425, %c0_426], %643 {strides = array<i32>} : memref<1x384xf32, #tpu.memory_space<vmem>>, vector<1x384xf32>,
    %c350_i32_427 = arith.constant 350 : i32
    %645 = tpu.dynamic_rotate %630 by %c350_i32_427 dim 1 : vector<1x384xf32>, i32 -> vector<1x384xf32>
    %c68 = arith.constant 68 : index
    %646 = memref.load %arg1[%c68] : memref<98xf32, #tpu.memory_space<smem>>
    %647 = vector.broadcast %646 : f32 to vector<1x384xf32>
    %648 = arith.mulf %647, %645 : vector<1x384xf32>
    %c0_428 = arith.constant 0 : index
    %c0_429 = arith.constant 0 : index
    %649 = vector.load %arg6[%c0_428, %c0_429] : memref<1x384xf32, #tpu.memory_space<vmem>>, vector<1x384xf32>
    %650 = arith.addf %649, %648 : vector<1x384xf32>
    %c0_430 = arith.constant 0 : index
    %c0_431 = arith.constant 0 : index
    %651 = vector.load %arg6[%c0_430, %c0_431] : memref<1x384xf32, #tpu.memory_space<vmem>>, vector<1x384xf32>
    tpu.vector_store %arg6[%c0_430, %c0_431], %650 {strides = array<i32>} : memref<1x384xf32, #tpu.memory_space<vmem>>, vector<1x384xf32>,
    %c334_i32_432 = arith.constant 334 : i32
    %652 = tpu.dynamic_rotate %630 by %c334_i32_432 dim 1 : vector<1x384xf32>, i32 -> vector<1x384xf32>
    %c75 = arith.constant 75 : index
    %653 = memref.load %arg1[%c75] : memref<98xf32, #tpu.memory_space<smem>>
    %654 = vector.broadcast %653 : f32 to vector<1x384xf32>
    %655 = arith.mulf %654, %652 : vector<1x384xf32>
    %c0_433 = arith.constant 0 : index
    %c0_434 = arith.constant 0 : index
    %656 = vector.load %arg6[%c0_433, %c0_434] : memref<1x384xf32, #tpu.memory_space<vmem>>, vector<1x384xf32>
    %657 = arith.addf %656, %655 : vector<1x384xf32>
    %c0_435 = arith.constant 0 : index
    %c0_436 = arith.constant 0 : index
    %658 = vector.load %arg6[%c0_435, %c0_436] : memref<1x384xf32, #tpu.memory_space<vmem>>, vector<1x384xf32>
    tpu.vector_store %arg6[%c0_435, %c0_436], %657 {strides = array<i32>} : memref<1x384xf32, #tpu.memory_space<vmem>>, vector<1x384xf32>,
    %c318_i32_437 = arith.constant 318 : i32
    %659 = tpu.dynamic_rotate %630 by %c318_i32_437 dim 1 : vector<1x384xf32>, i32 -> vector<1x384xf32>
    %c82 = arith.constant 82 : index
    %660 = memref.load %arg1[%c82] : memref<98xf32, #tpu.memory_space<smem>>
    %661 = vector.broadcast %660 : f32 to vector<1x384xf32>
    %662 = arith.mulf %661, %659 : vector<1x384xf32>
    %c0_438 = arith.constant 0 : index
    %c0_439 = arith.constant 0 : index
    %663 = vector.load %arg6[%c0_438, %c0_439] : memref<1x384xf32, #tpu.memory_space<vmem>>, vector<1x384xf32>
    %664 = arith.addf %663, %662 : vector<1x384xf32>
    %c0_440 = arith.constant 0 : index
    %c0_441 = arith.constant 0 : index
    %665 = vector.load %arg6[%c0_440, %c0_441] : memref<1x384xf32, #tpu.memory_space<vmem>>, vector<1x384xf32>
    tpu.vector_store %arg6[%c0_440, %c0_441], %664 {strides = array<i32>} : memref<1x384xf32, #tpu.memory_space<vmem>>, vector<1x384xf32>,
    %c302_i32_442 = arith.constant 302 : i32
    %666 = tpu.dynamic_rotate %630 by %c302_i32_442 dim 1 : vector<1x384xf32>, i32 -> vector<1x384xf32>
    %c89 = arith.constant 89 : index
    %667 = memref.load %arg1[%c89] : memref<98xf32, #tpu.memory_space<smem>>
    %668 = vector.broadcast %667 : f32 to vector<1x384xf32>
    %669 = arith.mulf %668, %666 : vector<1x384xf32>
    %c0_443 = arith.constant 0 : index
    %c0_444 = arith.constant 0 : index
    %670 = vector.load %arg6[%c0_443, %c0_444] : memref<1x384xf32, #tpu.memory_space<vmem>>, vector<1x384xf32>
    %671 = arith.addf %670, %669 : vector<1x384xf32>
    %c0_445 = arith.constant 0 : index
    %c0_446 = arith.constant 0 : index
    %672 = vector.load %arg6[%c0_445, %c0_446] : memref<1x384xf32, #tpu.memory_space<vmem>>, vector<1x384xf32>
    tpu.vector_store %arg6[%c0_445, %c0_446], %671 {strides = array<i32>} : memref<1x384xf32, #tpu.memory_space<vmem>>, vector<1x384xf32>,
    %c286_i32_447 = arith.constant 286 : i32
    %673 = tpu.dynamic_rotate %630 by %c286_i32_447 dim 1 : vector<1x384xf32>, i32 -> vector<1x384xf32>
    %c96 = arith.constant 96 : index
    %674 = memref.load %arg1[%c96] : memref<98xf32, #tpu.memory_space<smem>>
    %675 = vector.broadcast %674 : f32 to vector<1x384xf32>
    %676 = arith.mulf %675, %673 : vector<1x384xf32>
    %c0_448 = arith.constant 0 : index
    %c0_449 = arith.constant 0 : index
    %677 = vector.load %arg6[%c0_448, %c0_449] : memref<1x384xf32, #tpu.memory_space<vmem>>, vector<1x384xf32>
    %678 = arith.addf %677, %676 : vector<1x384xf32>
    %c0_450 = arith.constant 0 : index
    %c0_451 = arith.constant 0 : index
    %679 = vector.load %arg6[%c0_450, %c0_451] : memref<1x384xf32, #tpu.memory_space<vmem>>, vector<1x384xf32>
    tpu.vector_store %arg6[%c0_450, %c0_451], %678 {strides = array<i32>} : memref<1x384xf32, #tpu.memory_space<vmem>>, vector<1x384xf32>,
    %c6_452 = arith.constant 6 : index
    %c0_453 = arith.constant 0 : index
    %680 = vector.load %arg2[%c6_452, %c0_453] : memref<7x384xf32, #tpu.memory_space<vmem>>, vector<1x384xf32>
    %681 = arith.mulf %374, %680 : vector<1x384xf32>
    %c381_i32_454 = arith.constant 381 : i32
    %682 = tpu.dynamic_rotate %681 by %c381_i32_454 dim 1 : vector<1x384xf32>, i32 -> vector<1x384xf32>
    %c55 = arith.constant 55 : index
    %683 = memref.load %arg1[%c55] : memref<98xf32, #tpu.memory_space<smem>>
    %684 = vector.broadcast %683 : f32 to vector<1x384xf32>
    %685 = arith.mulf %684, %682 : vector<1x384xf32>
    %c0_455 = arith.constant 0 : index
    %c0_456 = arith.constant 0 : index
    %686 = vector.load %arg6[%c0_455, %c0_456] : memref<1x384xf32, #tpu.memory_space<vmem>>, vector<1x384xf32>
    %687 = arith.addf %686, %685 : vector<1x384xf32>
    %c0_457 = arith.constant 0 : index
    %c0_458 = arith.constant 0 : index
    %688 = vector.load %arg6[%c0_457, %c0_458] : memref<1x384xf32, #tpu.memory_space<vmem>>, vector<1x384xf32>
    tpu.vector_store %arg6[%c0_457, %c0_458], %687 {strides = array<i32>} : memref<1x384xf32, #tpu.memory_space<vmem>>, vector<1x384xf32>,
    %c365_i32_459 = arith.constant 365 : i32
    %689 = tpu.dynamic_rotate %681 by %c365_i32_459 dim 1 : vector<1x384xf32>, i32 -> vector<1x384xf32>
    %c62 = arith.constant 62 : index
    %690 = memref.load %arg1[%c62] : memref<98xf32, #tpu.memory_space<smem>>
    %691 = vector.broadcast %690 : f32 to vector<1x384xf32>
    %692 = arith.mulf %691, %689 : vector<1x384xf32>
    %c0_460 = arith.constant 0 : index
    %c0_461 = arith.constant 0 : index
    %693 = vector.load %arg6[%c0_460, %c0_461] : memref<1x384xf32, #tpu.memory_space<vmem>>, vector<1x384xf32>
    %694 = arith.addf %693, %692 : vector<1x384xf32>
    %c0_462 = arith.constant 0 : index
    %c0_463 = arith.constant 0 : index
    %695 = vector.load %arg6[%c0_462, %c0_463] : memref<1x384xf32, #tpu.memory_space<vmem>>, vector<1x384xf32>
    tpu.vector_store %arg6[%c0_462, %c0_463], %694 {strides = array<i32>} : memref<1x384xf32, #tpu.memory_space<vmem>>, vector<1x384xf32>,
    %c349_i32_464 = arith.constant 349 : i32
    %696 = tpu.dynamic_rotate %681 by %c349_i32_464 dim 1 : vector<1x384xf32>, i32 -> vector<1x384xf32>
    %c69 = arith.constant 69 : index
    %697 = memref.load %arg1[%c69] : memref<98xf32, #tpu.memory_space<smem>>
    %698 = vector.broadcast %697 : f32 to vector<1x384xf32>
    %699 = arith.mulf %698, %696 : vector<1x384xf32>
    %c0_465 = arith.constant 0 : index
    %c0_466 = arith.constant 0 : index
    %700 = vector.load %arg6[%c0_465, %c0_466] : memref<1x384xf32, #tpu.memory_space<vmem>>, vector<1x384xf32>
    %701 = arith.addf %700, %699 : vector<1x384xf32>
    %c0_467 = arith.constant 0 : index
    %c0_468 = arith.constant 0 : index
    %702 = vector.load %arg6[%c0_467, %c0_468] : memref<1x384xf32, #tpu.memory_space<vmem>>, vector<1x384xf32>
    tpu.vector_store %arg6[%c0_467, %c0_468], %701 {strides = array<i32>} : memref<1x384xf32, #tpu.memory_space<vmem>>, vector<1x384xf32>,
    %c333_i32_469 = arith.constant 333 : i32
    %703 = tpu.dynamic_rotate %681 by %c333_i32_469 dim 1 : vector<1x384xf32>, i32 -> vector<1x384xf32>
    %c76 = arith.constant 76 : index
    %704 = memref.load %arg1[%c76] : memref<98xf32, #tpu.memory_space<smem>>
    %705 = vector.broadcast %704 : f32 to vector<1x384xf32>
    %706 = arith.mulf %705, %703 : vector<1x384xf32>
    %c0_470 = arith.constant 0 : index
    %c0_471 = arith.constant 0 : index
    %707 = vector.load %arg6[%c0_470, %c0_471] : memref<1x384xf32, #tpu.memory_space<vmem>>, vector<1x384xf32>
    %708 = arith.addf %707, %706 : vector<1x384xf32>
    %c0_472 = arith.constant 0 : index
    %c0_473 = arith.constant 0 : index
    %709 = vector.load %arg6[%c0_472, %c0_473] : memref<1x384xf32, #tpu.memory_space<vmem>>, vector<1x384xf32>
    tpu.vector_store %arg6[%c0_472, %c0_473], %708 {strides = array<i32>} : memref<1x384xf32, #tpu.memory_space<vmem>>, vector<1x384xf32>,
    %c317_i32_474 = arith.constant 317 : i32
    %710 = tpu.dynamic_rotate %681 by %c317_i32_474 dim 1 : vector<1x384xf32>, i32 -> vector<1x384xf32>
    %c83 = arith.constant 83 : index
    %711 = memref.load %arg1[%c83] : memref<98xf32, #tpu.memory_space<smem>>
    %712 = vector.broadcast %711 : f32 to vector<1x384xf32>
    %713 = arith.mulf %712, %710 : vector<1x384xf32>
    %c0_475 = arith.constant 0 : index
    %c0_476 = arith.constant 0 : index
    %714 = vector.load %arg6[%c0_475, %c0_476] : memref<1x384xf32, #tpu.memory_space<vmem>>, vector<1x384xf32>
    %715 = arith.addf %714, %713 : vector<1x384xf32>
    %c0_477 = arith.constant 0 : index
    %c0_478 = arith.constant 0 : index
    %716 = vector.load %arg6[%c0_477, %c0_478] : memref<1x384xf32, #tpu.memory_space<vmem>>, vector<1x384xf32>
    tpu.vector_store %arg6[%c0_477, %c0_478], %715 {strides = array<i32>} : memref<1x384xf32, #tpu.memory_space<vmem>>, vector<1x384xf32>,
    %c301_i32_479 = arith.constant 301 : i32
    %717 = tpu.dynamic_rotate %681 by %c301_i32_479 dim 1 : vector<1x384xf32>, i32 -> vector<1x384xf32>
    %c90 = arith.constant 90 : index
    %718 = memref.load %arg1[%c90] : memref<98xf32, #tpu.memory_space<smem>>
    %719 = vector.broadcast %718 : f32 to vector<1x384xf32>
    %720 = arith.mulf %719, %717 : vector<1x384xf32>
    %c0_480 = arith.constant 0 : index
    %c0_481 = arith.constant 0 : index
    %721 = vector.load %arg6[%c0_480, %c0_481] : memref<1x384xf32, #tpu.memory_space<vmem>>, vector<1x384xf32>
    %722 = arith.addf %721, %720 : vector<1x384xf32>
    %c0_482 = arith.constant 0 : index
    %c0_483 = arith.constant 0 : index
    %723 = vector.load %arg6[%c0_482, %c0_483] : memref<1x384xf32, #tpu.memory_space<vmem>>, vector<1x384xf32>
    tpu.vector_store %arg6[%c0_482, %c0_483], %722 {strides = array<i32>} : memref<1x384xf32, #tpu.memory_space<vmem>>, vector<1x384xf32>,
    %c285_i32_484 = arith.constant 285 : i32
    %724 = tpu.dynamic_rotate %681 by %c285_i32_484 dim 1 : vector<1x384xf32>, i32 -> vector<1x384xf32>
    %c97 = arith.constant 97 : index
    %725 = memref.load %arg1[%c97] : memref<98xf32, #tpu.memory_space<smem>>
    %726 = vector.broadcast %725 : f32 to vector<1x384xf32>
    %727 = arith.mulf %726, %724 : vector<1x384xf32>
    %c0_485 = arith.constant 0 : index
    %c0_486 = arith.constant 0 : index
    %728 = vector.load %arg6[%c0_485, %c0_486] : memref<1x384xf32, #tpu.memory_space<vmem>>, vector<1x384xf32>
    %729 = arith.addf %728, %727 : vector<1x384xf32>
    %c0_487 = arith.constant 0 : index
    %c0_488 = arith.constant 0 : index
    %730 = vector.load %arg6[%c0_487, %c0_488] : memref<1x384xf32, #tpu.memory_space<vmem>>, vector<1x384xf32>
    tpu.vector_store %arg6[%c0_487, %c0_488], %729 {strides = array<i32>} : memref<1x384xf32, #tpu.memory_space<vmem>>, vector<1x384xf32>,
    %c0_489 = arith.constant 0 : index
    %c0_490 = arith.constant 0 : index
    %731 = vector.load %arg6[%c0_489, %c0_490] : memref<1x384xf32, #tpu.memory_space<vmem>>, vector<1x256xf32>
    %732 = arith.negf %731 : vector<1x256xf32>
    %733 = math.exp %732 : vector<1x256xf32>
    %cst_491 = arith.constant 1.000000e+00 : f32
    %734 = vector.broadcast %cst_491 : f32 to vector<1x256xf32>
    %735 = arith.addf %734, %733 : vector<1x256xf32>
    %736 = arith.divf %734, %735 : vector<1x256xf32>
    %c0_492 = arith.constant 0 : index
    %c0_493 = arith.constant 0 : index
    %c0_494 = arith.constant 0 : index
    %737 = vector.load %arg7[%c0_492, %c0_493, %c0_494] : memref<1x1x256xf32, #tpu.memory_space<vmem>>, vector<1x1x256xf32>
    %738 = vector.shape_cast %737 : vector<1x1x256xf32> to vector<1x256xf32>
    %739 = vector.shape_cast %736 : vector<1x256xf32> to vector<1x1x256xf32>
    tpu.vector_store %arg7[%c0_492, %c0_493, %c0_494], %739 {strides = array<i32>} : memref<1x1x256xf32, #tpu.memory_space<vmem>>, vector<1x1x256xf32>,
    %c0_495 = arith.constant 0 : index
    %c0_496 = arith.constant 0 : index
    %c0_497 = arith.constant 0 : index
    %740 = vector.load %arg7[%c0_495, %c0_496, %c0_497] : memref<1x1x256xf32, #tpu.memory_space<vmem>>, vector<1x1x256xf32>
    %c0_498 = arith.constant 0 : index
    %c0_499 = arith.constant 0 : index
    %c0_500 = arith.constant 0 : index
    %741 = vector.load %arg3[%c0_498, %c0_499, %c0_500] : memref<1x4x256xf32, #tpu.memory_space<vmem>>, vector<1x4x256xf32>
    %742 = vector.broadcast %740 : vector<1x1x256xf32> to vector<1x4x256xf32>
    %743 = arith.mulf %741, %742 : vector<1x4x256xf32>
    %c0_501 = arith.constant 0 : index
    %c0_502 = arith.constant 0 : index
    %c0_503 = arith.constant 0 : index
    %744 = vector.load %arg4[%c0_501, %c0_502, %c0_503] : memref<1x4x256xf32, #tpu.memory_space<vmem>>, vector<1x4x256xf32>
    tpu.vector_store %arg4[%c0_501, %c0_502, %c0_503], %743 {strides = array<i32>} : memref<1x4x256xf32, #tpu.memory_space<vmem>>, vector<1x4x256xf32>,
    return
  }
  func.func @transform_0(%arg0: i32) -> i32 {
    %c0_i32 = arith.constant 0 : i32
    %c0_i32_0 = arith.constant 0 : i32
    return %c0_i32 : i32
  }
  func.func @transform_1(%arg0: i32) -> (i32, i32) {
    %c0_i32 = arith.constant 0 : i32
    %c0_i32_0 = arith.constant 0 : i32
    %c0_i32_1 = arith.constant 0 : i32
    return %c0_i32, %c0_i32_0 : i32, i32
  }
  func.func @transform_2(%arg0: i32) -> (i32, i32, i32) {
    %c0_i32 = arith.constant 0 : i32
    %c0_i32_0 = arith.constant 0 : i32
    %c0_i32_1 = arith.constant 0 : i32
    return %arg0, %c0_i32, %c0_i32_0 : i32, i32, i32
  }
  func.func @transform_3(%arg0: i32) -> (i32, i32, i32) {
    %c0_i32 = arith.constant 0 : i32
    %c0_i32_0 = arith.constant 0 : i32
    %c0_i32_1 = arith.constant 0 : i32
    return %arg0, %c0_i32, %c0_i32_0 : i32, i32, i32
  }
}

</mosaic_0001>

<llo_original>
// kernel: spatial_attention.1
$region0: #{spatial_attention.1}
  #allocation0 [shape = 'u32[]', space=smem, size = 0x4, offset = 0x4, fixed_abs, tag = 'smem constant byte address 0x4 - core index']
  #allocation1 [shape = 'u32[144,128]{1,0:T(1,128)}', space=vmem, size = 0x12000, scoped, tag = 'internal scratch']
  #allocation2 [shape = 'f32[1,2,384]{2,1,0:T(2,128)}', space=vmem, size = 0xc00, scoped, tag = 'scratch operand']
  #allocation3 [shape = 'f32[1,384]{1,0:T(1,128)}', space=vmem, size = 0x600, scoped, tag = 'scratch operand']
  #allocation4 [shape = 'f32[1,1,256]{2,1,0:T(1,128)}', space=vmem, size = 0x400, scoped, tag = 'scratch operand']
  %s0 = inlined_call_operand.vmem [shape: f32[98], index: 0, kind: input, shape index: {}]
  %s1 = inlined_call_operand.vmem [shape: f32[7,384], index: 1, kind: input, shape index: {}]
  %s2 = inlined_call_operand.vmem [shape: f32[2,4,256], index: 2, kind: input, shape index: {}]
  %s3 = inlined_call_operand.vmem [shape: f32[2,4,256], index: 3, kind: output, shape index: {}]
  %s4 = sld [smem:[#allocation0]]
  $region49: #{spatial_attention.1} parent=0
    _
  %s6 = ssub.s32 1, %s4
  %s7 = scalar_select 0, %s6, %s4
  $region1: #{spatial_attention.1} parent=0
    #allocation5 [shape = 'u8[512]{0}', space=smem, size = 0x200, scoped, tag = 'input window, operand 0, single buffered']
    #allocation6 [shape = 's32[2]{0}', space=sflag, size = 0x8, scoped, tag = 'scoped memory for spatial_attention.1']
    %8 = vsyncpa [#allocation6], 0
    loop: start=0, step=1, limit=4
    $region2: #{spatial_attention.1} parent=1 // loop_pre_header
      _
    $region3: #{spatial_attention.1} parent=1 // loop_header
      %s10 = sphi 0, %s14
      %p11 = scmp.ge.s32.totalorder %s10, 4
      %s18 = sphi 0, %s18
      %s20 = sphi 0, %s18
      %s21 = sphi 0, %s20
      %s35 = sphi 0, %s21
      %s39 = sphi 0, %s39
      %s41 = sphi 0, %s39
      %s42 = sphi 0, %s41
      %s56 = sphi 0, %s42
      %s62 = sphi 0, %s64
      %s65 = sphi 0, %s62
      %s66 = sphi 0, %s65
      %s82 = sphi 0, %s66
      %s88 = sphi 0, %s90
      %s91 = sphi 0, %s88
      %s92 = sphi 0, %s91
      %s108 = sphi 0, %s92
    $region4: #{spatial_attention.1} parent=1 // loop_header_branch
      %13 = sbr.rel (%p11) target = $region8
    $region5: #{spatial_attention.1} parent=1 // loop_body
      %s15 = ssub.s32 %s10, 1
      %s16 = ssub.s32 %s10, 2
      %s17 = sadd.s32 %s10, 1
      %s19 = sadd.s32 %s18, 1
      %p22 = scmp.eq.s32.totalorder %s10, 1
      %p23 = scmp.ne.s32.totalorder %s18, %s20
      %p24 = scmp.eq.s32.totalorder %s10, 0
      %p25 = por %p23, %p24
      %p26 = scmp.ne.s32.totalorder %s18, %s20
      %p27 = scmp.eq.s32.totalorder %s15, 1
      %p28 = por %p26, %p27
      %p29 = scmp.ne.s32.totalorder %s20, %s21
      %p30 = scmp.eq.s32.totalorder %s15, 0
      %p31 = por %p29, %p30
      %p32 = scmp.ne.s32.totalorder %s20, %s21
      %p33 = scmp.eq.s32.totalorder %s16, 1
      %p34 = por %p32, %p33
      %p36 = scmp.ne.s32.totalorder %s21, %s35
      %p37 = scmp.eq.s32.totalorder %s16, 0
      %p38 = por %p36, %p37
      %s40 = sadd.s32 %s39, 1
      %p43 = scmp.eq.s32.totalorder %s10, 1
      %p44 = scmp.ne.s32.totalorder %s39, %s41
      %p45 = scmp.eq.s32.totalorder %s10, 0
      %p46 = por %p44, %p45
      %p47 = scmp.ne.s32.totalorder %s39, %s41
      %p48 = scmp.eq.s32.totalorder %s15, 1
      %p49 = por %p47, %p48
      %p50 = scmp.ne.s32.totalorder %s41, %s42
      %p51 = scmp.eq.s32.totalorder %s15, 0
      %p52 = por %p50, %p51
      %p53 = scmp.ne.s32.totalorder %s41, %s42
      %p54 = scmp.eq.s32.totalorder %s16, 1
      %p55 = por %p53, %p54
      %p57 = scmp.ne.s32.totalorder %s42, %s56
      %p58 = scmp.eq.s32.totalorder %s16, 0
      %p59 = por %p57, %p58
      %s60 = ssub.s32 %s10, %s17
      %p61 = scmp.eq.s32.totalorder %s60, 0
      %s63 = sadd.s32 %s62, 1
      %s64 = scalar_select %p61, %s62, %s63
      %p67 = pneg %p61
      %p68 = scmp.eq.s32.totalorder %s10, 1
      %p69 = por %p67, %p68
      %p70 = scmp.ne.s32.totalorder %s62, %s65
      %p71 = scmp.eq.s32.totalorder %s10, 0
      %p72 = por %p70, %p71
      %p73 = scmp.ne.s32.totalorder %s62, %s65
      %p74 = scmp.eq.s32.totalorder %s15, 1
      %p75 = por %p73, %p74
      %p76 = scmp.ne.s32.totalorder %s65, %s66
      %p77 = scmp.eq.s32.totalorder %s15, 0
      %p78 = por %p76, %p77
      %p79 = scmp.ne.s32.totalorder %s65, %s66
      %p80 = scmp.eq.s32.totalorder %s16, 1
      %p81 = por %p79, %p80
      %p83 = scmp.ne.s32.totalorder %s66, %s82
      %p84 = scmp.eq.s32.totalorder %s16, 0
      %p85 = por %p83, %p84
      %s86 = ssub.s32 %s10, %s17
      %p87 = scmp.eq.s32.totalorder %s86, 0
      %s89 = sadd.s32 %s88, 1
      %s90 = scalar_select %p87, %s88, %s89
      %p93 = pneg %p87
      %p94 = scmp.eq.s32.totalorder %s10, 1
      %p95 = por %p93, %p94
      %p96 = scmp.ne.s32.totalorder %s88, %s91
      %p97 = scmp.eq.s32.totalorder %s10, 0
      %p98 = por %p96, %p97
      %p99 = scmp.ne.s32.totalorder %s88, %s91
      %p100 = scmp.eq.s32.totalorder %s15, 1
      %p101 = por %p99, %p100
      %p102 = scmp.ne.s32.totalorder %s91, %s92
      %p103 = scmp.eq.s32.totalorder %s15, 0
      %p104 = por %p102, %p103
      %p105 = scmp.ne.s32.totalorder %s91, %s92
      %p106 = scmp.eq.s32.totalorder %s16, 1
      %p107 = por %p105, %p106
      %p109 = scmp.ne.s32.totalorder %s92, %s108
      %p110 = scmp.eq.s32.totalorder %s16, 0
      %p111 = por %p109, %p110
      %p112 = scmp.le.s32.totalorder 1, %s10
      %p113 = scmp.lt.s32.totalorder %s10, 3
      %p114 = pnand %p112, %p113
      %p115 = pneg %p114
      // Predicated region
      $region9: #{spatial_attention.1} parent=5 // pred_check
        _
      $region10: #{spatial_attention.1} parent=5 // pred_check_branch
        %117 = sbr.rel (%p114) target = $region12
      $region11: #{spatial_attention.1} parent=5 // pred_region
        %s118 = ssub.s32 %s10, 1
        // Predicated region
        $region13: #{spatial_attention.1} parent=11 // pred_check
          %p119 = pneg %p31
        $region14: #{spatial_attention.1} parent=11 // pred_check_branch
          %121 = sbr.rel (%p119) target = $region16
        $region15: #{spatial_attention.1} parent=11 // pred_region
          %s123 = ssub.s32 16, 16
          %124 = vsyncadd [#allocation6], %s123
          %s126 = sshll.u32 %s0, 4
          %s127 = int_to_ptr.vmem [resolvable:$true] %s126
          %129 = dma.vmem_to_smem %s127, 16, [#allocation5], [#allocation6]
        $region16: #{spatial_attention.1} parent=11 // pred_fallthru
          _
        // Predicated region
        $region17: #{spatial_attention.1} parent=11 // pred_check
          %p130 = pneg %p52
        $region18: #{spatial_attention.1} parent=11 // pred_check_branch
          %132 = sbr.rel (%p130) target = $region20
        $region19: #{spatial_attention.1} parent=11 // pred_region
          _
        $region20: #{spatial_attention.1} parent=11 // pred_fallthru
          _
      $region12: #{spatial_attention.1} parent=5 // pred_fallthru
        _
      %p133 = scmp.lt.s32.totalorder %s10, 2
      // Predicated region
      $region21: #{spatial_attention.1} parent=5 // pred_check
        %p134 = pneg %p133
      $region22: #{spatial_attention.1} parent=5 // pred_check_branch
        %136 = sbr.rel (%p134) target = $region24
      $region23: #{spatial_attention.1} parent=5 // pred_region
        // Predicated region
        $region25: #{spatial_attention.1} parent=23 // pred_check
          %p137 = pneg %p72
        $region26: #{spatial_attention.1} parent=23 // pred_check_branch
          %139 = sbr.rel (%p137) target = $region28
        $region27: #{spatial_attention.1} parent=23 // pred_region
          %p140 = scmp.lt.s32.totalorder %s10, 1
          %s141 = scalar_select %p140, %s10, 1
          %s142 = smul.addr %s141, 2
          %s143 = smul.addr %s142, 4
          %s144 = scalar_lea.vmem %s2, %s143
        $region28: #{spatial_attention.1} parent=23 // pred_fallthru
          _
      $region24: #{spatial_attention.1} parent=5 // pred_fallthru
        _
      %p145 = scmp.le.s32.totalorder 1, %s10
      %p146 = scmp.lt.s32.totalorder %s10, 3
      %p147 = pnand %p145, %p146
      %p148 = pneg %p147
      // Predicated region
      $region29: #{spatial_attention.1} parent=5 // pred_check
        _
      $region30: #{spatial_attention.1} parent=5 // pred_check_branch
        %150 = sbr.rel (%p147) target = $region32
      $region31: #{spatial_attention.1} parent=5 // pred_region
        %s151 = ssub.s32 %s10, 1
        // Predicated region
        $region33: #{spatial_attention.1} parent=31 // pred_check
          %p152 = pneg %p31
        $region34: #{spatial_attention.1} parent=31 // pred_check_branch
          %154 = sbr.rel (%p152) target = $region36
        $region35: #{spatial_attention.1} parent=31 // pred_region
          %155 = dma.done [#allocation6], 16
        $region36: #{spatial_attention.1} parent=31 // pred_fallthru
          _
        %156 = sfence
        %p157 = pneg %p31
        %p158 = pneg %p28
        %p159 = pneg %p52
        %p160 = pneg %p49
        %p161 = scmp.lt.s32.totalorder %s15, 1
        %s162 = scalar_select %p161, %s15, 1
        %s163 = smul.addr %s162, 2
        %s164 = smul.addr %s163, 4
        %s165 = scalar_lea.vmem %s2, %s164
        %p166 = pneg %p78
        %p167 = pneg %p75
        %p168 = pneg %p104
        %p169 = pneg %p101
        %p170 = scmp.lt.s32.totalorder %s15, 1
        %s171 = scalar_select %p170, %s15, 1
        %s172 = smul.addr %s171, 2
        %s173 = smul.addr %s172, 4
        %s174 = scalar_lea.vmem %s3, %s173
        %p175 = scmp.lt.s32.totalorder %s15, 1
        %s176 = scalar_select %p175, %s15, 1
        %s177 = smul.addr %s176, 2
        %s178 = smul.addr %s177, 4
        %s179 = scalar_lea.vmem %s2, %s178
        %p180 = scmp.lt.s32.totalorder %s15, 1
        %s181 = scalar_select %p180, %s15, 1
        %s182 = smul.addr %s181, 2
        %s183 = smul.addr %s182, 4
        %s184 = scalar_lea.vmem %s3, %s183
        %v185 = vld [vmem:[%s179] sm:$0xff]
        %v187 = vcombine.high %v185, %v185
        %vm189 = vcmask 1043456
        %v190 = vsel %vm189, %v185, 0.0
        %v191 = vrot.slane %v190, 4
        %v192 = vadd.f32 %v190, %v191
        %v193 = vrot.slane %v192, 2
        %v194 = vadd.f32 %v192, %v193
        %v195 = vrot.slane %v194, 1
        %v196 = vadd.f32 %v194, %v195
        %v197 = vsel %vm189, %v187, 0.0
        %v198 = vrot.slane %v197, 4
        %v199 = vadd.f32 %v197, %v198
        %v200 = vrot.slane %v199, 2
        %v201 = vadd.f32 %v199, %v200
        %v202 = vrot.slane %v201, 1
        %v203 = vadd.f32 %v201, %v202
        %v204 = vadd.f32 %v196, 0.0
        %v205 = vadd.f32 %v203, 0.0
        %v206 = vsel %vm189, %v185, -inf
        %v207 = vrot.slane %v206, 4
        %v208 = vmax.f32 %v206, %v207
        %v209 = vrot.slane %v208, 2
        %v210 = vmax.f32 %v208, %v209
        %v211 = vrot.slane %v210, 1
        %v212 = vmax.f32 %v210, %v211
        %v213 = vsel %vm189, %v187, -inf
        %v214 = vrot.slane %v213, 4
        %v215 = vmax.f32 %v213, %v214
        %v216 = vrot.slane %v215, 2
        %v217 = vmax.f32 %v215, %v216
        %v218 = vrot.slane %v217, 1
        %v219 = vmax.f32 %v217, %v218
        %v220 = vmul.f32 %v204, 0.25
        %v221 = vmul.f32 %v205, 0.25
        %222 = vst [vmem:[#allocation2] sm:$0x3f] 0.0
        %v225 = vcombine.low %v220, %v221
        %v227 = vunpack.c.l.s4 1966171168
        %v228 = vunpack.c.0.s8 %v227
        %v229 = vlaneseq
        %v230 = vshrl.u32 %v229, 7
        %v231 = vsub.s32 %v228, %v230
        %v232 = vrot.slane %v225, %v231
        %v234 = vunpack.c.l.s4 1966171168
        %v235 = vunpack.c.0.s8 %v234
        %v236 = vlaneseq
        %v237 = vshrl.u32 %v236, 7
        %v238 = vsub.s32 %v235, %v237
        %v239 = vrot.slane %v232, %v238
        %240 = vrot.lane.b32.xlu0 %v239, 48
        %v241 = vpop.permute.xlu0 %240
        %v242 = vrot.slane %v241, 7
        %vm243 = vcmask 392192
        %v244 = vsel %vm243, %v242, %v241
        %v246 = vlaneseq
        %vm247 = vcmp.ge.s32.totalorder %v246, 48
        %vm248 = vcmp.lt.s32.totalorder %v246, 304
        %vm249 = vmand %vm247, %vm248
        %250 = vst.msk [vmem:[#allocation2] ss:$2 sm:$0x7] %vm249, %v244
        %v253 = vcombine.low %v212, %v219
        %v255 = vunpack.c.l.s4 1966171168
        %v256 = vunpack.c.0.s8 %v255
        %v257 = vlaneseq
        %v258 = vshrl.u32 %v257, 7
        %v259 = vsub.s32 %v256, %v258
        %v260 = vrot.slane %v253, %v259
        %v262 = vunpack.c.l.s4 1966171168
        %v263 = vunpack.c.0.s8 %v262
        %v264 = vlaneseq
        %v265 = vshrl.u32 %v264, 7
        %v266 = vsub.s32 %v263, %v265
        %v267 = vrot.slane %v260, %v266
        %268 = vrot.lane.b32.xlu0 %v267, 48
        %v269 = vpop.permute.xlu0 %268
        %v270 = vrot.slane %v269, 7
        %v271 = vsel %vm243, %v270, %v269
        %s273 = scalar_lea.vmem [#allocation2], 1
        %274 = vst.msk [vmem:[%s273] ss:$2 sm:$0x7] %vm249, %v271
        %v275 = vld [vmem:[#allocation2] ss:$2 sm:$0x7]
        %v276 = vld [vmem:[%s1] ss:$8 sm:$0x7]
        %v277 = vmul.f32 %v275, %v276
        %v279 = vlaneseq
        %v280 = vshrl.u32 %v279, 7
        %v281 = vsub.s32 0, %v280
        %v282 = vrot.slane %v277, %v281
        %v283 = vlaneseq
        %v284 = vshrl.u32 %v283, 7
        %v285 = vsub.s32 1, %v284
        %v286 = vrot.slane %v277, %v285
        %v287 = vlaneseq
        %v288 = vshrl.u32 %v287, 7
        %v289 = vsub.s32 2, %v288
        %v290 = vrot.slane %v277, %v289
        %294 = vrot.lane.b32.xlu0 %v282, 3
        %v295 = vpop.permute.xlu0 %294
        %296 = vrot.lane.b32.xlu0 %v286, 3
        %v297 = vpop.permute.xlu0 %296
        %298 = vrot.lane.b32.xlu0 %v290, 3
        %v299 = vpop.permute.xlu0 %298
        %v300 = vlaneseq
        %v301 = vand.u32 %v300, 127
        %vm302 = vcmp.lt.s32.totalorder %v301, 3
        %v303 = vsel %vm302, %v297, %v299
        %v304 = vsel %vm302, %v295, %v297
        %v305 = vsel %vm302, %v299, %v295
        %s306 = sld [smem:[#allocation5]]
        %v307 = vstv %s306
        %v308 = vmul.f32 %v307, %v305
        %v309 = vmul.f32 %v307, %v304
        %v310 = vmul.f32 %v307, %v303
        %v314 = vcombine.low %v308, %v309
        %v316 = vunpack.c.l.s4 1966171168
        %v317 = vunpack.c.0.s8 %v316
        %v318 = vlaneseq
        %v319 = vshrl.u32 %v318, 7
        %v320 = vsub.s32 %v317, %v319
        %v321 = vrot.slane %v314, %v320
        %v323 = vunpack.c.l.s4 1966171168
        %v324 = vunpack.c.0.s8 %v323
        %v325 = vlaneseq
        %v326 = vshrl.u32 %v325, 7
        %v327 = vsub.s32 %v324, %v326
        %v328 = vrot.slane %v310, %v327
        %v329 = vcombine.low %v321, %v328
        %v331 = vunpack.c.l.s4 1966171168
        %v332 = vunpack.c.0.s8 %v331
        %v333 = vlaneseq
        %v334 = vshrl.u32 %v333, 7
        %v335 = vsub.s32 %v332, %v334
        %v336 = vrot.slane %v329, %v335
        %vm338 = vcmp.ge.s32.totalorder %v246, 0
        %vm339 = vcmp.lt.s32.totalorder %v246, 384
        %vm340 = vmand %vm338, %vm339
        %341 = vst.msk [vmem:[#allocation3] sm:$0x7] %vm340, %v336
        %342 = vrot.lane.b32.xlu0 %v282, 115
        %v343 = vpop.permute.xlu0 %342
        %344 = vrot.lane.b32.xlu0 %v286, 115
        %v345 = vpop.permute.xlu0 %344
        %346 = vrot.lane.b32.xlu0 %v290, 115
        %v347 = vpop.permute.xlu0 %346
        %vm348 = vcmp.lt.s32.totalorder %v301, 115
        %v349 = vsel %vm348, %v345, %v347
        %v350 = vsel %vm348, %v343, %v345
        %v351 = vsel %vm348, %v347, %v343
        %s352 = sld [smem:[#allocation5 + $0x7]]
        %v353 = vstv %s352
        %v354 = vmul.f32 %v353, %v350
        %v355 = vmul.f32 %v353, %v349
        %v356 = vmul.f32 %v353, %v351
        %v357 = vld [vmem:[#allocation3] sm:$0x7]
        %v361 = vcombine.low %v354, %v355
        %v363 = vunpack.c.l.s4 1966171168
        %v364 = vunpack.c.0.s8 %v363
        %v365 = vlaneseq
        %v366 = vshrl.u32 %v365, 7
        %v367 = vsub.s32 %v364, %v366
        %v368 = vrot.slane %v361, %v367
        %v370 = vunpack.c.l.s4 1966171168
        %v371 = vunpack.c.0.s8 %v370
        %v372 = vlaneseq
        %v373 = vshrl.u32 %v372, 7
        %v374 = vsub.s32 %v371, %v373
        %v375 = vrot.slane %v356, %v374
        %v376 = vcombine.low %v368, %v375
        %v378 = vunpack.c.l.s4 1966171168
        %v379 = vunpack.c.0.s8 %v378
        %v380 = vlaneseq
        %v381 = vshrl.u32 %v380, 7
        %v382 = vsub.s32 %v379, %v381
        %v383 = vrot.slane %v376, %v382
        %v385 = vadd.f32 %v357, %v383
        %386 = vst.msk [vmem:[#allocation3] sm:$0x7] %vm340, %v385
        %387 = vrot.lane.b32.xlu0 %v282, 99
        %v388 = vpop.permute.xlu0 %387
        %389 = vrot.lane.b32.xlu0 %v286, 99
        %v390 = vpop.permute.xlu0 %389
        %391 = vrot.lane.b32.xlu0 %v290, 99
        %v392 = vpop.permute.xlu0 %391
        %vm393 = vcmp.lt.s32.totalorder %v301, 99
        %v394 = vsel %vm393, %v390, %v392
        %v395 = vsel %vm393, %v388, %v390
        %v396 = vsel %vm393, %v392, %v388
        %s397 = sld [smem:[#allocation5 + $0xe]]
        %v398 = vstv %s397
        %v399 = vmul.f32 %v398, %v395
        %v400 = vmul.f32 %v398, %v394
        %v401 = vmul.f32 %v398, %v396
        %v402 = vld [vmem:[#allocation3] sm:$0x7]
        %v406 = vcombine.low %v399, %v400
        %v408 = vunpack.c.l.s4 1966171168
        %v409 = vunpack.c.0.s8 %v408
        %v410 = vlaneseq
        %v411 = vshrl.u32 %v410, 7
        %v412 = vsub.s32 %v409, %v411
        %v413 = vrot.slane %v406, %v412
        %v415 = vunpack.c.l.s4 1966171168
        %v416 = vunpack.c.0.s8 %v415
        %v417 = vlaneseq
        %v418 = vshrl.u32 %v417, 7
        %v419 = vsub.s32 %v416, %v418
        %v420 = vrot.slane %v401, %v419
        %v421 = vcombine.low %v413, %v420
        %v423 = vunpack.c.l.s4 1966171168
        %v424 = vunpack.c.0.s8 %v423
        %v425 = vlaneseq
        %v426 = vshrl.u32 %v425, 7
        %v427 = vsub.s32 %v424, %v426
        %v428 = vrot.slane %v421, %v427
        %v430 = vadd.f32 %v402, %v428
        %431 = vst.msk [vmem:[#allocation3] sm:$0x7] %vm340, %v430
        %432 = vrot.lane.b32.xlu0 %v282, 83
        %v433 = vpop.permute.xlu0 %432
        %434 = vrot.lane.b32.xlu0 %v286, 83
        %v435 = vpop.permute.xlu0 %434
        %436 = vrot.lane.b32.xlu0 %v290, 83
        %v437 = vpop.permute.xlu0 %436
        %vm438 = vcmp.lt.s32.totalorder %v301, 83
        %v439 = vsel %vm438, %v435, %v437
        %v440 = vsel %vm438, %v433, %v435
        %v441 = vsel %vm438, %v437, %v433
        %s442 = sld [smem:[#allocation5 + $0x15]]
        %v443 = vstv %s442
        %v444 = vmul.f32 %v443, %v440
        %v445 = vmul.f32 %v443, %v439
        %v446 = vmul.f32 %v443, %v441
        %v447 = vld [vmem:[#allocation3] sm:$0x7]
        %v451 = vcombine.low %v444, %v445
        %v453 = vunpack.c.l.s4 1966171168
        %v454 = vunpack.c.0.s8 %v453
        %v455 = vlaneseq
        %v456 = vshrl.u32 %v455, 7
        %v457 = vsub.s32 %v454, %v456
        %v458 = vrot.slane %v451, %v457
        %v460 = vunpack.c.l.s4 1966171168
        %v461 = vunpack.c.0.s8 %v460
        %v462 = vlaneseq
        %v463 = vshrl.u32 %v462, 7
        %v464 = vsub.s32 %v461, %v463
        %v465 = vrot.slane %v446, %v464
        %v466 = vcombine.low %v458, %v465
        %v468 = vunpack.c.l.s4 1966171168
        %v469 = vunpack.c.0.s8 %v468
        %v470 = vlaneseq
        %v471 = vshrl.u32 %v470, 7
        %v472 = vsub.s32 %v469, %v471
        %v473 = vrot.slane %v466, %v472
        %v475 = vadd.f32 %v447, %v473
        %476 = vst.msk [vmem:[#allocation3] sm:$0x7] %vm340, %v475
        %477 = vrot.lane.b32.xlu0 %v282, 67
        %v478 = vpop.permute.xlu0 %477
        %479 = vrot.lane.b32.xlu0 %v286, 67
        %v480 = vpop.permute.xlu0 %479
        %481 = vrot.lane.b32.xlu0 %v290, 67
        %v482 = vpop.permute.xlu0 %481
        %vm483 = vcmp.lt.s32.totalorder %v301, 67
        %v484 = vsel %vm483, %v480, %v482
        %v485 = vsel %vm483, %v478, %v480
        %v486 = vsel %vm483, %v482, %v478
        %s487 = sld [smem:[#allocation5 + $0x1c]]
        %v488 = vstv %s487
        %v489 = vmul.f32 %v488, %v485
        %v490 = vmul.f32 %v488, %v484
        %v491 = vmul.f32 %v488, %v486
        %v492 = vld [vmem:[#allocation3] sm:$0x7]
        %v496 = vcombine.low %v489, %v490
        %v498 = vunpack.c.l.s4 1966171168
        %v499 = vunpack.c.0.s8 %v498
        %v500 = vlaneseq
        %v501 = vshrl.u32 %v500, 7
        %v502 = vsub.s32 %v499, %v501
        %v503 = vrot.slane %v496, %v502
        %v505 = vunpack.c.l.s4 1966171168
        %v506 = vunpack.c.0.s8 %v505
        %v507 = vlaneseq
        %v508 = vshrl.u32 %v507, 7
        %v509 = vsub.s32 %v506, %v508
        %v510 = vrot.slane %v491, %v509
        %v511 = vcombine.low %v503, %v510
        %v513 = vunpack.c.l.s4 1966171168
        %v514 = vunpack.c.0.s8 %v513
        %v515 = vlaneseq
        %v516 = vshrl.u32 %v515, 7
        %v517 = vsub.s32 %v514, %v516
        %v518 = vrot.slane %v511, %v517
        %v520 = vadd.f32 %v492, %v518
        %521 = vst.msk [vmem:[#allocation3] sm:$0x7] %vm340, %v520
        %522 = vrot.lane.b32.xlu0 %v282, 51
        %v523 = vpop.permute.xlu0 %522
        %524 = vrot.lane.b32.xlu0 %v286, 51
        %v525 = vpop.permute.xlu0 %524
        %526 = vrot.lane.b32.xlu0 %v290, 51
        %v527 = vpop.permute.xlu0 %526
        %vm528 = vcmp.lt.s32.totalorder %v301, 51
        %v529 = vsel %vm528, %v525, %v527
        %v530 = vsel %vm528, %v523, %v525
        %v531 = vsel %vm528, %v527, %v523
        %s532 = sld [smem:[#allocation5 + $0x23]]
        %v533 = vstv %s532
        %v534 = vmul.f32 %v533, %v530
        %v535 = vmul.f32 %v533, %v529
        %v536 = vmul.f32 %v533, %v531
        %v537 = vld [vmem:[#allocation3] sm:$0x7]
        %v541 = vcombine.low %v534, %v535
        %v543 = vunpack.c.l.s4 1966171168
        %v544 = vunpack.c.0.s8 %v543
        %v545 = vlaneseq
        %v546 = vshrl.u32 %v545, 7
        %v547 = vsub.s32 %v544, %v546
        %v548 = vrot.slane %v541, %v547
        %v550 = vunpack.c.l.s4 1966171168
        %v551 = vunpack.c.0.s8 %v550
        %v552 = vlaneseq
        %v553 = vshrl.u32 %v552, 7
        %v554 = vsub.s32 %v551, %v553
        %v555 = vrot.slane %v536, %v554
        %v556 = vcombine.low %v548, %v555
        %v558 = vunpack.c.l.s4 1966171168
        %v559 = vunpack.c.0.s8 %v558
        %v560 = vlaneseq
        %v561 = vshrl.u32 %v560, 7
        %v562 = vsub.s32 %v559, %v561
        %v563 = vrot.slane %v556, %v562
        %v565 = vadd.f32 %v537, %v563
        %566 = vst.msk [vmem:[#allocation3] sm:$0x7] %vm340, %v565
        %567 = vrot.lane.b32.xlu0 %v282, 35
        %v568 = vpop.permute.xlu0 %567
        %569 = vrot.lane.b32.xlu0 %v286, 35
        %v570 = vpop.permute.xlu0 %569
        %571 = vrot.lane.b32.xlu0 %v290, 35
        %v572 = vpop.permute.xlu0 %571
        %vm573 = vcmp.lt.s32.totalorder %v301, 35
        %v574 = vsel %vm573, %v570, %v572
        %v575 = vsel %vm573, %v568, %v570
        %v576 = vsel %vm573, %v572, %v568
        %s577 = sld [smem:[#allocation5 + $0x2a]]
        %v578 = vstv %s577
        %v579 = vmul.f32 %v578, %v575
        %v580 = vmul.f32 %v578, %v574
        %v581 = vmul.f32 %v578, %v576
        %v582 = vld [vmem:[#allocation3] sm:$0x7]
        %v586 = vcombine.low %v579, %v580
        %v588 = vunpack.c.l.s4 1966171168
        %v589 = vunpack.c.0.s8 %v588
        %v590 = vlaneseq
        %v591 = vshrl.u32 %v590, 7
        %v592 = vsub.s32 %v589, %v591
        %v593 = vrot.slane %v586, %v592
        %v595 = vunpack.c.l.s4 1966171168
        %v596 = vunpack.c.0.s8 %v595
        %v597 = vlaneseq
        %v598 = vshrl.u32 %v597, 7
        %v599 = vsub.s32 %v596, %v598
        %v600 = vrot.slane %v581, %v599
        %v601 = vcombine.low %v593, %v600
        %v603 = vunpack.c.l.s4 1966171168
        %v604 = vunpack.c.0.s8 %v603
        %v605 = vlaneseq
        %v606 = vshrl.u32 %v605, 7
        %v607 = vsub.s32 %v604, %v606
        %v608 = vrot.slane %v601, %v607
        %v610 = vadd.f32 %v582, %v608
        %611 = vst.msk [vmem:[#allocation3] sm:$0x7] %vm340, %v610
        %s612 = scalar_lea.vmem %s1, 1
        %v613 = vld [vmem:[%s612] ss:$8 sm:$0x7]
        %v614 = vmul.f32 %v275, %v613
        %v616 = vlaneseq
        %v617 = vshrl.u32 %v616, 7
        %v618 = vsub.s32 0, %v617
        %v619 = vrot.slane %v614, %v618
        %v620 = vlaneseq
        %v621 = vshrl.u32 %v620, 7
        %v622 = vsub.s32 1, %v621
        %v623 = vrot.slane %v614, %v622
        %v624 = vlaneseq
        %v625 = vshrl.u32 %v624, 7
        %v626 = vsub.s32 2, %v625
        %v627 = vrot.slane %v614, %v626
        %631 = vrot.lane.b32.xlu0 %v619, 2
        %v632 = vpop.permute.xlu0 %631
        %633 = vrot.lane.b32.xlu0 %v623, 2
        %v634 = vpop.permute.xlu0 %633
        %635 = vrot.lane.b32.xlu0 %v627, 2
        %v636 = vpop.permute.xlu0 %635
        %vm637 = vcmp.lt.s32.totalorder %v301, 2
        %v638 = vsel %vm637, %v634, %v636
        %v639 = vsel %vm637, %v632, %v634
        %v640 = vsel %vm637, %v636, %v632
        %s641 = sld [smem:[#allocation5 + $0x1]]
        %v642 = vstv %s641
        %v643 = vmul.f32 %v642, %v640
        %v644 = vmul.f32 %v642, %v639
        %v645 = vmul.f32 %v642, %v638
        %v646 = vld [vmem:[#allocation3] sm:$0x7]
        %v650 = vcombine.low %v643, %v644
        %v652 = vunpack.c.l.s4 1966171168
        %v653 = vunpack.c.0.s8 %v652
        %v654 = vlaneseq
        %v655 = vshrl.u32 %v654, 7
        %v656 = vsub.s32 %v653, %v655
        %v657 = vrot.slane %v650, %v656
        %v659 = vunpack.c.l.s4 1966171168
        %v660 = vunpack.c.0.s8 %v659
        %v661 = vlaneseq
        %v662 = vshrl.u32 %v661, 7
        %v663 = vsub.s32 %v660, %v662
        %v664 = vrot.slane %v645, %v663
        %v665 = vcombine.low %v657, %v664
        %v667 = vunpack.c.l.s4 1966171168
        %v668 = vunpack.c.0.s8 %v667
        %v669 = vlaneseq
        %v670 = vshrl.u32 %v669, 7
        %v671 = vsub.s32 %v668, %v670
        %v672 = vrot.slane %v665, %v671
        %v674 = vadd.f32 %v646, %v672
        %675 = vst.msk [vmem:[#allocation3] sm:$0x7] %vm340, %v674
        %676 = vrot.lane.b32.xlu0 %v619, 114
        %v677 = vpop.permute.xlu0 %676
        %678 = vrot.lane.b32.xlu0 %v623, 114
        %v679 = vpop.permute.xlu0 %678
        %680 = vrot.lane.b32.xlu0 %v627, 114
        %v681 = vpop.permute.xlu0 %680
        %vm682 = vcmp.lt.s32.totalorder %v301, 114
        %v683 = vsel %vm682, %v679, %v681
        %v684 = vsel %vm682, %v677, %v679
        %v685 = vsel %vm682, %v681, %v677
        %s686 = sld [smem:[#allocation5 + $0x8]]
        %v687 = vstv %s686
        %v688 = vmul.f32 %v687, %v684
        %v689 = vmul.f32 %v687, %v683
        %v690 = vmul.f32 %v687, %v685
        %v691 = vld [vmem:[#allocation3] sm:$0x7]
        %v695 = vcombine.low %v688, %v689
        %v697 = vunpack.c.l.s4 1966171168
        %v698 = vunpack.c.0.s8 %v697
        %v699 = vlaneseq
        %v700 = vshrl.u32 %v699, 7
        %v701 = vsub.s32 %v698, %v700
        %v702 = vrot.slane %v695, %v701
        %v704 = vunpack.c.l.s4 1966171168
        %v705 = vunpack.c.0.s8 %v704
        %v706 = vlaneseq
        %v707 = vshrl.u32 %v706, 7
        %v708 = vsub.s32 %v705, %v707
        %v709 = vrot.slane %v690, %v708
        %v710 = vcombine.low %v702, %v709
        %v712 = vunpack.c.l.s4 1966171168
        %v713 = vunpack.c.0.s8 %v712
        %v714 = vlaneseq
        %v715 = vshrl.u32 %v714, 7
        %v716 = vsub.s32 %v713, %v715
        %v717 = vrot.slane %v710, %v716
        %v719 = vadd.f32 %v691, %v717
        %720 = vst.msk [vmem:[#allocation3] sm:$0x7] %vm340, %v719
        %721 = vrot.lane.b32.xlu0 %v619, 98
        %v722 = vpop.permute.xlu0 %721
        %723 = vrot.lane.b32.xlu0 %v623, 98
        %v724 = vpop.permute.xlu0 %723
        %725 = vrot.lane.b32.xlu0 %v627, 98
        %v726 = vpop.permute.xlu0 %725
        %vm727 = vcmp.lt.s32.totalorder %v301, 98
        %v728 = vsel %vm727, %v724, %v726
        %v729 = vsel %vm727, %v722, %v724
        %v730 = vsel %vm727, %v726, %v722
        %s731 = sld [smem:[#allocation5 + $0xf]]
        %v732 = vstv %s731
        %v733 = vmul.f32 %v732, %v729
        %v734 = vmul.f32 %v732, %v728
        %v735 = vmul.f32 %v732, %v730
        %v736 = vld [vmem:[#allocation3] sm:$0x7]
        %v740 = vcombine.low %v733, %v734
        %v742 = vunpack.c.l.s4 1966171168
        %v743 = vunpack.c.0.s8 %v742
        %v744 = vlaneseq
        %v745 = vshrl.u32 %v744, 7
        %v746 = vsub.s32 %v743, %v745
        %v747 = vrot.slane %v740, %v746
        %v749 = vunpack.c.l.s4 1966171168
        %v750 = vunpack.c.0.s8 %v749
        %v751 = vlaneseq
        %v752 = vshrl.u32 %v751, 7
        %v753 = vsub.s32 %v750, %v752
        %v754 = vrot.slane %v735, %v753
        %v755 = vcombine.low %v747, %v754
        %v757 = vunpack.c.l.s4 1966171168
        %v758 = vunpack.c.0.s8 %v757
        %v759 = vlaneseq
        %v760 = vshrl.u32 %v759, 7
        %v761 = vsub.s32 %v758, %v760
        %v762 = vrot.slane %v755, %v761
        %v764 = vadd.f32 %v736, %v762
        %765 = vst.msk [vmem:[#allocation3] sm:$0x7] %vm340, %v764
        %766 = vrot.lane.b32.xlu0 %v619, 82
        %v767 = vpop.permute.xlu0 %766
        %768 = vrot.lane.b32.xlu0 %v623, 82
        %v769 = vpop.permute.xlu0 %768
        %770 = vrot.lane.b32.xlu0 %v627, 82
        %v771 = vpop.permute.xlu0 %770
        %vm772 = vcmp.lt.s32.totalorder %v301, 82
        %v773 = vsel %vm772, %v769, %v771
        %v774 = vsel %vm772, %v767, %v769
        %v775 = vsel %vm772, %v771, %v767
        %s776 = sld [smem:[#allocation5 + $0x16]]
        %v777 = vstv %s776
        %v778 = vmul.f32 %v777, %v774
        %v779 = vmul.f32 %v777, %v773
        %v780 = vmul.f32 %v777, %v775
        %v781 = vld [vmem:[#allocation3] sm:$0x7]
        %v785 = vcombine.low %v778, %v779
        %v787 = vunpack.c.l.s4 1966171168
        %v788 = vunpack.c.0.s8 %v787
        %v789 = vlaneseq
        %v790 = vshrl.u32 %v789, 7
        %v791 = vsub.s32 %v788, %v790
        %v792 = vrot.slane %v785, %v791
        %v794 = vunpack.c.l.s4 1966171168
        %v795 = vunpack.c.0.s8 %v794
        %v796 = vlaneseq
        %v797 = vshrl.u32 %v796, 7
        %v798 = vsub.s32 %v795, %v797
        %v799 = vrot.slane %v780, %v798
        %v800 = vcombine.low %v792, %v799
        %v802 = vunpack.c.l.s4 1966171168
        %v803 = vunpack.c.0.s8 %v802
        %v804 = vlaneseq
        %v805 = vshrl.u32 %v804, 7
        %v806 = vsub.s32 %v803, %v805
        %v807 = vrot.slane %v800, %v806
        %v809 = vadd.f32 %v781, %v807
        %810 = vst.msk [vmem:[#allocation3] sm:$0x7] %vm340, %v809
        %811 = vrot.lane.b32.xlu0 %v619, 66
        %v812 = vpop.permute.xlu0 %811
        %813 = vrot.lane.b32.xlu0 %v623, 66
        %v814 = vpop.permute.xlu0 %813
        %815 = vrot.lane.b32.xlu0 %v627, 66
        %v816 = vpop.permute.xlu0 %815
        %vm817 = vcmp.lt.s32.totalorder %v301, 66
        %v818 = vsel %vm817, %v814, %v816
        %v819 = vsel %vm817, %v812, %v814
        %v820 = vsel %vm817, %v816, %v812
        %s821 = sld [smem:[#allocation5 + $0x1d]]
        %v822 = vstv %s821
        %v823 = vmul.f32 %v822, %v819
        %v824 = vmul.f32 %v822, %v818
        %v825 = vmul.f32 %v822, %v820
        %v826 = vld [vmem:[#allocation3] sm:$0x7]
        %v830 = vcombine.low %v823, %v824
        %v832 = vunpack.c.l.s4 1966171168
        %v833 = vunpack.c.0.s8 %v832
        %v834 = vlaneseq
        %v835 = vshrl.u32 %v834, 7
        %v836 = vsub.s32 %v833, %v835
        %v837 = vrot.slane %v830, %v836
        %v839 = vunpack.c.l.s4 1966171168
        %v840 = vunpack.c.0.s8 %v839
        %v841 = vlaneseq
        %v842 = vshrl.u32 %v841, 7
        %v843 = vsub.s32 %v840, %v842
        %v844 = vrot.slane %v825, %v843
        %v845 = vcombine.low %v837, %v844
        %v847 = vunpack.c.l.s4 1966171168
        %v848 = vunpack.c.0.s8 %v847
        %v849 = vlaneseq
        %v850 = vshrl.u32 %v849, 7
        %v851 = vsub.s32 %v848, %v850
        %v852 = vrot.slane %v845, %v851
        %v854 = vadd.f32 %v826, %v852
        %855 = vst.msk [vmem:[#allocation3] sm:$0x7] %vm340, %v854
        %856 = vrot.lane.b32.xlu0 %v619, 50
        %v857 = vpop.permute.xlu0 %856
        %858 = vrot.lane.b32.xlu0 %v623, 50
        %v859 = vpop.permute.xlu0 %858
        %860 = vrot.lane.b32.xlu0 %v627, 50
        %v861 = vpop.permute.xlu0 %860
        %vm862 = vcmp.lt.s32.totalorder %v301, 50
        %v863 = vsel %vm862, %v859, %v861
        %v864 = vsel %vm862, %v857, %v859
        %v865 = vsel %vm862, %v861, %v857
        %s866 = sld [smem:[#allocation5 + $0x24]]
        %v867 = vstv %s866
        %v868 = vmul.f32 %v867, %v864
        %v869 = vmul.f32 %v867, %v863
        %v870 = vmul.f32 %v867, %v865
        %v871 = vld [vmem:[#allocation3] sm:$0x7]
        %v875 = vcombine.low %v868, %v869
        %v877 = vunpack.c.l.s4 1966171168
        %v878 = vunpack.c.0.s8 %v877
        %v879 = vlaneseq
        %v880 = vshrl.u32 %v879, 7
        %v881 = vsub.s32 %v878, %v880
        %v882 = vrot.slane %v875, %v881
        %v884 = vunpack.c.l.s4 1966171168
        %v885 = vunpack.c.0.s8 %v884
        %v886 = vlaneseq
        %v887 = vshrl.u32 %v886, 7
        %v888 = vsub.s32 %v885, %v887
        %v889 = vrot.slane %v870, %v888
        %v890 = vcombine.low %v882, %v889
        %v892 = vunpack.c.l.s4 1966171168
        %v893 = vunpack.c.0.s8 %v892
        %v894 = vlaneseq
        %v895 = vshrl.u32 %v894, 7
        %v896 = vsub.s32 %v893, %v895
        %v897 = vrot.slane %v890, %v896
        %v899 = vadd.f32 %v871, %v897
        %900 = vst.msk [vmem:[#allocation3] sm:$0x7] %vm340, %v899
        %901 = vrot.lane.b32.xlu0 %v619, 34
        %v902 = vpop.permute.xlu0 %901
        %903 = vrot.lane.b32.xlu0 %v623, 34
        %v904 = vpop.permute.xlu0 %903
        %905 = vrot.lane.b32.xlu0 %v627, 34
        %v906 = vpop.permute.xlu0 %905
        %vm907 = vcmp.lt.s32.totalorder %v301, 34
        %v908 = vsel %vm907, %v904, %v906
        %v909 = vsel %vm907, %v902, %v904
        %v910 = vsel %vm907, %v906, %v902
        %s911 = sld [smem:[#allocation5 + $0x2b]]
        %v912 = vstv %s911
        %v913 = vmul.f32 %v912, %v909
        %v914 = vmul.f32 %v912, %v908
        %v915 = vmul.f32 %v912, %v910
        %v916 = vld [vmem:[#allocation3] sm:$0x7]
        %v920 = vcombine.low %v913, %v914
        %v922 = vunpack.c.l.s4 1966171168
        %v923 = vunpack.c.0.s8 %v922
        %v924 = vlaneseq
        %v925 = vshrl.u32 %v924, 7
        %v926 = vsub.s32 %v923, %v925
        %v927 = vrot.slane %v920, %v926
        %v929 = vunpack.c.l.s4 1966171168
        %v930 = vunpack.c.0.s8 %v929
        %v931 = vlaneseq
        %v932 = vshrl.u32 %v931, 7
        %v933 = vsub.s32 %v930, %v932
        %v934 = vrot.slane %v915, %v933
        %v935 = vcombine.low %v927, %v934
        %v937 = vunpack.c.l.s4 1966171168
        %v938 = vunpack.c.0.s8 %v937
        %v939 = vlaneseq
        %v940 = vshrl.u32 %v939, 7
        %v941 = vsub.s32 %v938, %v940
        %v942 = vrot.slane %v935, %v941
        %v944 = vadd.f32 %v916, %v942
        %945 = vst.msk [vmem:[#allocation3] sm:$0x7] %vm340, %v944
        %s946 = scalar_lea.vmem %s1, 2
        %v947 = vld [vmem:[%s946] ss:$8 sm:$0x7]
        %v948 = vmul.f32 %v275, %v947
        %v950 = vlaneseq
        %v951 = vshrl.u32 %v950, 7
        %v952 = vsub.s32 0, %v951
        %v953 = vrot.slane %v948, %v952
        %v954 = vlaneseq
        %v955 = vshrl.u32 %v954, 7
        %v956 = vsub.s32 1, %v955
        %v957 = vrot.slane %v948, %v956
        %v958 = vlaneseq
        %v959 = vshrl.u32 %v958, 7
        %v960 = vsub.s32 2, %v959
        %v961 = vrot.slane %v948, %v960
        %965 = vrot.lane.b32.xlu0 %v953, 1
        %v966 = vpop.permute.xlu0 %965
        %967 = vrot.lane.b32.xlu0 %v957, 1
        %v968 = vpop.permute.xlu0 %967
        %969 = vrot.lane.b32.xlu0 %v961, 1
        %v970 = vpop.permute.xlu0 %969
        %vm971 = vcmp.lt.s32.totalorder %v301, 1
        %v972 = vsel %vm971, %v968, %v970
        %v973 = vsel %vm971, %v966, %v968
        %v974 = vsel %vm971, %v970, %v966
        %s975 = sld [smem:[#allocation5 + $0x2]]
        %v976 = vstv %s975
        %v977 = vmul.f32 %v976, %v974
        %v978 = vmul.f32 %v976, %v973
        %v979 = vmul.f32 %v976, %v972
        %v980 = vld [vmem:[#allocation3] sm:$0x7]
        %v984 = vcombine.low %v977, %v978
        %v986 = vunpack.c.l.s4 1966171168
        %v987 = vunpack.c.0.s8 %v986
        %v988 = vlaneseq
        %v989 = vshrl.u32 %v988, 7
        %v990 = vsub.s32 %v987, %v989
        %v991 = vrot.slane %v984, %v990
        %v993 = vunpack.c.l.s4 1966171168
        %v994 = vunpack.c.0.s8 %v993
        %v995 = vlaneseq
        %v996 = vshrl.u32 %v995, 7
        %v997 = vsub.s32 %v994, %v996
        %v998 = vrot.slane %v979, %v997
        %v999 = vcombine.low %v991, %v998
        %v1001 = vunpack.c.l.s4 1966171168
        %v1002 = vunpack.c.0.s8 %v1001
        %v1003 = vlaneseq
        %v1004 = vshrl.u32 %v1003, 7
        %v1005 = vsub.s32 %v1002, %v1004
        %v1006 = vrot.slane %v999, %v1005
        %v1008 = vadd.f32 %v980, %v1006
        %1009 = vst.msk [vmem:[#allocation3] sm:$0x7] %vm340, %v1008
        %1010 = vrot.lane.b32.xlu0 %v953, 113
        %v1011 = vpop.permute.xlu0 %1010
        %1012 = vrot.lane.b32.xlu0 %v957, 113
        %v1013 = vpop.permute.xlu0 %1012
        %1014 = vrot.lane.b32.xlu0 %v961, 113
        %v1015 = vpop.permute.xlu0 %1014
        %vm1016 = vcmp.lt.s32.totalorder %v301, 113
        %v1017 = vsel %vm1016, %v1013, %v1015
        %v1018 = vsel %vm1016, %v1011, %v1013
        %v1019 = vsel %vm1016, %v1015, %v1011
        %s1020 = sld [smem:[#allocation5 + $0x9]]
        %v1021 = vstv %s1020
        %v1022 = vmul.f32 %v1021, %v1018
        %v1023 = vmul.f32 %v1021, %v1017
        %v1024 = vmul.f32 %v1021, %v1019
        %v1025 = vld [vmem:[#allocation3] sm:$0x7]
        %v1029 = vcombine.low %v1022, %v1023
        %v1031 = vunpack.c.l.s4 1966171168
        %v1032 = vunpack.c.0.s8 %v1031
        %v1033 = vlaneseq
        %v1034 = vshrl.u32 %v1033, 7
        %v1035 = vsub.s32 %v1032, %v1034
        %v1036 = vrot.slane %v1029, %v1035
        %v1038 = vunpack.c.l.s4 1966171168
        %v1039 = vunpack.c.0.s8 %v1038
        %v1040 = vlaneseq
        %v1041 = vshrl.u32 %v1040, 7
        %v1042 = vsub.s32 %v1039, %v1041
        %v1043 = vrot.slane %v1024, %v1042
        %v1044 = vcombine.low %v1036, %v1043
        %v1046 = vunpack.c.l.s4 1966171168
        %v1047 = vunpack.c.0.s8 %v1046
        %v1048 = vlaneseq
        %v1049 = vshrl.u32 %v1048, 7
        %v1050 = vsub.s32 %v1047, %v1049
        %v1051 = vrot.slane %v1044, %v1050
        %v1053 = vadd.f32 %v1025, %v1051
        %1054 = vst.msk [vmem:[#allocation3] sm:$0x7] %vm340, %v1053
        %1055 = vrot.lane.b32.xlu0 %v953, 97
        %v1056 = vpop.permute.xlu0 %1055
        %1057 = vrot.lane.b32.xlu0 %v957, 97
        %v1058 = vpop.permute.xlu0 %1057
        %1059 = vrot.lane.b32.xlu0 %v961, 97
        %v1060 = vpop.permute.xlu0 %1059
        %vm1061 = vcmp.lt.s32.totalorder %v301, 97
        %v1062 = vsel %vm1061, %v1058, %v1060
        %v1063 = vsel %vm1061, %v1056, %v1058
        %v1064 = vsel %vm1061, %v1060, %v1056
        %s1065 = sld [smem:[#allocation5 + $0x10]]
        %v1066 = vstv %s1065
        %v1067 = vmul.f32 %v1066, %v1063
        %v1068 = vmul.f32 %v1066, %v1062
        %v1069 = vmul.f32 %v1066, %v1064
        %v1070 = vld [vmem:[#allocation3] sm:$0x7]
        %v1074 = vcombine.low %v1067, %v1068
        %v1076 = vunpack.c.l.s4 1966171168
        %v1077 = vunpack.c.0.s8 %v1076
        %v1078 = vlaneseq
        %v1079 = vshrl.u32 %v1078, 7
        %v1080 = vsub.s32 %v1077, %v1079
        %v1081 = vrot.slane %v1074, %v1080
        %v1083 = vunpack.c.l.s4 1966171168
        %v1084 = vunpack.c.0.s8 %v1083
        %v1085 = vlaneseq
        %v1086 = vshrl.u32 %v1085, 7
        %v1087 = vsub.s32 %v1084, %v1086
        %v1088 = vrot.slane %v1069, %v1087
        %v1089 = vcombine.low %v1081, %v1088
        %v1091 = vunpack.c.l.s4 1966171168
        %v1092 = vunpack.c.0.s8 %v1091
        %v1093 = vlaneseq
        %v1094 = vshrl.u32 %v1093, 7
        %v1095 = vsub.s32 %v1092, %v1094
        %v1096 = vrot.slane %v1089, %v1095
        %v1098 = vadd.f32 %v1070, %v1096
        %1099 = vst.msk [vmem:[#allocation3] sm:$0x7] %vm340, %v1098
        %1100 = vrot.lane.b32.xlu0 %v953, 81
        %v1101 = vpop.permute.xlu0 %1100
        %1102 = vrot.lane.b32.xlu0 %v957, 81
        %v1103 = vpop.permute.xlu0 %1102
        %1104 = vrot.lane.b32.xlu0 %v961, 81
        %v1105 = vpop.permute.xlu0 %1104
        %vm1106 = vcmp.lt.s32.totalorder %v301, 81
        %v1107 = vsel %vm1106, %v1103, %v1105
        %v1108 = vsel %vm1106, %v1101, %v1103
        %v1109 = vsel %vm1106, %v1105, %v1101
        %s1110 = sld [smem:[#allocation5 + $0x17]]
        %v1111 = vstv %s1110
        %v1112 = vmul.f32 %v1111, %v1108
        %v1113 = vmul.f32 %v1111, %v1107
        %v1114 = vmul.f32 %v1111, %v1109
        %v1115 = vld [vmem:[#allocation3] sm:$0x7]
        %v1119 = vcombine.low %v1112, %v1113
        %v1121 = vunpack.c.l.s4 1966171168
        %v1122 = vunpack.c.0.s8 %v1121
        %v1123 = vlaneseq
        %v1124 = vshrl.u32 %v1123, 7
        %v1125 = vsub.s32 %v1122, %v1124
        %v1126 = vrot.slane %v1119, %v1125
        %v1128 = vunpack.c.l.s4 1966171168
        %v1129 = vunpack.c.0.s8 %v1128
        %v1130 = vlaneseq
        %v1131 = vshrl.u32 %v1130, 7
        %v1132 = vsub.s32 %v1129, %v1131
        %v1133 = vrot.slane %v1114, %v1132
        %v1134 = vcombine.low %v1126, %v1133
        %v1136 = vunpack.c.l.s4 1966171168
        %v1137 = vunpack.c.0.s8 %v1136
        %v1138 = vlaneseq
        %v1139 = vshrl.u32 %v1138, 7
        %v1140 = vsub.s32 %v1137, %v1139
        %v1141 = vrot.slane %v1134, %v1140
        %v1143 = vadd.f32 %v1115, %v1141
        %1144 = vst.msk [vmem:[#allocation3] sm:$0x7] %vm340, %v1143
        %1145 = vrot.lane.b32.xlu0 %v953, 65
        %v1146 = vpop.permute.xlu0 %1145
        %1147 = vrot.lane.b32.xlu0 %v957, 65
        %v1148 = vpop.permute.xlu0 %1147
        %1149 = vrot.lane.b32.xlu0 %v961, 65
        %v1150 = vpop.permute.xlu0 %1149
        %vm1151 = vcmp.lt.s32.totalorder %v301, 65
        %v1152 = vsel %vm1151, %v1148, %v1150
        %v1153 = vsel %vm1151, %v1146, %v1148
        %v1154 = vsel %vm1151, %v1150, %v1146
        %s1155 = sld [smem:[#allocation5 + $0x1e]]
        %v1156 = vstv %s1155
        %v1157 = vmul.f32 %v1156, %v1153
        %v1158 = vmul.f32 %v1156, %v1152
        %v1159 = vmul.f32 %v1156, %v1154
        %v1160 = vld [vmem:[#allocation3] sm:$0x7]
        %v1164 = vcombine.low %v1157, %v1158
        %v1166 = vunpack.c.l.s4 1966171168
        %v1167 = vunpack.c.0.s8 %v1166
        %v1168 = vlaneseq
        %v1169 = vshrl.u32 %v1168, 7
        %v1170 = vsub.s32 %v1167, %v1169
        %v1171 = vrot.slane %v1164, %v1170
        %v1173 = vunpack.c.l.s4 1966171168
        %v1174 = vunpack.c.0.s8 %v1173
        %v1175 = vlaneseq
        %v1176 = vshrl.u32 %v1175, 7
        %v1177 = vsub.s32 %v1174, %v1176
        %v1178 = vrot.slane %v1159, %v1177
        %v1179 = vcombine.low %v1171, %v1178
        %v1181 = vunpack.c.l.s4 1966171168
        %v1182 = vunpack.c.0.s8 %v1181
        %v1183 = vlaneseq
        %v1184 = vshrl.u32 %v1183, 7
        %v1185 = vsub.s32 %v1182, %v1184
        %v1186 = vrot.slane %v1179, %v1185
        %v1188 = vadd.f32 %v1160, %v1186
        %1189 = vst.msk [vmem:[#allocation3] sm:$0x7] %vm340, %v1188
        %1190 = vrot.lane.b32.xlu0 %v953, 49
        %v1191 = vpop.permute.xlu0 %1190
        %1192 = vrot.lane.b32.xlu0 %v957, 49
        %v1193 = vpop.permute.xlu0 %1192
        %1194 = vrot.lane.b32.xlu0 %v961, 49
        %v1195 = vpop.permute.xlu0 %1194
        %vm1196 = vcmp.lt.s32.totalorder %v301, 49
        %v1197 = vsel %vm1196, %v1193, %v1195
        %v1198 = vsel %vm1196, %v1191, %v1193
        %v1199 = vsel %vm1196, %v1195, %v1191
        %s1200 = sld [smem:[#allocation5 + $0x25]]
        %v1201 = vstv %s1200
        %v1202 = vmul.f32 %v1201, %v1198
        %v1203 = vmul.f32 %v1201, %v1197
        %v1204 = vmul.f32 %v1201, %v1199
        %v1205 = vld [vmem:[#allocation3] sm:$0x7]
        %v1209 = vcombine.low %v1202, %v1203
        %v1211 = vunpack.c.l.s4 1966171168
        %v1212 = vunpack.c.0.s8 %v1211
        %v1213 = vlaneseq
        %v1214 = vshrl.u32 %v1213, 7
        %v1215 = vsub.s32 %v1212, %v1214
        %v1216 = vrot.slane %v1209, %v1215
        %v1218 = vunpack.c.l.s4 1966171168
        %v1219 = vunpack.c.0.s8 %v1218
        %v1220 = vlaneseq
        %v1221 = vshrl.u32 %v1220, 7
        %v1222 = vsub.s32 %v1219, %v1221
        %v1223 = vrot.slane %v1204, %v1222
        %v1224 = vcombine.low %v1216, %v1223
        %v1226 = vunpack.c.l.s4 1966171168
        %v1227 = vunpack.c.0.s8 %v1226
        %v1228 = vlaneseq
        %v1229 = vshrl.u32 %v1228, 7
        %v1230 = vsub.s32 %v1227, %v1229
        %v1231 = vrot.slane %v1224, %v1230
        %v1233 = vadd.f32 %v1205, %v1231
        %1234 = vst.msk [vmem:[#allocation3] sm:$0x7] %vm340, %v1233
        %1235 = vrot.lane.b32.xlu0 %v953, 33
        %v1236 = vpop.permute.xlu0 %1235
        %1237 = vrot.lane.b32.xlu0 %v957, 33
        %v1238 = vpop.permute.xlu0 %1237
        %1239 = vrot.lane.b32.xlu0 %v961, 33
        %v1240 = vpop.permute.xlu0 %1239
        %vm1241 = vcmp.lt.s32.totalorder %v301, 33
        %v1242 = vsel %vm1241, %v1238, %v1240
        %v1243 = vsel %vm1241, %v1236, %v1238
        %v1244 = vsel %vm1241, %v1240, %v1236
        %s1245 = sld [smem:[#allocation5 + $0x2c]]
        %v1246 = vstv %s1245
        %v1247 = vmul.f32 %v1246, %v1243
        %v1248 = vmul.f32 %v1246, %v1242
        %v1249 = vmul.f32 %v1246, %v1244
        %v1250 = vld [vmem:[#allocation3] sm:$0x7]
        %v1254 = vcombine.low %v1247, %v1248
        %v1256 = vunpack.c.l.s4 1966171168
        %v1257 = vunpack.c.0.s8 %v1256
        %v1258 = vlaneseq
        %v1259 = vshrl.u32 %v1258, 7
        %v1260 = vsub.s32 %v1257, %v1259
        %v1261 = vrot.slane %v1254, %v1260
        %v1263 = vunpack.c.l.s4 1966171168
        %v1264 = vunpack.c.0.s8 %v1263
        %v1265 = vlaneseq
        %v1266 = vshrl.u32 %v1265, 7
        %v1267 = vsub.s32 %v1264, %v1266
        %v1268 = vrot.slane %v1249, %v1267
        %v1269 = vcombine.low %v1261, %v1268
        %v1271 = vunpack.c.l.s4 1966171168
        %v1272 = vunpack.c.0.s8 %v1271
        %v1273 = vlaneseq
        %v1274 = vshrl.u32 %v1273, 7
        %v1275 = vsub.s32 %v1272, %v1274
        %v1276 = vrot.slane %v1269, %v1275
        %v1278 = vadd.f32 %v1250, %v1276
        %1279 = vst.msk [vmem:[#allocation3] sm:$0x7] %vm340, %v1278
        %s1280 = scalar_lea.vmem %s1, 3
        %v1281 = vld [vmem:[%s1280] ss:$8 sm:$0x7]
        %v1282 = vmul.f32 %v275, %v1281
        %s1283 = sld [smem:[#allocation5 + $0x3]]
        %v1284 = vstv %s1283
        %v1285 = vmul.f32 %v1284, %v1282
        %v1286 = vld [vmem:[#allocation3] sm:$0x7]
        %v1287 = vadd.f32 %v1286, %v1285
        %1288 = vst.msk [vmem:[#allocation3] sm:$0x7] %vm340, %v1287
        %v1290 = vlaneseq
        %v1291 = vshrl.u32 %v1290, 7
        %v1292 = vsub.s32 0, %v1291
        %v1293 = vrot.slane %v1282, %v1292
        %v1294 = vlaneseq
        %v1295 = vshrl.u32 %v1294, 7
        %v1296 = vsub.s32 1, %v1295
        %v1297 = vrot.slane %v1282, %v1296
        %v1298 = vlaneseq
        %v1299 = vshrl.u32 %v1298, 7
        %v1300 = vsub.s32 2, %v1299
        %v1301 = vrot.slane %v1282, %v1300
        %1305 = vrot.lane.b32.xlu0 %v1293, 112
        %v1306 = vpop.permute.xlu0 %1305
        %1307 = vrot.lane.b32.xlu0 %v1297, 112
        %v1308 = vpop.permute.xlu0 %1307
        %1309 = vrot.lane.b32.xlu0 %v1301, 112
        %v1310 = vpop.permute.xlu0 %1309
        %vm1311 = vcmp.lt.s32.totalorder %v301, 112
        %v1312 = vsel %vm1311, %v1308, %v1310
        %v1313 = vsel %vm1311, %v1306, %v1308
        %v1314 = vsel %vm1311, %v1310, %v1306
        %s1315 = sld [smem:[#allocation5 + $0xa]]
        %v1316 = vstv %s1315
        %v1317 = vmul.f32 %v1316, %v1313
        %v1318 = vmul.f32 %v1316, %v1312
        %v1319 = vmul.f32 %v1316, %v1314
        %v1320 = vld [vmem:[#allocation3] sm:$0x7]
        %v1324 = vcombine.low %v1317, %v1318
        %v1326 = vunpack.c.l.s4 1966171168
        %v1327 = vunpack.c.0.s8 %v1326
        %v1328 = vlaneseq
        %v1329 = vshrl.u32 %v1328, 7
        %v1330 = vsub.s32 %v1327, %v1329
        %v1331 = vrot.slane %v1324, %v1330
        %v1333 = vunpack.c.l.s4 1966171168
        %v1334 = vunpack.c.0.s8 %v1333
        %v1335 = vlaneseq
        %v1336 = vshrl.u32 %v1335, 7
        %v1337 = vsub.s32 %v1334, %v1336
        %v1338 = vrot.slane %v1319, %v1337
        %v1339 = vcombine.low %v1331, %v1338
        %v1341 = vunpack.c.l.s4 1966171168
        %v1342 = vunpack.c.0.s8 %v1341
        %v1343 = vlaneseq
        %v1344 = vshrl.u32 %v1343, 7
        %v1345 = vsub.s32 %v1342, %v1344
        %v1346 = vrot.slane %v1339, %v1345
        %v1348 = vadd.f32 %v1320, %v1346
        %1349 = vst.msk [vmem:[#allocation3] sm:$0x7] %vm340, %v1348
        %1350 = vrot.lane.b32.xlu0 %v1293, 96
        %v1351 = vpop.permute.xlu0 %1350
        %1352 = vrot.lane.b32.xlu0 %v1297, 96
        %v1353 = vpop.permute.xlu0 %1352
        %1354 = vrot.lane.b32.xlu0 %v1301, 96
        %v1355 = vpop.permute.xlu0 %1354
        %vm1356 = vcmp.lt.s32.totalorder %v301, 96
        %v1357 = vsel %vm1356, %v1353, %v1355
        %v1358 = vsel %vm1356, %v1351, %v1353
        %v1359 = vsel %vm1356, %v1355, %v1351
        %s1360 = sld [smem:[#allocation5 + $0x11]]
        %v1361 = vstv %s1360
        %v1362 = vmul.f32 %v1361, %v1358
        %v1363 = vmul.f32 %v1361, %v1357
        %v1364 = vmul.f32 %v1361, %v1359
        %v1365 = vld [vmem:[#allocation3] sm:$0x7]
        %v1369 = vcombine.low %v1362, %v1363
        %v1371 = vunpack.c.l.s4 1966171168
        %v1372 = vunpack.c.0.s8 %v1371
        %v1373 = vlaneseq
        %v1374 = vshrl.u32 %v1373, 7
        %v1375 = vsub.s32 %v1372, %v1374
        %v1376 = vrot.slane %v1369, %v1375
        %v1378 = vunpack.c.l.s4 1966171168
        %v1379 = vunpack.c.0.s8 %v1378
        %v1380 = vlaneseq
        %v1381 = vshrl.u32 %v1380, 7
        %v1382 = vsub.s32 %v1379, %v1381
        %v1383 = vrot.slane %v1364, %v1382
        %v1384 = vcombine.low %v1376, %v1383
        %v1386 = vunpack.c.l.s4 1966171168
        %v1387 = vunpack.c.0.s8 %v1386
        %v1388 = vlaneseq
        %v1389 = vshrl.u32 %v1388, 7
        %v1390 = vsub.s32 %v1387, %v1389
        %v1391 = vrot.slane %v1384, %v1390
        %v1393 = vadd.f32 %v1365, %v1391
        %1394 = vst.msk [vmem:[#allocation3] sm:$0x7] %vm340, %v1393
        %1395 = vrot.lane.b32.xlu0 %v1293, 80
        %v1396 = vpop.permute.xlu0 %1395
        %1397 = vrot.lane.b32.xlu0 %v1297, 80
        %v1398 = vpop.permute.xlu0 %1397
        %1399 = vrot.lane.b32.xlu0 %v1301, 80
        %v1400 = vpop.permute.xlu0 %1399
        %vm1401 = vcmp.lt.s32.totalorder %v301, 80
        %v1402 = vsel %vm1401, %v1398, %v1400
        %v1403 = vsel %vm1401, %v1396, %v1398
        %v1404 = vsel %vm1401, %v1400, %v1396
        %s1405 = sld [smem:[#allocation5 + $0x18]]
        %v1406 = vstv %s1405
        %v1407 = vmul.f32 %v1406, %v1403
        %v1408 = vmul.f32 %v1406, %v1402
        %v1409 = vmul.f32 %v1406, %v1404
        %v1410 = vld [vmem:[#allocation3] sm:$0x7]
        %v1414 = vcombine.low %v1407, %v1408
        %v1416 = vunpack.c.l.s4 1966171168
        %v1417 = vunpack.c.0.s8 %v1416
        %v1418 = vlaneseq
        %v1419 = vshrl.u32 %v1418, 7
        %v1420 = vsub.s32 %v1417, %v1419
        %v1421 = vrot.slane %v1414, %v1420
        %v1423 = vunpack.c.l.s4 1966171168
        %v1424 = vunpack.c.0.s8 %v1423
        %v1425 = vlaneseq
        %v1426 = vshrl.u32 %v1425, 7
        %v1427 = vsub.s32 %v1424, %v1426
        %v1428 = vrot.slane %v1409, %v1427
        %v1429 = vcombine.low %v1421, %v1428
        %v1431 = vunpack.c.l.s4 1966171168
        %v1432 = vunpack.c.0.s8 %v1431
        %v1433 = vlaneseq
        %v1434 = vshrl.u32 %v1433, 7
        %v1435 = vsub.s32 %v1432, %v1434
        %v1436 = vrot.slane %v1429, %v1435
        %v1438 = vadd.f32 %v1410, %v1436
        %1439 = vst.msk [vmem:[#allocation3] sm:$0x7] %vm340, %v1438
        %1440 = vrot.lane.b32.xlu0 %v1293, 64
        %v1441 = vpop.permute.xlu0 %1440
        %1442 = vrot.lane.b32.xlu0 %v1297, 64
        %v1443 = vpop.permute.xlu0 %1442
        %1444 = vrot.lane.b32.xlu0 %v1301, 64
        %v1445 = vpop.permute.xlu0 %1444
        %vm1446 = vcmp.lt.s32.totalorder %v301, 64
        %v1447 = vsel %vm1446, %v1443, %v1445
        %v1448 = vsel %vm1446, %v1441, %v1443
        %v1449 = vsel %vm1446, %v1445, %v1441
        %s1450 = sld [smem:[#allocation5 + $0x1f]]
        %v1451 = vstv %s1450
        %v1452 = vmul.f32 %v1451, %v1448
        %v1453 = vmul.f32 %v1451, %v1447
        %v1454 = vmul.f32 %v1451, %v1449
        %v1455 = vld [vmem:[#allocation3] sm:$0x7]
        %v1459 = vcombine.low %v1452, %v1453
        %v1461 = vunpack.c.l.s4 1966171168
        %v1462 = vunpack.c.0.s8 %v1461
        %v1463 = vlaneseq
        %v1464 = vshrl.u32 %v1463, 7
        %v1465 = vsub.s32 %v1462, %v1464
        %v1466 = vrot.slane %v1459, %v1465
        %v1468 = vunpack.c.l.s4 1966171168
        %v1469 = vunpack.c.0.s8 %v1468
        %v1470 = vlaneseq
        %v1471 = vshrl.u32 %v1470, 7
        %v1472 = vsub.s32 %v1469, %v1471
        %v1473 = vrot.slane %v1454, %v1472
        %v1474 = vcombine.low %v1466, %v1473
        %v1476 = vunpack.c.l.s4 1966171168
        %v1477 = vunpack.c.0.s8 %v1476
        %v1478 = vlaneseq
        %v1479 = vshrl.u32 %v1478, 7
        %v1480 = vsub.s32 %v1477, %v1479
        %v1481 = vrot.slane %v1474, %v1480
        %v1483 = vadd.f32 %v1455, %v1481
        %1484 = vst.msk [vmem:[#allocation3] sm:$0x7] %vm340, %v1483
        %1485 = vrot.lane.b32.xlu0 %v1293, 48
        %v1486 = vpop.permute.xlu0 %1485
        %1487 = vrot.lane.b32.xlu0 %v1297, 48
        %v1488 = vpop.permute.xlu0 %1487
        %1489 = vrot.lane.b32.xlu0 %v1301, 48
        %v1490 = vpop.permute.xlu0 %1489
        %vm1491 = vcmp.lt.s32.totalorder %v301, 48
        %v1492 = vsel %vm1491, %v1488, %v1490
        %v1493 = vsel %vm1491, %v1486, %v1488
        %v1494 = vsel %vm1491, %v1490, %v1486
        %s1495 = sld [smem:[#allocation5 + $0x26]]
        %v1496 = vstv %s1495
        %v1497 = vmul.f32 %v1496, %v1493
        %v1498 = vmul.f32 %v1496, %v1492
        %v1499 = vmul.f32 %v1496, %v1494
        %v1500 = vld [vmem:[#allocation3] sm:$0x7]
        %v1504 = vcombine.low %v1497, %v1498
        %v1506 = vunpack.c.l.s4 1966171168
        %v1507 = vunpack.c.0.s8 %v1506
        %v1508 = vlaneseq
        %v1509 = vshrl.u32 %v1508, 7
        %v1510 = vsub.s32 %v1507, %v1509
        %v1511 = vrot.slane %v1504, %v1510
        %v1513 = vunpack.c.l.s4 1966171168
        %v1514 = vunpack.c.0.s8 %v1513
        %v1515 = vlaneseq
        %v1516 = vshrl.u32 %v1515, 7
        %v1517 = vsub.s32 %v1514, %v1516
        %v1518 = vrot.slane %v1499, %v1517
        %v1519 = vcombine.low %v1511, %v1518
        %v1521 = vunpack.c.l.s4 1966171168
        %v1522 = vunpack.c.0.s8 %v1521
        %v1523 = vlaneseq
        %v1524 = vshrl.u32 %v1523, 7
        %v1525 = vsub.s32 %v1522, %v1524
        %v1526 = vrot.slane %v1519, %v1525
        %v1528 = vadd.f32 %v1500, %v1526
        %1529 = vst.msk [vmem:[#allocation3] sm:$0x7] %vm340, %v1528
        %1530 = vrot.lane.b32.xlu0 %v1293, 32
        %v1531 = vpop.permute.xlu0 %1530
        %1532 = vrot.lane.b32.xlu0 %v1297, 32
        %v1533 = vpop.permute.xlu0 %1532
        %1534 = vrot.lane.b32.xlu0 %v1301, 32
        %v1535 = vpop.permute.xlu0 %1534
        %vm1536 = vcmp.lt.s32.totalorder %v301, 32
        %v1537 = vsel %vm1536, %v1533, %v1535
        %v1538 = vsel %vm1536, %v1531, %v1533
        %v1539 = vsel %vm1536, %v1535, %v1531
        %s1540 = sld [smem:[#allocation5 + $0x2d]]
        %v1541 = vstv %s1540
        %v1542 = vmul.f32 %v1541, %v1538
        %v1543 = vmul.f32 %v1541, %v1537
        %v1544 = vmul.f32 %v1541, %v1539
        %v1545 = vld [vmem:[#allocation3] sm:$0x7]
        %v1549 = vcombine.low %v1542, %v1543
        %v1551 = vunpack.c.l.s4 1966171168
        %v1552 = vunpack.c.0.s8 %v1551
        %v1553 = vlaneseq
        %v1554 = vshrl.u32 %v1553, 7
        %v1555 = vsub.s32 %v1552, %v1554
        %v1556 = vrot.slane %v1549, %v1555
        %v1558 = vunpack.c.l.s4 1966171168
        %v1559 = vunpack.c.0.s8 %v1558
        %v1560 = vlaneseq
        %v1561 = vshrl.u32 %v1560, 7
        %v1562 = vsub.s32 %v1559, %v1561
        %v1563 = vrot.slane %v1544, %v1562
        %v1564 = vcombine.low %v1556, %v1563
        %v1566 = vunpack.c.l.s4 1966171168
        %v1567 = vunpack.c.0.s8 %v1566
        %v1568 = vlaneseq
        %v1569 = vshrl.u32 %v1568, 7
        %v1570 = vsub.s32 %v1567, %v1569
        %v1571 = vrot.slane %v1564, %v1570
        %v1573 = vadd.f32 %v1545, %v1571
        %1574 = vst.msk [vmem:[#allocation3] sm:$0x7] %vm340, %v1573
        %s1575 = scalar_lea.vmem %s1, 4
        %v1576 = vld [vmem:[%s1575] ss:$8 sm:$0x7]
        %v1577 = vmul.f32 %v275, %v1576
        %v1579 = vlaneseq
        %v1580 = vshrl.u32 %v1579, 7
        %v1581 = vsub.s32 0, %v1580
        %v1582 = vrot.slane %v1577, %v1581
        %v1583 = vlaneseq
        %v1584 = vshrl.u32 %v1583, 7
        %v1585 = vsub.s32 1, %v1584
        %v1586 = vrot.slane %v1577, %v1585
        %v1587 = vlaneseq
        %v1588 = vshrl.u32 %v1587, 7
        %v1589 = vsub.s32 2, %v1588
        %v1590 = vrot.slane %v1577, %v1589
        %1594 = vrot.lane.b32.xlu0 %v1582, 127
        %v1595 = vpop.permute.xlu0 %1594
        %1596 = vrot.lane.b32.xlu0 %v1586, 127
        %v1597 = vpop.permute.xlu0 %1596
        %1598 = vrot.lane.b32.xlu0 %v1590, 127
        %v1599 = vpop.permute.xlu0 %1598
        %vm1600 = vcmp.lt.s32.totalorder %v301, 127
        %v1601 = vsel %vm1600, %v1597, %v1599
        %v1602 = vsel %vm1600, %v1595, %v1597
        %v1603 = vsel %vm1600, %v1599, %v1595
        %s1604 = sld [smem:[#allocation5 + $0x4]]
        %v1605 = vstv %s1604
        %v1606 = vmul.f32 %v1605, %v1602
        %v1607 = vmul.f32 %v1605, %v1601
        %v1608 = vmul.f32 %v1605, %v1603
        %v1609 = vld [vmem:[#allocation3] sm:$0x7]
        %v1613 = vcombine.low %v1606, %v1607
        %v1615 = vunpack.c.l.s4 1966171168
        %v1616 = vunpack.c.0.s8 %v1615
        %v1617 = vlaneseq
        %v1618 = vshrl.u32 %v1617, 7
        %v1619 = vsub.s32 %v1616, %v1618
        %v1620 = vrot.slane %v1613, %v1619
        %v1622 = vunpack.c.l.s4 1966171168
        %v1623 = vunpack.c.0.s8 %v1622
        %v1624 = vlaneseq
        %v1625 = vshrl.u32 %v1624, 7
        %v1626 = vsub.s32 %v1623, %v1625
        %v1627 = vrot.slane %v1608, %v1626
        %v1628 = vcombine.low %v1620, %v1627
        %v1630 = vunpack.c.l.s4 1966171168
        %v1631 = vunpack.c.0.s8 %v1630
        %v1632 = vlaneseq
        %v1633 = vshrl.u32 %v1632, 7
        %v1634 = vsub.s32 %v1631, %v1633
        %v1635 = vrot.slane %v1628, %v1634
        %v1637 = vadd.f32 %v1609, %v1635
        %1638 = vst.msk [vmem:[#allocation3] sm:$0x7] %vm340, %v1637
        %1639 = vrot.lane.b32.xlu0 %v1582, 111
        %v1640 = vpop.permute.xlu0 %1639
        %1641 = vrot.lane.b32.xlu0 %v1586, 111
        %v1642 = vpop.permute.xlu0 %1641
        %1643 = vrot.lane.b32.xlu0 %v1590, 111
        %v1644 = vpop.permute.xlu0 %1643
        %vm1645 = vcmp.lt.s32.totalorder %v301, 111
        %v1646 = vsel %vm1645, %v1642, %v1644
        %v1647 = vsel %vm1645, %v1640, %v1642
        %v1648 = vsel %vm1645, %v1644, %v1640
        %s1649 = sld [smem:[#allocation5 + $0xb]]
        %v1650 = vstv %s1649
        %v1651 = vmul.f32 %v1650, %v1647
        %v1652 = vmul.f32 %v1650, %v1646
        %v1653 = vmul.f32 %v1650, %v1648
        %v1654 = vld [vmem:[#allocation3] sm:$0x7]
        %v1658 = vcombine.low %v1651, %v1652
        %v1660 = vunpack.c.l.s4 1966171168
        %v1661 = vunpack.c.0.s8 %v1660
        %v1662 = vlaneseq
        %v1663 = vshrl.u32 %v1662, 7
        %v1664 = vsub.s32 %v1661, %v1663
        %v1665 = vrot.slane %v1658, %v1664
        %v1667 = vunpack.c.l.s4 1966171168
        %v1668 = vunpack.c.0.s8 %v1667
        %v1669 = vlaneseq
        %v1670 = vshrl.u32 %v1669, 7
        %v1671 = vsub.s32 %v1668, %v1670
        %v1672 = vrot.slane %v1653, %v1671
        %v1673 = vcombine.low %v1665, %v1672
        %v1675 = vunpack.c.l.s4 1966171168
        %v1676 = vunpack.c.0.s8 %v1675
        %v1677 = vlaneseq
        %v1678 = vshrl.u32 %v1677, 7
        %v1679 = vsub.s32 %v1676, %v1678
        %v1680 = vrot.slane %v1673, %v1679
        %v1682 = vadd.f32 %v1654, %v1680
        %1683 = vst.msk [vmem:[#allocation3] sm:$0x7] %vm340, %v1682
        %1684 = vrot.lane.b32.xlu0 %v1582, 95
        %v1685 = vpop.permute.xlu0 %1684
        %1686 = vrot.lane.b32.xlu0 %v1586, 95
        %v1687 = vpop.permute.xlu0 %1686
        %1688 = vrot.lane.b32.xlu0 %v1590, 95
        %v1689 = vpop.permute.xlu0 %1688
        %vm1690 = vcmp.lt.s32.totalorder %v301, 95
        %v1691 = vsel %vm1690, %v1687, %v1689
        %v1692 = vsel %vm1690, %v1685, %v1687
        %v1693 = vsel %vm1690, %v1689, %v1685
        %s1694 = sld [smem:[#allocation5 + $0x12]]
        %v1695 = vstv %s1694
        %v1696 = vmul.f32 %v1695, %v1692
        %v1697 = vmul.f32 %v1695, %v1691
        %v1698 = vmul.f32 %v1695, %v1693
        %v1699 = vld [vmem:[#allocation3] sm:$0x7]
        %v1703 = vcombine.low %v1696, %v1697
        %v1705 = vunpack.c.l.s4 1966171168
        %v1706 = vunpack.c.0.s8 %v1705
        %v1707 = vlaneseq
        %v1708 = vshrl.u32 %v1707, 7
        %v1709 = vsub.s32 %v1706, %v1708
        %v1710 = vrot.slane %v1703, %v1709
        %v1712 = vunpack.c.l.s4 1966171168
        %v1713 = vunpack.c.0.s8 %v1712
        %v1714 = vlaneseq
        %v1715 = vshrl.u32 %v1714, 7
        %v1716 = vsub.s32 %v1713, %v1715
        %v1717 = vrot.slane %v1698, %v1716
        %v1718 = vcombine.low %v1710, %v1717
        %v1720 = vunpack.c.l.s4 1966171168
        %v1721 = vunpack.c.0.s8 %v1720
        %v1722 = vlaneseq
        %v1723 = vshrl.u32 %v1722, 7
        %v1724 = vsub.s32 %v1721, %v1723
        %v1725 = vrot.slane %v1718, %v1724
        %v1727 = vadd.f32 %v1699, %v1725
        %1728 = vst.msk [vmem:[#allocation3] sm:$0x7] %vm340, %v1727
        %1729 = vrot.lane.b32.xlu0 %v1582, 79
        %v1730 = vpop.permute.xlu0 %1729
        %1731 = vrot.lane.b32.xlu0 %v1586, 79
        %v1732 = vpop.permute.xlu0 %1731
        %1733 = vrot.lane.b32.xlu0 %v1590, 79
        %v1734 = vpop.permute.xlu0 %1733
        %vm1735 = vcmp.lt.s32.totalorder %v301, 79
        %v1736 = vsel %vm1735, %v1732, %v1734
        %v1737 = vsel %vm1735, %v1730, %v1732
        %v1738 = vsel %vm1735, %v1734, %v1730
        %s1739 = sld [smem:[#allocation5 + $0x19]]
        %v1740 = vstv %s1739
        %v1741 = vmul.f32 %v1740, %v1737
        %v1742 = vmul.f32 %v1740, %v1736
        %v1743 = vmul.f32 %v1740, %v1738
        %v1744 = vld [vmem:[#allocation3] sm:$0x7]
        %v1748 = vcombine.low %v1741, %v1742
        %v1750 = vunpack.c.l.s4 1966171168
        %v1751 = vunpack.c.0.s8 %v1750
        %v1752 = vlaneseq
        %v1753 = vshrl.u32 %v1752, 7
        %v1754 = vsub.s32 %v1751, %v1753
        %v1755 = vrot.slane %v1748, %v1754
        %v1757 = vunpack.c.l.s4 1966171168
        %v1758 = vunpack.c.0.s8 %v1757
        %v1759 = vlaneseq
        %v1760 = vshrl.u32 %v1759, 7
        %v1761 = vsub.s32 %v1758, %v1760
        %v1762 = vrot.slane %v1743, %v1761
        %v1763 = vcombine.low %v1755, %v1762
        %v1765 = vunpack.c.l.s4 1966171168
        %v1766 = vunpack.c.0.s8 %v1765
        %v1767 = vlaneseq
        %v1768 = vshrl.u32 %v1767, 7
        %v1769 = vsub.s32 %v1766, %v1768
        %v1770 = vrot.slane %v1763, %v1769
        %v1772 = vadd.f32 %v1744, %v1770
        %1773 = vst.msk [vmem:[#allocation3] sm:$0x7] %vm340, %v1772
        %1774 = vrot.lane.b32.xlu0 %v1582, 63
        %v1775 = vpop.permute.xlu0 %1774
        %1776 = vrot.lane.b32.xlu0 %v1586, 63
        %v1777 = vpop.permute.xlu0 %1776
        %1778 = vrot.lane.b32.xlu0 %v1590, 63
        %v1779 = vpop.permute.xlu0 %1778
        %vm1780 = vcmp.lt.s32.totalorder %v301, 63
        %v1781 = vsel %vm1780, %v1777, %v1779
        %v1782 = vsel %vm1780, %v1775, %v1777
        %v1783 = vsel %vm1780, %v1779, %v1775
        %s1784 = sld [smem:[#allocation5 + $0x20]]
        %v1785 = vstv %s1784
        %v1786 = vmul.f32 %v1785, %v1782
        %v1787 = vmul.f32 %v1785, %v1781
        %v1788 = vmul.f32 %v1785, %v1783
        %v1789 = vld [vmem:[#allocation3] sm:$0x7]
        %v1793 = vcombine.low %v1786, %v1787
        %v1795 = vunpack.c.l.s4 1966171168
        %v1796 = vunpack.c.0.s8 %v1795
        %v1797 = vlaneseq
        %v1798 = vshrl.u32 %v1797, 7
        %v1799 = vsub.s32 %v1796, %v1798
        %v1800 = vrot.slane %v1793, %v1799
        %v1802 = vunpack.c.l.s4 1966171168
        %v1803 = vunpack.c.0.s8 %v1802
        %v1804 = vlaneseq
        %v1805 = vshrl.u32 %v1804, 7
        %v1806 = vsub.s32 %v1803, %v1805
        %v1807 = vrot.slane %v1788, %v1806
        %v1808 = vcombine.low %v1800, %v1807
        %v1810 = vunpack.c.l.s4 1966171168
        %v1811 = vunpack.c.0.s8 %v1810
        %v1812 = vlaneseq
        %v1813 = vshrl.u32 %v1812, 7
        %v1814 = vsub.s32 %v1811, %v1813
        %v1815 = vrot.slane %v1808, %v1814
        %v1817 = vadd.f32 %v1789, %v1815
        %1818 = vst.msk [vmem:[#allocation3] sm:$0x7] %vm340, %v1817
        %1819 = vrot.lane.b32.xlu0 %v1582, 47
        %v1820 = vpop.permute.xlu0 %1819
        %1821 = vrot.lane.b32.xlu0 %v1586, 47
        %v1822 = vpop.permute.xlu0 %1821
        %1823 = vrot.lane.b32.xlu0 %v1590, 47
        %v1824 = vpop.permute.xlu0 %1823
        %vm1825 = vcmp.lt.s32.totalorder %v301, 47
        %v1826 = vsel %vm1825, %v1822, %v1824
        %v1827 = vsel %vm1825, %v1820, %v1822
        %v1828 = vsel %vm1825, %v1824, %v1820
        %s1829 = sld [smem:[#allocation5 + $0x27]]
        %v1830 = vstv %s1829
        %v1831 = vmul.f32 %v1830, %v1827
        %v1832 = vmul.f32 %v1830, %v1826
        %v1833 = vmul.f32 %v1830, %v1828
        %v1834 = vld [vmem:[#allocation3] sm:$0x7]
        %v1838 = vcombine.low %v1831, %v1832
        %v1840 = vunpack.c.l.s4 1966171168
        %v1841 = vunpack.c.0.s8 %v1840
        %v1842 = vlaneseq
        %v1843 = vshrl.u32 %v1842, 7
        %v1844 = vsub.s32 %v1841, %v1843
        %v1845 = vrot.slane %v1838, %v1844
        %v1847 = vunpack.c.l.s4 1966171168
        %v1848 = vunpack.c.0.s8 %v1847
        %v1849 = vlaneseq
        %v1850 = vshrl.u32 %v1849, 7
        %v1851 = vsub.s32 %v1848, %v1850
        %v1852 = vrot.slane %v1833, %v1851
        %v1853 = vcombine.low %v1845, %v1852
        %v1855 = vunpack.c.l.s4 1966171168
        %v1856 = vunpack.c.0.s8 %v1855
        %v1857 = vlaneseq
        %v1858 = vshrl.u32 %v1857, 7
        %v1859 = vsub.s32 %v1856, %v1858
        %v1860 = vrot.slane %v1853, %v1859
        %v1862 = vadd.f32 %v1834, %v1860
        %1863 = vst.msk [vmem:[#allocation3] sm:$0x7] %vm340, %v1862
        %1864 = vrot.lane.b32.xlu0 %v1582, 31
        %v1865 = vpop.permute.xlu0 %1864
        %1866 = vrot.lane.b32.xlu0 %v1586, 31
        %v1867 = vpop.permute.xlu0 %1866
        %1868 = vrot.lane.b32.xlu0 %v1590, 31
        %v1869 = vpop.permute.xlu0 %1868
        %vm1870 = vcmp.lt.s32.totalorder %v301, 31
        %v1871 = vsel %vm1870, %v1867, %v1869
        %v1872 = vsel %vm1870, %v1865, %v1867
        %v1873 = vsel %vm1870, %v1869, %v1865
        %s1874 = sld [smem:[#allocation5 + $0x2e]]
        %v1875 = vstv %s1874
        %v1876 = vmul.f32 %v1875, %v1872
        %v1877 = vmul.f32 %v1875, %v1871
        %v1878 = vmul.f32 %v1875, %v1873
        %v1879 = vld [vmem:[#allocation3] sm:$0x7]
        %v1883 = vcombine.low %v1876, %v1877
        %v1885 = vunpack.c.l.s4 1966171168
        %v1886 = vunpack.c.0.s8 %v1885
        %v1887 = vlaneseq
        %v1888 = vshrl.u32 %v1887, 7
        %v1889 = vsub.s32 %v1886, %v1888
        %v1890 = vrot.slane %v1883, %v1889
        %v1892 = vunpack.c.l.s4 1966171168
        %v1893 = vunpack.c.0.s8 %v1892
        %v1894 = vlaneseq
        %v1895 = vshrl.u32 %v1894, 7
        %v1896 = vsub.s32 %v1893, %v1895
        %v1897 = vrot.slane %v1878, %v1896
        %v1898 = vcombine.low %v1890, %v1897
        %v1900 = vunpack.c.l.s4 1966171168
        %v1901 = vunpack.c.0.s8 %v1900
        %v1902 = vlaneseq
        %v1903 = vshrl.u32 %v1902, 7
        %v1904 = vsub.s32 %v1901, %v1903
        %v1905 = vrot.slane %v1898, %v1904
        %v1907 = vadd.f32 %v1879, %v1905
        %1908 = vst.msk [vmem:[#allocation3] sm:$0x7] %vm340, %v1907
        %s1909 = scalar_lea.vmem %s1, 5
        %v1910 = vld [vmem:[%s1909] ss:$8 sm:$0x7]
        %v1911 = vmul.f32 %v275, %v1910
        %v1913 = vlaneseq
        %v1914 = vshrl.u32 %v1913, 7
        %v1915 = vsub.s32 0, %v1914
        %v1916 = vrot.slane %v1911, %v1915
        %v1917 = vlaneseq
        %v1918 = vshrl.u32 %v1917, 7
        %v1919 = vsub.s32 1, %v1918
        %v1920 = vrot.slane %v1911, %v1919
        %v1921 = vlaneseq
        %v1922 = vshrl.u32 %v1921, 7
        %v1923 = vsub.s32 2, %v1922
        %v1924 = vrot.slane %v1911, %v1923
        %1928 = vrot.lane.b32.xlu0 %v1916, 126
        %v1929 = vpop.permute.xlu0 %1928
        %1930 = vrot.lane.b32.xlu0 %v1920, 126
        %v1931 = vpop.permute.xlu0 %1930
        %1932 = vrot.lane.b32.xlu0 %v1924, 126
        %v1933 = vpop.permute.xlu0 %1932
        %vm1934 = vcmp.lt.s32.totalorder %v301, 126
        %v1935 = vsel %vm1934, %v1931, %v1933
        %v1936 = vsel %vm1934, %v1929, %v1931
        %v1937 = vsel %vm1934, %v1933, %v1929
        %s1938 = sld [smem:[#allocation5 + $0x5]]
        %v1939 = vstv %s1938
        %v1940 = vmul.f32 %v1939, %v1936
        %v1941 = vmul.f32 %v1939, %v1935
        %v1942 = vmul.f32 %v1939, %v1937
        %v1943 = vld [vmem:[#allocation3] sm:$0x7]
        %v1947 = vcombine.low %v1940, %v1941
        %v1949 = vunpack.c.l.s4 1966171168
        %v1950 = vunpack.c.0.s8 %v1949
        %v1951 = vlaneseq
        %v1952 = vshrl.u32 %v1951, 7
        %v1953 = vsub.s32 %v1950, %v1952
        %v1954 = vrot.slane %v1947, %v1953
        %v1956 = vunpack.c.l.s4 1966171168
        %v1957 = vunpack.c.0.s8 %v1956
        %v1958 = vlaneseq
        %v1959 = vshrl.u32 %v1958, 7
        %v1960 = vsub.s32 %v1957, %v1959
        %v1961 = vrot.slane %v1942, %v1960
        %v1962 = vcombine.low %v1954, %v1961
        %v1964 = vunpack.c.l.s4 1966171168
        %v1965 = vunpack.c.0.s8 %v1964
        %v1966 = vlaneseq
        %v1967 = vshrl.u32 %v1966, 7
        %v1968 = vsub.s32 %v1965, %v1967
        %v1969 = vrot.slane %v1962, %v1968
        %v1971 = vadd.f32 %v1943, %v1969
        %1972 = vst.msk [vmem:[#allocation3] sm:$0x7] %vm340, %v1971
        %1973 = vrot.lane.b32.xlu0 %v1916, 110
        %v1974 = vpop.permute.xlu0 %1973
        %1975 = vrot.lane.b32.xlu0 %v1920, 110
        %v1976 = vpop.permute.xlu0 %1975
        %1977 = vrot.lane.b32.xlu0 %v1924, 110
        %v1978 = vpop.permute.xlu0 %1977
        %vm1979 = vcmp.lt.s32.totalorder %v301, 110
        %v1980 = vsel %vm1979, %v1976, %v1978
        %v1981 = vsel %vm1979, %v1974, %v1976
        %v1982 = vsel %vm1979, %v1978, %v1974
        %s1983 = sld [smem:[#allocation5 + $0xc]]
        %v1984 = vstv %s1983
        %v1985 = vmul.f32 %v1984, %v1981
        %v1986 = vmul.f32 %v1984, %v1980
        %v1987 = vmul.f32 %v1984, %v1982
        %v1988 = vld [vmem:[#allocation3] sm:$0x7]
        %v1992 = vcombine.low %v1985, %v1986
        %v1994 = vunpack.c.l.s4 1966171168
        %v1995 = vunpack.c.0.s8 %v1994
        %v1996 = vlaneseq
        %v1997 = vshrl.u32 %v1996, 7
        %v1998 = vsub.s32 %v1995, %v1997
        %v1999 = vrot.slane %v1992, %v1998
        %v2001 = vunpack.c.l.s4 1966171168
        %v2002 = vunpack.c.0.s8 %v2001
        %v2003 = vlaneseq
        %v2004 = vshrl.u32 %v2003, 7
        %v2005 = vsub.s32 %v2002, %v2004
        %v2006 = vrot.slane %v1987, %v2005
        %v2007 = vcombine.low %v1999, %v2006
        %v2009 = vunpack.c.l.s4 1966171168
        %v2010 = vunpack.c.0.s8 %v2009
        %v2011 = vlaneseq
        %v2012 = vshrl.u32 %v2011, 7
        %v2013 = vsub.s32 %v2010, %v2012
        %v2014 = vrot.slane %v2007, %v2013
        %v2016 = vadd.f32 %v1988, %v2014
        %2017 = vst.msk [vmem:[#allocation3] sm:$0x7] %vm340, %v2016
        %2018 = vrot.lane.b32.xlu0 %v1916, 94
        %v2019 = vpop.permute.xlu0 %2018
        %2020 = vrot.lane.b32.xlu0 %v1920, 94
        %v2021 = vpop.permute.xlu0 %2020
        %2022 = vrot.lane.b32.xlu0 %v1924, 94
        %v2023 = vpop.permute.xlu0 %2022
        %vm2024 = vcmp.lt.s32.totalorder %v301, 94
        %v2025 = vsel %vm2024, %v2021, %v2023
        %v2026 = vsel %vm2024, %v2019, %v2021
        %v2027 = vsel %vm2024, %v2023, %v2019
        %s2028 = sld [smem:[#allocation5 + $0x13]]
        %v2029 = vstv %s2028
        %v2030 = vmul.f32 %v2029, %v2026
        %v2031 = vmul.f32 %v2029, %v2025
        %v2032 = vmul.f32 %v2029, %v2027
        %v2033 = vld [vmem:[#allocation3] sm:$0x7]
        %v2037 = vcombine.low %v2030, %v2031
        %v2039 = vunpack.c.l.s4 1966171168
        %v2040 = vunpack.c.0.s8 %v2039
        %v2041 = vlaneseq
        %v2042 = vshrl.u32 %v2041, 7
        %v2043 = vsub.s32 %v2040, %v2042
        %v2044 = vrot.slane %v2037, %v2043
        %v2046 = vunpack.c.l.s4 1966171168
        %v2047 = vunpack.c.0.s8 %v2046
        %v2048 = vlaneseq
        %v2049 = vshrl.u32 %v2048, 7
        %v2050 = vsub.s32 %v2047, %v2049
        %v2051 = vrot.slane %v2032, %v2050
        %v2052 = vcombine.low %v2044, %v2051
        %v2054 = vunpack.c.l.s4 1966171168
        %v2055 = vunpack.c.0.s8 %v2054
        %v2056 = vlaneseq
        %v2057 = vshrl.u32 %v2056, 7
        %v2058 = vsub.s32 %v2055, %v2057
        %v2059 = vrot.slane %v2052, %v2058
        %v2061 = vadd.f32 %v2033, %v2059
        %2062 = vst.msk [vmem:[#allocation3] sm:$0x7] %vm340, %v2061
        %2063 = vrot.lane.b32.xlu0 %v1916, 78
        %v2064 = vpop.permute.xlu0 %2063
        %2065 = vrot.lane.b32.xlu0 %v1920, 78
        %v2066 = vpop.permute.xlu0 %2065
        %2067 = vrot.lane.b32.xlu0 %v1924, 78
        %v2068 = vpop.permute.xlu0 %2067
        %vm2069 = vcmp.lt.s32.totalorder %v301, 78
        %v2070 = vsel %vm2069, %v2066, %v2068
        %v2071 = vsel %vm2069, %v2064, %v2066
        %v2072 = vsel %vm2069, %v2068, %v2064
        %s2073 = sld [smem:[#allocation5 + $0x1a]]
        %v2074 = vstv %s2073
        %v2075 = vmul.f32 %v2074, %v2071
        %v2076 = vmul.f32 %v2074, %v2070
        %v2077 = vmul.f32 %v2074, %v2072
        %v2078 = vld [vmem:[#allocation3] sm:$0x7]
        %v2082 = vcombine.low %v2075, %v2076
        %v2084 = vunpack.c.l.s4 1966171168
        %v2085 = vunpack.c.0.s8 %v2084
        %v2086 = vlaneseq
        %v2087 = vshrl.u32 %v2086, 7
        %v2088 = vsub.s32 %v2085, %v2087
        %v2089 = vrot.slane %v2082, %v2088
        %v2091 = vunpack.c.l.s4 1966171168
        %v2092 = vunpack.c.0.s8 %v2091
        %v2093 = vlaneseq
        %v2094 = vshrl.u32 %v2093, 7
        %v2095 = vsub.s32 %v2092, %v2094
        %v2096 = vrot.slane %v2077, %v2095
        %v2097 = vcombine.low %v2089, %v2096
        %v2099 = vunpack.c.l.s4 1966171168
        %v2100 = vunpack.c.0.s8 %v2099
        %v2101 = vlaneseq
        %v2102 = vshrl.u32 %v2101, 7
        %v2103 = vsub.s32 %v2100, %v2102
        %v2104 = vrot.slane %v2097, %v2103
        %v2106 = vadd.f32 %v2078, %v2104
        %2107 = vst.msk [vmem:[#allocation3] sm:$0x7] %vm340, %v2106
        %2108 = vrot.lane.b32.xlu0 %v1916, 62
        %v2109 = vpop.permute.xlu0 %2108
        %2110 = vrot.lane.b32.xlu0 %v1920, 62
        %v2111 = vpop.permute.xlu0 %2110
        %2112 = vrot.lane.b32.xlu0 %v1924, 62
        %v2113 = vpop.permute.xlu0 %2112
        %vm2114 = vcmp.lt.s32.totalorder %v301, 62
        %v2115 = vsel %vm2114, %v2111, %v2113
        %v2116 = vsel %vm2114, %v2109, %v2111
        %v2117 = vsel %vm2114, %v2113, %v2109
        %s2118 = sld [smem:[#allocation5 + $0x21]]
        %v2119 = vstv %s2118
        %v2120 = vmul.f32 %v2119, %v2116
        %v2121 = vmul.f32 %v2119, %v2115
        %v2122 = vmul.f32 %v2119, %v2117
        %v2123 = vld [vmem:[#allocation3] sm:$0x7]
        %v2127 = vcombine.low %v2120, %v2121
        %v2129 = vunpack.c.l.s4 1966171168
        %v2130 = vunpack.c.0.s8 %v2129
        %v2131 = vlaneseq
        %v2132 = vshrl.u32 %v2131, 7
        %v2133 = vsub.s32 %v2130, %v2132
        %v2134 = vrot.slane %v2127, %v2133
        %v2136 = vunpack.c.l.s4 1966171168
        %v2137 = vunpack.c.0.s8 %v2136
        %v2138 = vlaneseq
        %v2139 = vshrl.u32 %v2138, 7
        %v2140 = vsub.s32 %v2137, %v2139
        %v2141 = vrot.slane %v2122, %v2140
        %v2142 = vcombine.low %v2134, %v2141
        %v2144 = vunpack.c.l.s4 1966171168
        %v2145 = vunpack.c.0.s8 %v2144
        %v2146 = vlaneseq
        %v2147 = vshrl.u32 %v2146, 7
        %v2148 = vsub.s32 %v2145, %v2147
        %v2149 = vrot.slane %v2142, %v2148
        %v2151 = vadd.f32 %v2123, %v2149
        %2152 = vst.msk [vmem:[#allocation3] sm:$0x7] %vm340, %v2151
        %2153 = vrot.lane.b32.xlu0 %v1916, 46
        %v2154 = vpop.permute.xlu0 %2153
        %2155 = vrot.lane.b32.xlu0 %v1920, 46
        %v2156 = vpop.permute.xlu0 %2155
        %2157 = vrot.lane.b32.xlu0 %v1924, 46
        %v2158 = vpop.permute.xlu0 %2157
        %vm2159 = vcmp.lt.s32.totalorder %v301, 46
        %v2160 = vsel %vm2159, %v2156, %v2158
        %v2161 = vsel %vm2159, %v2154, %v2156
        %v2162 = vsel %vm2159, %v2158, %v2154
        %s2163 = sld [smem:[#allocation5 + $0x28]]
        %v2164 = vstv %s2163
        %v2165 = vmul.f32 %v2164, %v2161
        %v2166 = vmul.f32 %v2164, %v2160
        %v2167 = vmul.f32 %v2164, %v2162
        %v2168 = vld [vmem:[#allocation3] sm:$0x7]
        %v2172 = vcombine.low %v2165, %v2166
        %v2174 = vunpack.c.l.s4 1966171168
        %v2175 = vunpack.c.0.s8 %v2174
        %v2176 = vlaneseq
        %v2177 = vshrl.u32 %v2176, 7
        %v2178 = vsub.s32 %v2175, %v2177
        %v2179 = vrot.slane %v2172, %v2178
        %v2181 = vunpack.c.l.s4 1966171168
        %v2182 = vunpack.c.0.s8 %v2181
        %v2183 = vlaneseq
        %v2184 = vshrl.u32 %v2183, 7
        %v2185 = vsub.s32 %v2182, %v2184
        %v2186 = vrot.slane %v2167, %v2185
        %v2187 = vcombine.low %v2179, %v2186
        %v2189 = vunpack.c.l.s4 1966171168
        %v2190 = vunpack.c.0.s8 %v2189
        %v2191 = vlaneseq
        %v2192 = vshrl.u32 %v2191, 7
        %v2193 = vsub.s32 %v2190, %v2192
        %v2194 = vrot.slane %v2187, %v2193
        %v2196 = vadd.f32 %v2168, %v2194
        %2197 = vst.msk [vmem:[#allocation3] sm:$0x7] %vm340, %v2196
        %2198 = vrot.lane.b32.xlu0 %v1916, 30
        %v2199 = vpop.permute.xlu0 %2198
        %2200 = vrot.lane.b32.xlu0 %v1920, 30
        %v2201 = vpop.permute.xlu0 %2200
        %2202 = vrot.lane.b32.xlu0 %v1924, 30
        %v2203 = vpop.permute.xlu0 %2202
        %vm2204 = vcmp.lt.s32.totalorder %v301, 30
        %v2205 = vsel %vm2204, %v2201, %v2203
        %v2206 = vsel %vm2204, %v2199, %v2201
        %v2207 = vsel %vm2204, %v2203, %v2199
        %s2208 = sld [smem:[#allocation5 + $0x2f]]
        %v2209 = vstv %s2208
        %v2210 = vmul.f32 %v2209, %v2206
        %v2211 = vmul.f32 %v2209, %v2205
        %v2212 = vmul.f32 %v2209, %v2207
        %v2213 = vld [vmem:[#allocation3] sm:$0x7]
        %v2217 = vcombine.low %v2210, %v2211
        %v2219 = vunpack.c.l.s4 1966171168
        %v2220 = vunpack.c.0.s8 %v2219
        %v2221 = vlaneseq
        %v2222 = vshrl.u32 %v2221, 7
        %v2223 = vsub.s32 %v2220, %v2222
        %v2224 = vrot.slane %v2217, %v2223
        %v2226 = vunpack.c.l.s4 1966171168
        %v2227 = vunpack.c.0.s8 %v2226
        %v2228 = vlaneseq
        %v2229 = vshrl.u32 %v2228, 7
        %v2230 = vsub.s32 %v2227, %v2229
        %v2231 = vrot.slane %v2212, %v2230
        %v2232 = vcombine.low %v2224, %v2231
        %v2234 = vunpack.c.l.s4 1966171168
        %v2235 = vunpack.c.0.s8 %v2234
        %v2236 = vlaneseq
        %v2237 = vshrl.u32 %v2236, 7
        %v2238 = vsub.s32 %v2235, %v2237
        %v2239 = vrot.slane %v2232, %v2238
        %v2241 = vadd.f32 %v2213, %v2239
        %2242 = vst.msk [vmem:[#allocation3] sm:$0x7] %vm340, %v2241
        %s2243 = scalar_lea.vmem %s1, 6
        %v2244 = vld [vmem:[%s2243] ss:$8 sm:$0x7]
        %v2245 = vmul.f32 %v275, %v2244
        %v2247 = vlaneseq
        %v2248 = vshrl.u32 %v2247, 7
        %v2249 = vsub.s32 0, %v2248
        %v2250 = vrot.slane %v2245, %v2249
        %v2251 = vlaneseq
        %v2252 = vshrl.u32 %v2251, 7
        %v2253 = vsub.s32 1, %v2252
        %v2254 = vrot.slane %v2245, %v2253
        %v2255 = vlaneseq
        %v2256 = vshrl.u32 %v2255, 7
        %v2257 = vsub.s32 2, %v2256
        %v2258 = vrot.slane %v2245, %v2257
        %2262 = vrot.lane.b32.xlu0 %v2250, 125
        %v2263 = vpop.permute.xlu0 %2262
        %2264 = vrot.lane.b32.xlu0 %v2254, 125
        %v2265 = vpop.permute.xlu0 %2264
        %2266 = vrot.lane.b32.xlu0 %v2258, 125
        %v2267 = vpop.permute.xlu0 %2266
        %vm2268 = vcmp.lt.s32.totalorder %v301, 125
        %v2269 = vsel %vm2268, %v2265, %v2267
        %v2270 = vsel %vm2268, %v2263, %v2265
        %v2271 = vsel %vm2268, %v2267, %v2263
        %s2272 = sld [smem:[#allocation5 + $0x6]]
        %v2273 = vstv %s2272
        %v2274 = vmul.f32 %v2273, %v2270
        %v2275 = vmul.f32 %v2273, %v2269
        %v2276 = vmul.f32 %v2273, %v2271
        %v2277 = vld [vmem:[#allocation3] sm:$0x7]
        %v2281 = vcombine.low %v2274, %v2275
        %v2283 = vunpack.c.l.s4 1966171168
        %v2284 = vunpack.c.0.s8 %v2283
        %v2285 = vlaneseq
        %v2286 = vshrl.u32 %v2285, 7
        %v2287 = vsub.s32 %v2284, %v2286
        %v2288 = vrot.slane %v2281, %v2287
        %v2290 = vunpack.c.l.s4 1966171168
        %v2291 = vunpack.c.0.s8 %v2290
        %v2292 = vlaneseq
        %v2293 = vshrl.u32 %v2292, 7
        %v2294 = vsub.s32 %v2291, %v2293
        %v2295 = vrot.slane %v2276, %v2294
        %v2296 = vcombine.low %v2288, %v2295
        %v2298 = vunpack.c.l.s4 1966171168
        %v2299 = vunpack.c.0.s8 %v2298
        %v2300 = vlaneseq
        %v2301 = vshrl.u32 %v2300, 7
        %v2302 = vsub.s32 %v2299, %v2301
        %v2303 = vrot.slane %v2296, %v2302
        %v2305 = vadd.f32 %v2277, %v2303
        %2306 = vst.msk [vmem:[#allocation3] sm:$0x7] %vm340, %v2305
        %2307 = vrot.lane.b32.xlu0 %v2250, 109
        %v2308 = vpop.permute.xlu0 %2307
        %2309 = vrot.lane.b32.xlu0 %v2254, 109
        %v2310 = vpop.permute.xlu0 %2309
        %2311 = vrot.lane.b32.xlu0 %v2258, 109
        %v2312 = vpop.permute.xlu0 %2311
        %vm2313 = vcmp.lt.s32.totalorder %v301, 109
        %v2314 = vsel %vm2313, %v2310, %v2312
        %v2315 = vsel %vm2313, %v2308, %v2310
        %v2316 = vsel %vm2313, %v2312, %v2308
        %s2317 = sld [smem:[#allocation5 + $0xd]]
        %v2318 = vstv %s2317
        %v2319 = vmul.f32 %v2318, %v2315
        %v2320 = vmul.f32 %v2318, %v2314
        %v2321 = vmul.f32 %v2318, %v2316
        %v2322 = vld [vmem:[#allocation3] sm:$0x7]
        %v2326 = vcombine.low %v2319, %v2320
        %v2328 = vunpack.c.l.s4 1966171168
        %v2329 = vunpack.c.0.s8 %v2328
        %v2330 = vlaneseq
        %v2331 = vshrl.u32 %v2330, 7
        %v2332 = vsub.s32 %v2329, %v2331
        %v2333 = vrot.slane %v2326, %v2332
        %v2335 = vunpack.c.l.s4 1966171168
        %v2336 = vunpack.c.0.s8 %v2335
        %v2337 = vlaneseq
        %v2338 = vshrl.u32 %v2337, 7
        %v2339 = vsub.s32 %v2336, %v2338
        %v2340 = vrot.slane %v2321, %v2339
        %v2341 = vcombine.low %v2333, %v2340
        %v2343 = vunpack.c.l.s4 1966171168
        %v2344 = vunpack.c.0.s8 %v2343
        %v2345 = vlaneseq
        %v2346 = vshrl.u32 %v2345, 7
        %v2347 = vsub.s32 %v2344, %v2346
        %v2348 = vrot.slane %v2341, %v2347
        %v2350 = vadd.f32 %v2322, %v2348
        %2351 = vst.msk [vmem:[#allocation3] sm:$0x7] %vm340, %v2350
        %2352 = vrot.lane.b32.xlu0 %v2250, 93
        %v2353 = vpop.permute.xlu0 %2352
        %2354 = vrot.lane.b32.xlu0 %v2254, 93
        %v2355 = vpop.permute.xlu0 %2354
        %2356 = vrot.lane.b32.xlu0 %v2258, 93
        %v2357 = vpop.permute.xlu0 %2356
        %vm2358 = vcmp.lt.s32.totalorder %v301, 93
        %v2359 = vsel %vm2358, %v2355, %v2357
        %v2360 = vsel %vm2358, %v2353, %v2355
        %v2361 = vsel %vm2358, %v2357, %v2353
        %s2362 = sld [smem:[#allocation5 + $0x14]]
        %v2363 = vstv %s2362
        %v2364 = vmul.f32 %v2363, %v2360
        %v2365 = vmul.f32 %v2363, %v2359
        %v2366 = vmul.f32 %v2363, %v2361
        %v2367 = vld [vmem:[#allocation3] sm:$0x7]
        %v2371 = vcombine.low %v2364, %v2365
        %v2373 = vunpack.c.l.s4 1966171168
        %v2374 = vunpack.c.0.s8 %v2373
        %v2375 = vlaneseq
        %v2376 = vshrl.u32 %v2375, 7
        %v2377 = vsub.s32 %v2374, %v2376
        %v2378 = vrot.slane %v2371, %v2377
        %v2380 = vunpack.c.l.s4 1966171168
        %v2381 = vunpack.c.0.s8 %v2380
        %v2382 = vlaneseq
        %v2383 = vshrl.u32 %v2382, 7
        %v2384 = vsub.s32 %v2381, %v2383
        %v2385 = vrot.slane %v2366, %v2384
        %v2386 = vcombine.low %v2378, %v2385
        %v2388 = vunpack.c.l.s4 1966171168
        %v2389 = vunpack.c.0.s8 %v2388
        %v2390 = vlaneseq
        %v2391 = vshrl.u32 %v2390, 7
        %v2392 = vsub.s32 %v2389, %v2391
        %v2393 = vrot.slane %v2386, %v2392
        %v2395 = vadd.f32 %v2367, %v2393
        %2396 = vst.msk [vmem:[#allocation3] sm:$0x7] %vm340, %v2395
        %2397 = vrot.lane.b32.xlu0 %v2250, 77
        %v2398 = vpop.permute.xlu0 %2397
        %2399 = vrot.lane.b32.xlu0 %v2254, 77
        %v2400 = vpop.permute.xlu0 %2399
        %2401 = vrot.lane.b32.xlu0 %v2258, 77
        %v2402 = vpop.permute.xlu0 %2401
        %vm2403 = vcmp.lt.s32.totalorder %v301, 77
        %v2404 = vsel %vm2403, %v2400, %v2402
        %v2405 = vsel %vm2403, %v2398, %v2400
        %v2406 = vsel %vm2403, %v2402, %v2398
        %s2407 = sld [smem:[#allocation5 + $0x1b]]
        %v2408 = vstv %s2407
        %v2409 = vmul.f32 %v2408, %v2405
        %v2410 = vmul.f32 %v2408, %v2404
        %v2411 = vmul.f32 %v2408, %v2406
        %v2412 = vld [vmem:[#allocation3] sm:$0x7]
        %v2416 = vcombine.low %v2409, %v2410
        %v2418 = vunpack.c.l.s4 1966171168
        %v2419 = vunpack.c.0.s8 %v2418
        %v2420 = vlaneseq
        %v2421 = vshrl.u32 %v2420, 7
        %v2422 = vsub.s32 %v2419, %v2421
        %v2423 = vrot.slane %v2416, %v2422
        %v2425 = vunpack.c.l.s4 1966171168
        %v2426 = vunpack.c.0.s8 %v2425
        %v2427 = vlaneseq
        %v2428 = vshrl.u32 %v2427, 7
        %v2429 = vsub.s32 %v2426, %v2428
        %v2430 = vrot.slane %v2411, %v2429
        %v2431 = vcombine.low %v2423, %v2430
        %v2433 = vunpack.c.l.s4 1966171168
        %v2434 = vunpack.c.0.s8 %v2433
        %v2435 = vlaneseq
        %v2436 = vshrl.u32 %v2435, 7
        %v2437 = vsub.s32 %v2434, %v2436
        %v2438 = vrot.slane %v2431, %v2437
        %v2440 = vadd.f32 %v2412, %v2438
        %2441 = vst.msk [vmem:[#allocation3] sm:$0x7] %vm340, %v2440
        %2442 = vrot.lane.b32.xlu0 %v2250, 61
        %v2443 = vpop.permute.xlu0 %2442
        %2444 = vrot.lane.b32.xlu0 %v2254, 61
        %v2445 = vpop.permute.xlu0 %2444
        %2446 = vrot.lane.b32.xlu0 %v2258, 61
        %v2447 = vpop.permute.xlu0 %2446
        %vm2448 = vcmp.lt.s32.totalorder %v301, 61
        %v2449 = vsel %vm2448, %v2445, %v2447
        %v2450 = vsel %vm2448, %v2443, %v2445
        %v2451 = vsel %vm2448, %v2447, %v2443
        %s2452 = sld [smem:[#allocation5 + $0x22]]
        %v2453 = vstv %s2452
        %v2454 = vmul.f32 %v2453, %v2450
        %v2455 = vmul.f32 %v2453, %v2449
        %v2456 = vmul.f32 %v2453, %v2451
        %v2457 = vld [vmem:[#allocation3] sm:$0x7]
        %v2461 = vcombine.low %v2454, %v2455
        %v2463 = vunpack.c.l.s4 1966171168
        %v2464 = vunpack.c.0.s8 %v2463
        %v2465 = vlaneseq
        %v2466 = vshrl.u32 %v2465, 7
        %v2467 = vsub.s32 %v2464, %v2466
        %v2468 = vrot.slane %v2461, %v2467
        %v2470 = vunpack.c.l.s4 1966171168
        %v2471 = vunpack.c.0.s8 %v2470
        %v2472 = vlaneseq
        %v2473 = vshrl.u32 %v2472, 7
        %v2474 = vsub.s32 %v2471, %v2473
        %v2475 = vrot.slane %v2456, %v2474
        %v2476 = vcombine.low %v2468, %v2475
        %v2478 = vunpack.c.l.s4 1966171168
        %v2479 = vunpack.c.0.s8 %v2478
        %v2480 = vlaneseq
        %v2481 = vshrl.u32 %v2480, 7
        %v2482 = vsub.s32 %v2479, %v2481
        %v2483 = vrot.slane %v2476, %v2482
        %v2485 = vadd.f32 %v2457, %v2483
        %2486 = vst.msk [vmem:[#allocation3] sm:$0x7] %vm340, %v2485
        %2487 = vrot.lane.b32.xlu0 %v2250, 45
        %v2488 = vpop.permute.xlu0 %2487
        %2489 = vrot.lane.b32.xlu0 %v2254, 45
        %v2490 = vpop.permute.xlu0 %2489
        %2491 = vrot.lane.b32.xlu0 %v2258, 45
        %v2492 = vpop.permute.xlu0 %2491
        %vm2493 = vcmp.lt.s32.totalorder %v301, 45
        %v2494 = vsel %vm2493, %v2490, %v2492
        %v2495 = vsel %vm2493, %v2488, %v2490
        %v2496 = vsel %vm2493, %v2492, %v2488
        %s2497 = sld [smem:[#allocation5 + $0x29]]
        %v2498 = vstv %s2497
        %v2499 = vmul.f32 %v2498, %v2495
        %v2500 = vmul.f32 %v2498, %v2494
        %v2501 = vmul.f32 %v2498, %v2496
        %v2502 = vld [vmem:[#allocation3] sm:$0x7]
        %v2506 = vcombine.low %v2499, %v2500
        %v2508 = vunpack.c.l.s4 1966171168
        %v2509 = vunpack.c.0.s8 %v2508
        %v2510 = vlaneseq
        %v2511 = vshrl.u32 %v2510, 7
        %v2512 = vsub.s32 %v2509, %v2511
        %v2513 = vrot.slane %v2506, %v2512
        %v2515 = vunpack.c.l.s4 1966171168
        %v2516 = vunpack.c.0.s8 %v2515
        %v2517 = vlaneseq
        %v2518 = vshrl.u32 %v2517, 7
        %v2519 = vsub.s32 %v2516, %v2518
        %v2520 = vrot.slane %v2501, %v2519
        %v2521 = vcombine.low %v2513, %v2520
        %v2523 = vunpack.c.l.s4 1966171168
        %v2524 = vunpack.c.0.s8 %v2523
        %v2525 = vlaneseq
        %v2526 = vshrl.u32 %v2525, 7
        %v2527 = vsub.s32 %v2524, %v2526
        %v2528 = vrot.slane %v2521, %v2527
        %v2530 = vadd.f32 %v2502, %v2528
        %2531 = vst.msk [vmem:[#allocation3] sm:$0x7] %vm340, %v2530
        %2532 = vrot.lane.b32.xlu0 %v2250, 29
        %v2533 = vpop.permute.xlu0 %2532
        %2534 = vrot.lane.b32.xlu0 %v2254, 29
        %v2535 = vpop.permute.xlu0 %2534
        %2536 = vrot.lane.b32.xlu0 %v2258, 29
        %v2537 = vpop.permute.xlu0 %2536
        %vm2538 = vcmp.lt.s32.totalorder %v301, 29
        %v2539 = vsel %vm2538, %v2535, %v2537
        %v2540 = vsel %vm2538, %v2533, %v2535
        %v2541 = vsel %vm2538, %v2537, %v2533
        %s2542 = sld [smem:[#allocation5 + $0x30]]
        %v2543 = vstv %s2542
        %v2544 = vmul.f32 %v2543, %v2540
        %v2545 = vmul.f32 %v2543, %v2539
        %v2546 = vmul.f32 %v2543, %v2541
        %v2547 = vld [vmem:[#allocation3] sm:$0x7]
        %v2551 = vcombine.low %v2544, %v2545
        %v2553 = vunpack.c.l.s4 1966171168
        %v2554 = vunpack.c.0.s8 %v2553
        %v2555 = vlaneseq
        %v2556 = vshrl.u32 %v2555, 7
        %v2557 = vsub.s32 %v2554, %v2556
        %v2558 = vrot.slane %v2551, %v2557
        %v2560 = vunpack.c.l.s4 1966171168
        %v2561 = vunpack.c.0.s8 %v2560
        %v2562 = vlaneseq
        %v2563 = vshrl.u32 %v2562, 7
        %v2564 = vsub.s32 %v2561, %v2563
        %v2565 = vrot.slane %v2546, %v2564
        %v2566 = vcombine.low %v2558, %v2565
        %v2568 = vunpack.c.l.s4 1966171168
        %v2569 = vunpack.c.0.s8 %v2568
        %v2570 = vlaneseq
        %v2571 = vshrl.u32 %v2570, 7
        %v2572 = vsub.s32 %v2569, %v2571
        %v2573 = vrot.slane %v2566, %v2572
        %v2575 = vadd.f32 %v2547, %v2573
        %2576 = vst.msk [vmem:[#allocation3] sm:$0x7] %vm340, %v2575
        %v2577 = vld [vmem:[%s273] ss:$2 sm:$0x7]
        %v2578 = vld [vmem:[%s1] ss:$8 sm:$0x7]
        %v2579 = vmul.f32 %v2577, %v2578
        %v2581 = vlaneseq
        %v2582 = vshrl.u32 %v2581, 7
        %v2583 = vsub.s32 0, %v2582
        %v2584 = vrot.slane %v2579, %v2583
        %v2585 = vlaneseq
        %v2586 = vshrl.u32 %v2585, 7
        %v2587 = vsub.s32 1, %v2586
        %v2588 = vrot.slane %v2579, %v2587
        %v2589 = vlaneseq
        %v2590 = vshrl.u32 %v2589, 7
        %v2591 = vsub.s32 2, %v2590
        %v2592 = vrot.slane %v2579, %v2591
        %2596 = vrot.lane.b32.xlu0 %v2584, 3
        %v2597 = vpop.permute.xlu0 %2596
        %2598 = vrot.lane.b32.xlu0 %v2588, 3
        %v2599 = vpop.permute.xlu0 %2598
        %2600 = vrot.lane.b32.xlu0 %v2592, 3
        %v2601 = vpop.permute.xlu0 %2600
        %v2602 = vsel %vm302, %v2599, %v2601
        %v2603 = vsel %vm302, %v2597, %v2599
        %v2604 = vsel %vm302, %v2601, %v2597
        %s2605 = sld [smem:[#allocation5 + $0x31]]
        %v2606 = vstv %s2605
        %v2607 = vmul.f32 %v2606, %v2604
        %v2608 = vmul.f32 %v2606, %v2603
        %v2609 = vmul.f32 %v2606, %v2602
        %v2610 = vld [vmem:[#allocation3] sm:$0x7]
        %v2614 = vcombine.low %v2607, %v2608
        %v2616 = vunpack.c.l.s4 1966171168
        %v2617 = vunpack.c.0.s8 %v2616
        %v2618 = vlaneseq
        %v2619 = vshrl.u32 %v2618, 7
        %v2620 = vsub.s32 %v2617, %v2619
        %v2621 = vrot.slane %v2614, %v2620
        %v2623 = vunpack.c.l.s4 1966171168
        %v2624 = vunpack.c.0.s8 %v2623
        %v2625 = vlaneseq
        %v2626 = vshrl.u32 %v2625, 7
        %v2627 = vsub.s32 %v2624, %v2626
        %v2628 = vrot.slane %v2609, %v2627
        %v2629 = vcombine.low %v2621, %v2628
        %v2631 = vunpack.c.l.s4 1966171168
        %v2632 = vunpack.c.0.s8 %v2631
        %v2633 = vlaneseq
        %v2634 = vshrl.u32 %v2633, 7
        %v2635 = vsub.s32 %v2632, %v2634
        %v2636 = vrot.slane %v2629, %v2635
        %v2638 = vadd.f32 %v2610, %v2636
        %2639 = vst.msk [vmem:[#allocation3] sm:$0x7] %vm340, %v2638
        %2640 = vrot.lane.b32.xlu0 %v2584, 115
        %v2641 = vpop.permute.xlu0 %2640
        %2642 = vrot.lane.b32.xlu0 %v2588, 115
        %v2643 = vpop.permute.xlu0 %2642
        %2644 = vrot.lane.b32.xlu0 %v2592, 115
        %v2645 = vpop.permute.xlu0 %2644
        %v2646 = vsel %vm348, %v2643, %v2645
        %v2647 = vsel %vm348, %v2641, %v2643
        %v2648 = vsel %vm348, %v2645, %v2641
        %s2649 = sld [smem:[#allocation5 + $0x38]]
        %v2650 = vstv %s2649
        %v2651 = vmul.f32 %v2650, %v2647
        %v2652 = vmul.f32 %v2650, %v2646
        %v2653 = vmul.f32 %v2650, %v2648
        %v2654 = vld [vmem:[#allocation3] sm:$0x7]
        %v2658 = vcombine.low %v2651, %v2652
        %v2660 = vunpack.c.l.s4 1966171168
        %v2661 = vunpack.c.0.s8 %v2660
        %v2662 = vlaneseq
        %v2663 = vshrl.u32 %v2662, 7
        %v2664 = vsub.s32 %v2661, %v2663
        %v2665 = vrot.slane %v2658, %v2664
        %v2667 = vunpack.c.l.s4 1966171168
        %v2668 = vunpack.c.0.s8 %v2667
        %v2669 = vlaneseq
        %v2670 = vshrl.u32 %v2669, 7
        %v2671 = vsub.s32 %v2668, %v2670
        %v2672 = vrot.slane %v2653, %v2671
        %v2673 = vcombine.low %v2665, %v2672
        %v2675 = vunpack.c.l.s4 1966171168
        %v2676 = vunpack.c.0.s8 %v2675
        %v2677 = vlaneseq
        %v2678 = vshrl.u32 %v2677, 7
        %v2679 = vsub.s32 %v2676, %v2678
        %v2680 = vrot.slane %v2673, %v2679
        %v2682 = vadd.f32 %v2654, %v2680
        %2683 = vst.msk [vmem:[#allocation3] sm:$0x7] %vm340, %v2682
        %2684 = vrot.lane.b32.xlu0 %v2584, 99
        %v2685 = vpop.permute.xlu0 %2684
        %2686 = vrot.lane.b32.xlu0 %v2588, 99
        %v2687 = vpop.permute.xlu0 %2686
        %2688 = vrot.lane.b32.xlu0 %v2592, 99
        %v2689 = vpop.permute.xlu0 %2688
        %v2690 = vsel %vm393, %v2687, %v2689
        %v2691 = vsel %vm393, %v2685, %v2687
        %v2692 = vsel %vm393, %v2689, %v2685
        %s2693 = sld [smem:[#allocation5 + $0x3f]]
        %v2694 = vstv %s2693
        %v2695 = vmul.f32 %v2694, %v2691
        %v2696 = vmul.f32 %v2694, %v2690
        %v2697 = vmul.f32 %v2694, %v2692
        %v2698 = vld [vmem:[#allocation3] sm:$0x7]
        %v2702 = vcombine.low %v2695, %v2696
        %v2704 = vunpack.c.l.s4 1966171168
        %v2705 = vunpack.c.0.s8 %v2704
        %v2706 = vlaneseq
        %v2707 = vshrl.u32 %v2706, 7
        %v2708 = vsub.s32 %v2705, %v2707
        %v2709 = vrot.slane %v2702, %v2708
        %v2711 = vunpack.c.l.s4 1966171168
        %v2712 = vunpack.c.0.s8 %v2711
        %v2713 = vlaneseq
        %v2714 = vshrl.u32 %v2713, 7
        %v2715 = vsub.s32 %v2712, %v2714
        %v2716 = vrot.slane %v2697, %v2715
        %v2717 = vcombine.low %v2709, %v2716
        %v2719 = vunpack.c.l.s4 1966171168
        %v2720 = vunpack.c.0.s8 %v2719
        %v2721 = vlaneseq
        %v2722 = vshrl.u32 %v2721, 7
        %v2723 = vsub.s32 %v2720, %v2722
        %v2724 = vrot.slane %v2717, %v2723
        %v2726 = vadd.f32 %v2698, %v2724
        %2727 = vst.msk [vmem:[#allocation3] sm:$0x7] %vm340, %v2726
        %2728 = vrot.lane.b32.xlu0 %v2584, 83
        %v2729 = vpop.permute.xlu0 %2728
        %2730 = vrot.lane.b32.xlu0 %v2588, 83
        %v2731 = vpop.permute.xlu0 %2730
        %2732 = vrot.lane.b32.xlu0 %v2592, 83
        %v2733 = vpop.permute.xlu0 %2732
        %v2734 = vsel %vm438, %v2731, %v2733
        %v2735 = vsel %vm438, %v2729, %v2731
        %v2736 = vsel %vm438, %v2733, %v2729
        %s2737 = sld [smem:[#allocation5 + $0x46]]
        %v2738 = vstv %s2737
        %v2739 = vmul.f32 %v2738, %v2735
        %v2740 = vmul.f32 %v2738, %v2734
        %v2741 = vmul.f32 %v2738, %v2736
        %v2742 = vld [vmem:[#allocation3] sm:$0x7]
        %v2746 = vcombine.low %v2739, %v2740
        %v2748 = vunpack.c.l.s4 1966171168
        %v2749 = vunpack.c.0.s8 %v2748
        %v2750 = vlaneseq
        %v2751 = vshrl.u32 %v2750, 7
        %v2752 = vsub.s32 %v2749, %v2751
        %v2753 = vrot.slane %v2746, %v2752
        %v2755 = vunpack.c.l.s4 1966171168
        %v2756 = vunpack.c.0.s8 %v2755
        %v2757 = vlaneseq
        %v2758 = vshrl.u32 %v2757, 7
        %v2759 = vsub.s32 %v2756, %v2758
        %v2760 = vrot.slane %v2741, %v2759
        %v2761 = vcombine.low %v2753, %v2760
        %v2763 = vunpack.c.l.s4 1966171168
        %v2764 = vunpack.c.0.s8 %v2763
        %v2765 = vlaneseq
        %v2766 = vshrl.u32 %v2765, 7
        %v2767 = vsub.s32 %v2764, %v2766
        %v2768 = vrot.slane %v2761, %v2767
        %v2770 = vadd.f32 %v2742, %v2768
        %2771 = vst.msk [vmem:[#allocation3] sm:$0x7] %vm340, %v2770
        %2772 = vrot.lane.b32.xlu0 %v2584, 67
        %v2773 = vpop.permute.xlu0 %2772
        %2774 = vrot.lane.b32.xlu0 %v2588, 67
        %v2775 = vpop.permute.xlu0 %2774
        %2776 = vrot.lane.b32.xlu0 %v2592, 67
        %v2777 = vpop.permute.xlu0 %2776
        %v2778 = vsel %vm483, %v2775, %v2777
        %v2779 = vsel %vm483, %v2773, %v2775
        %v2780 = vsel %vm483, %v2777, %v2773
        %s2781 = sld [smem:[#allocation5 + $0x4d]]
        %v2782 = vstv %s2781
        %v2783 = vmul.f32 %v2782, %v2779
        %v2784 = vmul.f32 %v2782, %v2778
        %v2785 = vmul.f32 %v2782, %v2780
        %v2786 = vld [vmem:[#allocation3] sm:$0x7]
        %v2790 = vcombine.low %v2783, %v2784
        %v2792 = vunpack.c.l.s4 1966171168
        %v2793 = vunpack.c.0.s8 %v2792
        %v2794 = vlaneseq
        %v2795 = vshrl.u32 %v2794, 7
        %v2796 = vsub.s32 %v2793, %v2795
        %v2797 = vrot.slane %v2790, %v2796
        %v2799 = vunpack.c.l.s4 1966171168
        %v2800 = vunpack.c.0.s8 %v2799
        %v2801 = vlaneseq
        %v2802 = vshrl.u32 %v2801, 7
        %v2803 = vsub.s32 %v2800, %v2802
        %v2804 = vrot.slane %v2785, %v2803
        %v2805 = vcombine.low %v2797, %v2804
        %v2807 = vunpack.c.l.s4 1966171168
        %v2808 = vunpack.c.0.s8 %v2807
        %v2809 = vlaneseq
        %v2810 = vshrl.u32 %v2809, 7
        %v2811 = vsub.s32 %v2808, %v2810
        %v2812 = vrot.slane %v2805, %v2811
        %v2814 = vadd.f32 %v2786, %v2812
        %2815 = vst.msk [vmem:[#allocation3] sm:$0x7] %vm340, %v2814
        %2816 = vrot.lane.b32.xlu0 %v2584, 51
        %v2817 = vpop.permute.xlu0 %2816
        %2818 = vrot.lane.b32.xlu0 %v2588, 51
        %v2819 = vpop.permute.xlu0 %2818
        %2820 = vrot.lane.b32.xlu0 %v2592, 51
        %v2821 = vpop.permute.xlu0 %2820
        %v2822 = vsel %vm528, %v2819, %v2821
        %v2823 = vsel %vm528, %v2817, %v2819
        %v2824 = vsel %vm528, %v2821, %v2817
        %s2825 = sld [smem:[#allocation5 + $0x54]]
        %v2826 = vstv %s2825
        %v2827 = vmul.f32 %v2826, %v2823
        %v2828 = vmul.f32 %v2826, %v2822
        %v2829 = vmul.f32 %v2826, %v2824
        %v2830 = vld [vmem:[#allocation3] sm:$0x7]
        %v2834 = vcombine.low %v2827, %v2828
        %v2836 = vunpack.c.l.s4 1966171168
        %v2837 = vunpack.c.0.s8 %v2836
        %v2838 = vlaneseq
        %v2839 = vshrl.u32 %v2838, 7
        %v2840 = vsub.s32 %v2837, %v2839
        %v2841 = vrot.slane %v2834, %v2840
        %v2843 = vunpack.c.l.s4 1966171168
        %v2844 = vunpack.c.0.s8 %v2843
        %v2845 = vlaneseq
        %v2846 = vshrl.u32 %v2845, 7
        %v2847 = vsub.s32 %v2844, %v2846
        %v2848 = vrot.slane %v2829, %v2847
        %v2849 = vcombine.low %v2841, %v2848
        %v2851 = vunpack.c.l.s4 1966171168
        %v2852 = vunpack.c.0.s8 %v2851
        %v2853 = vlaneseq
        %v2854 = vshrl.u32 %v2853, 7
        %v2855 = vsub.s32 %v2852, %v2854
        %v2856 = vrot.slane %v2849, %v2855
        %v2858 = vadd.f32 %v2830, %v2856
        %2859 = vst.msk [vmem:[#allocation3] sm:$0x7] %vm340, %v2858
        %2860 = vrot.lane.b32.xlu0 %v2584, 35
        %v2861 = vpop.permute.xlu0 %2860
        %2862 = vrot.lane.b32.xlu0 %v2588, 35
        %v2863 = vpop.permute.xlu0 %2862
        %2864 = vrot.lane.b32.xlu0 %v2592, 35
        %v2865 = vpop.permute.xlu0 %2864
        %v2866 = vsel %vm573, %v2863, %v2865
        %v2867 = vsel %vm573, %v2861, %v2863
        %v2868 = vsel %vm573, %v2865, %v2861
        %s2869 = sld [smem:[#allocation5 + $0x5b]]
        %v2870 = vstv %s2869
        %v2871 = vmul.f32 %v2870, %v2867
        %v2872 = vmul.f32 %v2870, %v2866
        %v2873 = vmul.f32 %v2870, %v2868
        %v2874 = vld [vmem:[#allocation3] sm:$0x7]
        %v2878 = vcombine.low %v2871, %v2872
        %v2880 = vunpack.c.l.s4 1966171168
        %v2881 = vunpack.c.0.s8 %v2880
        %v2882 = vlaneseq
        %v2883 = vshrl.u32 %v2882, 7
        %v2884 = vsub.s32 %v2881, %v2883
        %v2885 = vrot.slane %v2878, %v2884
        %v2887 = vunpack.c.l.s4 1966171168
        %v2888 = vunpack.c.0.s8 %v2887
        %v2889 = vlaneseq
        %v2890 = vshrl.u32 %v2889, 7
        %v2891 = vsub.s32 %v2888, %v2890
        %v2892 = vrot.slane %v2873, %v2891
        %v2893 = vcombine.low %v2885, %v2892
        %v2895 = vunpack.c.l.s4 1966171168
        %v2896 = vunpack.c.0.s8 %v2895
        %v2897 = vlaneseq
        %v2898 = vshrl.u32 %v2897, 7
        %v2899 = vsub.s32 %v2896, %v2898
        %v2900 = vrot.slane %v2893, %v2899
        %v2902 = vadd.f32 %v2874, %v2900
        %2903 = vst.msk [vmem:[#allocation3] sm:$0x7] %vm340, %v2902
        %v2904 = vld [vmem:[%s612] ss:$8 sm:$0x7]
        %v2905 = vmul.f32 %v2577, %v2904
        %v2907 = vlaneseq
        %v2908 = vshrl.u32 %v2907, 7
        %v2909 = vsub.s32 0, %v2908
        %v2910 = vrot.slane %v2905, %v2909
        %v2911 = vlaneseq
        %v2912 = vshrl.u32 %v2911, 7
        %v2913 = vsub.s32 1, %v2912
        %v2914 = vrot.slane %v2905, %v2913
        %v2915 = vlaneseq
        %v2916 = vshrl.u32 %v2915, 7
        %v2917 = vsub.s32 2, %v2916
        %v2918 = vrot.slane %v2905, %v2917
        %2922 = vrot.lane.b32.xlu0 %v2910, 2
        %v2923 = vpop.permute.xlu0 %2922
        %2924 = vrot.lane.b32.xlu0 %v2914, 2
        %v2925 = vpop.permute.xlu0 %2924
        %2926 = vrot.lane.b32.xlu0 %v2918, 2
        %v2927 = vpop.permute.xlu0 %2926
        %v2928 = vsel %vm637, %v2925, %v2927
        %v2929 = vsel %vm637, %v2923, %v2925
        %v2930 = vsel %vm637, %v2927, %v2923
        %s2931 = sld [smem:[#allocation5 + $0x32]]
        %v2932 = vstv %s2931
        %v2933 = vmul.f32 %v2932, %v2930
        %v2934 = vmul.f32 %v2932, %v2929
        %v2935 = vmul.f32 %v2932, %v2928
        %v2936 = vld [vmem:[#allocation3] sm:$0x7]
        %v2940 = vcombine.low %v2933, %v2934
        %v2942 = vunpack.c.l.s4 1966171168
        %v2943 = vunpack.c.0.s8 %v2942
        %v2944 = vlaneseq
        %v2945 = vshrl.u32 %v2944, 7
        %v2946 = vsub.s32 %v2943, %v2945
        %v2947 = vrot.slane %v2940, %v2946
        %v2949 = vunpack.c.l.s4 1966171168
        %v2950 = vunpack.c.0.s8 %v2949
        %v2951 = vlaneseq
        %v2952 = vshrl.u32 %v2951, 7
        %v2953 = vsub.s32 %v2950, %v2952
        %v2954 = vrot.slane %v2935, %v2953
        %v2955 = vcombine.low %v2947, %v2954
        %v2957 = vunpack.c.l.s4 1966171168
        %v2958 = vunpack.c.0.s8 %v2957
        %v2959 = vlaneseq
        %v2960 = vshrl.u32 %v2959, 7
        %v2961 = vsub.s32 %v2958, %v2960
        %v2962 = vrot.slane %v2955, %v2961
        %v2964 = vadd.f32 %v2936, %v2962
        %2965 = vst.msk [vmem:[#allocation3] sm:$0x7] %vm340, %v2964
        %2966 = vrot.lane.b32.xlu0 %v2910, 114
        %v2967 = vpop.permute.xlu0 %2966
        %2968 = vrot.lane.b32.xlu0 %v2914, 114
        %v2969 = vpop.permute.xlu0 %2968
        %2970 = vrot.lane.b32.xlu0 %v2918, 114
        %v2971 = vpop.permute.xlu0 %2970
        %v2972 = vsel %vm682, %v2969, %v2971
        %v2973 = vsel %vm682, %v2967, %v2969
        %v2974 = vsel %vm682, %v2971, %v2967
        %s2975 = sld [smem:[#allocation5 + $0x39]]
        %v2976 = vstv %s2975
        %v2977 = vmul.f32 %v2976, %v2973
        %v2978 = vmul.f32 %v2976, %v2972
        %v2979 = vmul.f32 %v2976, %v2974
        %v2980 = vld [vmem:[#allocation3] sm:$0x7]
        %v2984 = vcombine.low %v2977, %v2978
        %v2986 = vunpack.c.l.s4 1966171168
        %v2987 = vunpack.c.0.s8 %v2986
        %v2988 = vlaneseq
        %v2989 = vshrl.u32 %v2988, 7
        %v2990 = vsub.s32 %v2987, %v2989
        %v2991 = vrot.slane %v2984, %v2990
        %v2993 = vunpack.c.l.s4 1966171168
        %v2994 = vunpack.c.0.s8 %v2993
        %v2995 = vlaneseq
        %v2996 = vshrl.u32 %v2995, 7
        %v2997 = vsub.s32 %v2994, %v2996
        %v2998 = vrot.slane %v2979, %v2997
        %v2999 = vcombine.low %v2991, %v2998
        %v3001 = vunpack.c.l.s4 1966171168
        %v3002 = vunpack.c.0.s8 %v3001
        %v3003 = vlaneseq
        %v3004 = vshrl.u32 %v3003, 7
        %v3005 = vsub.s32 %v3002, %v3004
        %v3006 = vrot.slane %v2999, %v3005
        %v3008 = vadd.f32 %v2980, %v3006
        %3009 = vst.msk [vmem:[#allocation3] sm:$0x7] %vm340, %v3008
        %3010 = vrot.lane.b32.xlu0 %v2910, 98
        %v3011 = vpop.permute.xlu0 %3010
        %3012 = vrot.lane.b32.xlu0 %v2914, 98
        %v3013 = vpop.permute.xlu0 %3012
        %3014 = vrot.lane.b32.xlu0 %v2918, 98
        %v3015 = vpop.permute.xlu0 %3014
        %v3016 = vsel %vm727, %v3013, %v3015
        %v3017 = vsel %vm727, %v3011, %v3013
        %v3018 = vsel %vm727, %v3015, %v3011
        %s3019 = sld [smem:[#allocation5 + $0x40]]
        %v3020 = vstv %s3019
        %v3021 = vmul.f32 %v3020, %v3017
        %v3022 = vmul.f32 %v3020, %v3016
        %v3023 = vmul.f32 %v3020, %v3018
        %v3024 = vld [vmem:[#allocation3] sm:$0x7]
        %v3028 = vcombine.low %v3021, %v3022
        %v3030 = vunpack.c.l.s4 1966171168
        %v3031 = vunpack.c.0.s8 %v3030
        %v3032 = vlaneseq
        %v3033 = vshrl.u32 %v3032, 7
        %v3034 = vsub.s32 %v3031, %v3033
        %v3035 = vrot.slane %v3028, %v3034
        %v3037 = vunpack.c.l.s4 1966171168
        %v3038 = vunpack.c.0.s8 %v3037
        %v3039 = vlaneseq
        %v3040 = vshrl.u32 %v3039, 7
        %v3041 = vsub.s32 %v3038, %v3040
        %v3042 = vrot.slane %v3023, %v3041
        %v3043 = vcombine.low %v3035, %v3042
        %v3045 = vunpack.c.l.s4 1966171168
        %v3046 = vunpack.c.0.s8 %v3045
        %v3047 = vlaneseq
        %v3048 = vshrl.u32 %v3047, 7
        %v3049 = vsub.s32 %v3046, %v3048
        %v3050 = vrot.slane %v3043, %v3049
        %v3052 = vadd.f32 %v3024, %v3050
        %3053 = vst.msk [vmem:[#allocation3] sm:$0x7] %vm340, %v3052
        %3054 = vrot.lane.b32.xlu0 %v2910, 82
        %v3055 = vpop.permute.xlu0 %3054
        %3056 = vrot.lane.b32.xlu0 %v2914, 82
        %v3057 = vpop.permute.xlu0 %3056
        %3058 = vrot.lane.b32.xlu0 %v2918, 82
        %v3059 = vpop.permute.xlu0 %3058
        %v3060 = vsel %vm772, %v3057, %v3059
        %v3061 = vsel %vm772, %v3055, %v3057
        %v3062 = vsel %vm772, %v3059, %v3055
        %s3063 = sld [smem:[#allocation5 + $0x47]]
        %v3064 = vstv %s3063
        %v3065 = vmul.f32 %v3064, %v3061
        %v3066 = vmul.f32 %v3064, %v3060
        %v3067 = vmul.f32 %v3064, %v3062
        %v3068 = vld [vmem:[#allocation3] sm:$0x7]
        %v3072 = vcombine.low %v3065, %v3066
        %v3074 = vunpack.c.l.s4 1966171168
        %v3075 = vunpack.c.0.s8 %v3074
        %v3076 = vlaneseq
        %v3077 = vshrl.u32 %v3076, 7
        %v3078 = vsub.s32 %v3075, %v3077
        %v3079 = vrot.slane %v3072, %v3078
        %v3081 = vunpack.c.l.s4 1966171168
        %v3082 = vunpack.c.0.s8 %v3081
        %v3083 = vlaneseq
        %v3084 = vshrl.u32 %v3083, 7
        %v3085 = vsub.s32 %v3082, %v3084
        %v3086 = vrot.slane %v3067, %v3085
        %v3087 = vcombine.low %v3079, %v3086
        %v3089 = vunpack.c.l.s4 1966171168
        %v3090 = vunpack.c.0.s8 %v3089
        %v3091 = vlaneseq
        %v3092 = vshrl.u32 %v3091, 7
        %v3093 = vsub.s32 %v3090, %v3092
        %v3094 = vrot.slane %v3087, %v3093
        %v3096 = vadd.f32 %v3068, %v3094
        %3097 = vst.msk [vmem:[#allocation3] sm:$0x7] %vm340, %v3096
        %3098 = vrot.lane.b32.xlu0 %v2910, 66
        %v3099 = vpop.permute.xlu0 %3098
        %3100 = vrot.lane.b32.xlu0 %v2914, 66
        %v3101 = vpop.permute.xlu0 %3100
        %3102 = vrot.lane.b32.xlu0 %v2918, 66
        %v3103 = vpop.permute.xlu0 %3102
        %v3104 = vsel %vm817, %v3101, %v3103
        %v3105 = vsel %vm817, %v3099, %v3101
        %v3106 = vsel %vm817, %v3103, %v3099
        %s3107 = sld [smem:[#allocation5 + $0x4e]]
        %v3108 = vstv %s3107
        %v3109 = vmul.f32 %v3108, %v3105
        %v3110 = vmul.f32 %v3108, %v3104
        %v3111 = vmul.f32 %v3108, %v3106
        %v3112 = vld [vmem:[#allocation3] sm:$0x7]
        %v3116 = vcombine.low %v3109, %v3110
        %v3118 = vunpack.c.l.s4 1966171168
        %v3119 = vunpack.c.0.s8 %v3118
        %v3120 = vlaneseq
        %v3121 = vshrl.u32 %v3120, 7
        %v3122 = vsub.s32 %v3119, %v3121
        %v3123 = vrot.slane %v3116, %v3122
        %v3125 = vunpack.c.l.s4 1966171168
        %v3126 = vunpack.c.0.s8 %v3125
        %v3127 = vlaneseq
        %v3128 = vshrl.u32 %v3127, 7
        %v3129 = vsub.s32 %v3126, %v3128
        %v3130 = vrot.slane %v3111, %v3129
        %v3131 = vcombine.low %v3123, %v3130
        %v3133 = vunpack.c.l.s4 1966171168
        %v3134 = vunpack.c.0.s8 %v3133
        %v3135 = vlaneseq
        %v3136 = vshrl.u32 %v3135, 7
        %v3137 = vsub.s32 %v3134, %v3136
        %v3138 = vrot.slane %v3131, %v3137
        %v3140 = vadd.f32 %v3112, %v3138
        %3141 = vst.msk [vmem:[#allocation3] sm:$0x7] %vm340, %v3140
        %3142 = vrot.lane.b32.xlu0 %v2910, 50
        %v3143 = vpop.permute.xlu0 %3142
        %3144 = vrot.lane.b32.xlu0 %v2914, 50
        %v3145 = vpop.permute.xlu0 %3144
        %3146 = vrot.lane.b32.xlu0 %v2918, 50
        %v3147 = vpop.permute.xlu0 %3146
        %v3148 = vsel %vm862, %v3145, %v3147
        %v3149 = vsel %vm862, %v3143, %v3145
        %v3150 = vsel %vm862, %v3147, %v3143
        %s3151 = sld [smem:[#allocation5 + $0x55]]
        %v3152 = vstv %s3151
        %v3153 = vmul.f32 %v3152, %v3149
        %v3154 = vmul.f32 %v3152, %v3148
        %v3155 = vmul.f32 %v3152, %v3150
        %v3156 = vld [vmem:[#allocation3] sm:$0x7]
        %v3160 = vcombine.low %v3153, %v3154
        %v3162 = vunpack.c.l.s4 1966171168
        %v3163 = vunpack.c.0.s8 %v3162
        %v3164 = vlaneseq
        %v3165 = vshrl.u32 %v3164, 7
        %v3166 = vsub.s32 %v3163, %v3165
        %v3167 = vrot.slane %v3160, %v3166
        %v3169 = vunpack.c.l.s4 1966171168
        %v3170 = vunpack.c.0.s8 %v3169
        %v3171 = vlaneseq
        %v3172 = vshrl.u32 %v3171, 7
        %v3173 = vsub.s32 %v3170, %v3172
        %v3174 = vrot.slane %v3155, %v3173
        %v3175 = vcombine.low %v3167, %v3174
        %v3177 = vunpack.c.l.s4 1966171168
        %v3178 = vunpack.c.0.s8 %v3177
        %v3179 = vlaneseq
        %v3180 = vshrl.u32 %v3179, 7
        %v3181 = vsub.s32 %v3178, %v3180
        %v3182 = vrot.slane %v3175, %v3181
        %v3184 = vadd.f32 %v3156, %v3182
        %3185 = vst.msk [vmem:[#allocation3] sm:$0x7] %vm340, %v3184
        %3186 = vrot.lane.b32.xlu0 %v2910, 34
        %v3187 = vpop.permute.xlu0 %3186
        %3188 = vrot.lane.b32.xlu0 %v2914, 34
        %v3189 = vpop.permute.xlu0 %3188
        %3190 = vrot.lane.b32.xlu0 %v2918, 34
        %v3191 = vpop.permute.xlu0 %3190
        %v3192 = vsel %vm907, %v3189, %v3191
        %v3193 = vsel %vm907, %v3187, %v3189
        %v3194 = vsel %vm907, %v3191, %v3187
        %s3195 = sld [smem:[#allocation5 + $0x5c]]
        %v3196 = vstv %s3195
        %v3197 = vmul.f32 %v3196, %v3193
        %v3198 = vmul.f32 %v3196, %v3192
        %v3199 = vmul.f32 %v3196, %v3194
        %v3200 = vld [vmem:[#allocation3] sm:$0x7]
        %v3204 = vcombine.low %v3197, %v3198
        %v3206 = vunpack.c.l.s4 1966171168
        %v3207 = vunpack.c.0.s8 %v3206
        %v3208 = vlaneseq
        %v3209 = vshrl.u32 %v3208, 7
        %v3210 = vsub.s32 %v3207, %v3209
        %v3211 = vrot.slane %v3204, %v3210
        %v3213 = vunpack.c.l.s4 1966171168
        %v3214 = vunpack.c.0.s8 %v3213
        %v3215 = vlaneseq
        %v3216 = vshrl.u32 %v3215, 7
        %v3217 = vsub.s32 %v3214, %v3216
        %v3218 = vrot.slane %v3199, %v3217
        %v3219 = vcombine.low %v3211, %v3218
        %v3221 = vunpack.c.l.s4 1966171168
        %v3222 = vunpack.c.0.s8 %v3221
        %v3223 = vlaneseq
        %v3224 = vshrl.u32 %v3223, 7
        %v3225 = vsub.s32 %v3222, %v3224
        %v3226 = vrot.slane %v3219, %v3225
        %v3228 = vadd.f32 %v3200, %v3226
        %3229 = vst.msk [vmem:[#allocation3] sm:$0x7] %vm340, %v3228
        %v3230 = vld [vmem:[%s946] ss:$8 sm:$0x7]
        %v3231 = vmul.f32 %v2577, %v3230
        %v3233 = vlaneseq
        %v3234 = vshrl.u32 %v3233, 7
        %v3235 = vsub.s32 0, %v3234
        %v3236 = vrot.slane %v3231, %v3235
        %v3237 = vlaneseq
        %v3238 = vshrl.u32 %v3237, 7
        %v3239 = vsub.s32 1, %v3238
        %v3240 = vrot.slane %v3231, %v3239
        %v3241 = vlaneseq
        %v3242 = vshrl.u32 %v3241, 7
        %v3243 = vsub.s32 2, %v3242
        %v3244 = vrot.slane %v3231, %v3243
        %3248 = vrot.lane.b32.xlu0 %v3236, 1
        %v3249 = vpop.permute.xlu0 %3248
        %3250 = vrot.lane.b32.xlu0 %v3240, 1
        %v3251 = vpop.permute.xlu0 %3250
        %3252 = vrot.lane.b32.xlu0 %v3244, 1
        %v3253 = vpop.permute.xlu0 %3252
        %v3254 = vsel %vm971, %v3251, %v3253
        %v3255 = vsel %vm971, %v3249, %v3251
        %v3256 = vsel %vm971, %v3253, %v3249
        %s3257 = sld [smem:[#allocation5 + $0x33]]
        %v3258 = vstv %s3257
        %v3259 = vmul.f32 %v3258, %v3256
        %v3260 = vmul.f32 %v3258, %v3255
        %v3261 = vmul.f32 %v3258, %v3254
        %v3262 = vld [vmem:[#allocation3] sm:$0x7]
        %v3266 = vcombine.low %v3259, %v3260
        %v3268 = vunpack.c.l.s4 1966171168
        %v3269 = vunpack.c.0.s8 %v3268
        %v3270 = vlaneseq
        %v3271 = vshrl.u32 %v3270, 7
        %v3272 = vsub.s32 %v3269, %v3271
        %v3273 = vrot.slane %v3266, %v3272
        %v3275 = vunpack.c.l.s4 1966171168
        %v3276 = vunpack.c.0.s8 %v3275
        %v3277 = vlaneseq
        %v3278 = vshrl.u32 %v3277, 7
        %v3279 = vsub.s32 %v3276, %v3278
        %v3280 = vrot.slane %v3261, %v3279
        %v3281 = vcombine.low %v3273, %v3280
        %v3283 = vunpack.c.l.s4 1966171168
        %v3284 = vunpack.c.0.s8 %v3283
        %v3285 = vlaneseq
        %v3286 = vshrl.u32 %v3285, 7
        %v3287 = vsub.s32 %v3284, %v3286
        %v3288 = vrot.slane %v3281, %v3287
        %v3290 = vadd.f32 %v3262, %v3288
        %3291 = vst.msk [vmem:[#allocation3] sm:$0x7] %vm340, %v3290
        %3292 = vrot.lane.b32.xlu0 %v3236, 113
        %v3293 = vpop.permute.xlu0 %3292
        %3294 = vrot.lane.b32.xlu0 %v3240, 113
        %v3295 = vpop.permute.xlu0 %3294
        %3296 = vrot.lane.b32.xlu0 %v3244, 113
        %v3297 = vpop.permute.xlu0 %3296
        %v3298 = vsel %vm1016, %v3295, %v3297
        %v3299 = vsel %vm1016, %v3293, %v3295
        %v3300 = vsel %vm1016, %v3297, %v3293
        %s3301 = sld [smem:[#allocation5 + $0x3a]]
        %v3302 = vstv %s3301
        %v3303 = vmul.f32 %v3302, %v3299
        %v3304 = vmul.f32 %v3302, %v3298
        %v3305 = vmul.f32 %v3302, %v3300
        %v3306 = vld [vmem:[#allocation3] sm:$0x7]
        %v3310 = vcombine.low %v3303, %v3304
        %v3312 = vunpack.c.l.s4 1966171168
        %v3313 = vunpack.c.0.s8 %v3312
        %v3314 = vlaneseq
        %v3315 = vshrl.u32 %v3314, 7
        %v3316 = vsub.s32 %v3313, %v3315
        %v3317 = vrot.slane %v3310, %v3316
        %v3319 = vunpack.c.l.s4 1966171168
        %v3320 = vunpack.c.0.s8 %v3319
        %v3321 = vlaneseq
        %v3322 = vshrl.u32 %v3321, 7
        %v3323 = vsub.s32 %v3320, %v3322
        %v3324 = vrot.slane %v3305, %v3323
        %v3325 = vcombine.low %v3317, %v3324
        %v3327 = vunpack.c.l.s4 1966171168
        %v3328 = vunpack.c.0.s8 %v3327
        %v3329 = vlaneseq
        %v3330 = vshrl.u32 %v3329, 7
        %v3331 = vsub.s32 %v3328, %v3330
        %v3332 = vrot.slane %v3325, %v3331
        %v3334 = vadd.f32 %v3306, %v3332
        %3335 = vst.msk [vmem:[#allocation3] sm:$0x7] %vm340, %v3334
        %3336 = vrot.lane.b32.xlu0 %v3236, 97
        %v3337 = vpop.permute.xlu0 %3336
        %3338 = vrot.lane.b32.xlu0 %v3240, 97
        %v3339 = vpop.permute.xlu0 %3338
        %3340 = vrot.lane.b32.xlu0 %v3244, 97
        %v3341 = vpop.permute.xlu0 %3340
        %v3342 = vsel %vm1061, %v3339, %v3341
        %v3343 = vsel %vm1061, %v3337, %v3339
        %v3344 = vsel %vm1061, %v3341, %v3337
        %s3345 = sld [smem:[#allocation5 + $0x41]]
        %v3346 = vstv %s3345
        %v3347 = vmul.f32 %v3346, %v3343
        %v3348 = vmul.f32 %v3346, %v3342
        %v3349 = vmul.f32 %v3346, %v3344
        %v3350 = vld [vmem:[#allocation3] sm:$0x7]
        %v3354 = vcombine.low %v3347, %v3348
        %v3356 = vunpack.c.l.s4 1966171168
        %v3357 = vunpack.c.0.s8 %v3356
        %v3358 = vlaneseq
        %v3359 = vshrl.u32 %v3358, 7
        %v3360 = vsub.s32 %v3357, %v3359
        %v3361 = vrot.slane %v3354, %v3360
        %v3363 = vunpack.c.l.s4 1966171168
        %v3364 = vunpack.c.0.s8 %v3363
        %v3365 = vlaneseq
        %v3366 = vshrl.u32 %v3365, 7
        %v3367 = vsub.s32 %v3364, %v3366
        %v3368 = vrot.slane %v3349, %v3367
        %v3369 = vcombine.low %v3361, %v3368
        %v3371 = vunpack.c.l.s4 1966171168
        %v3372 = vunpack.c.0.s8 %v3371
        %v3373 = vlaneseq
        %v3374 = vshrl.u32 %v3373, 7
        %v3375 = vsub.s32 %v3372, %v3374
        %v3376 = vrot.slane %v3369, %v3375
        %v3378 = vadd.f32 %v3350, %v3376
        %3379 = vst.msk [vmem:[#allocation3] sm:$0x7] %vm340, %v3378
        %3380 = vrot.lane.b32.xlu0 %v3236, 81
        %v3381 = vpop.permute.xlu0 %3380
        %3382 = vrot.lane.b32.xlu0 %v3240, 81
        %v3383 = vpop.permute.xlu0 %3382
        %3384 = vrot.lane.b32.xlu0 %v3244, 81
        %v3385 = vpop.permute.xlu0 %3384
        %v3386 = vsel %vm1106, %v3383, %v3385
        %v3387 = vsel %vm1106, %v3381, %v3383
        %v3388 = vsel %vm1106, %v3385, %v3381
        %s3389 = sld [smem:[#allocation5 + $0x48]]
        %v3390 = vstv %s3389
        %v3391 = vmul.f32 %v3390, %v3387
        %v3392 = vmul.f32 %v3390, %v3386
        %v3393 = vmul.f32 %v3390, %v3388
        %v3394 = vld [vmem:[#allocation3] sm:$0x7]
        %v3398 = vcombine.low %v3391, %v3392
        %v3400 = vunpack.c.l.s4 1966171168
        %v3401 = vunpack.c.0.s8 %v3400
        %v3402 = vlaneseq
        %v3403 = vshrl.u32 %v3402, 7
        %v3404 = vsub.s32 %v3401, %v3403
        %v3405 = vrot.slane %v3398, %v3404
        %v3407 = vunpack.c.l.s4 1966171168
        %v3408 = vunpack.c.0.s8 %v3407
        %v3409 = vlaneseq
        %v3410 = vshrl.u32 %v3409, 7
        %v3411 = vsub.s32 %v3408, %v3410
        %v3412 = vrot.slane %v3393, %v3411
        %v3413 = vcombine.low %v3405, %v3412
        %v3415 = vunpack.c.l.s4 1966171168
        %v3416 = vunpack.c.0.s8 %v3415
        %v3417 = vlaneseq
        %v3418 = vshrl.u32 %v3417, 7
        %v3419 = vsub.s32 %v3416, %v3418
        %v3420 = vrot.slane %v3413, %v3419
        %v3422 = vadd.f32 %v3394, %v3420
        %3423 = vst.msk [vmem:[#allocation3] sm:$0x7] %vm340, %v3422
        %3424 = vrot.lane.b32.xlu0 %v3236, 65
        %v3425 = vpop.permute.xlu0 %3424
        %3426 = vrot.lane.b32.xlu0 %v3240, 65
        %v3427 = vpop.permute.xlu0 %3426
        %3428 = vrot.lane.b32.xlu0 %v3244, 65
        %v3429 = vpop.permute.xlu0 %3428
        %v3430 = vsel %vm1151, %v3427, %v3429
        %v3431 = vsel %vm1151, %v3425, %v3427
        %v3432 = vsel %vm1151, %v3429, %v3425
        %s3433 = sld [smem:[#allocation5 + $0x4f]]
        %v3434 = vstv %s3433
        %v3435 = vmul.f32 %v3434, %v3431
        %v3436 = vmul.f32 %v3434, %v3430
        %v3437 = vmul.f32 %v3434, %v3432
        %v3438 = vld [vmem:[#allocation3] sm:$0x7]
        %v3442 = vcombine.low %v3435, %v3436
        %v3444 = vunpack.c.l.s4 1966171168
        %v3445 = vunpack.c.0.s8 %v3444
        %v3446 = vlaneseq
        %v3447 = vshrl.u32 %v3446, 7
        %v3448 = vsub.s32 %v3445, %v3447
        %v3449 = vrot.slane %v3442, %v3448
        %v3451 = vunpack.c.l.s4 1966171168
        %v3452 = vunpack.c.0.s8 %v3451
        %v3453 = vlaneseq
        %v3454 = vshrl.u32 %v3453, 7
        %v3455 = vsub.s32 %v3452, %v3454
        %v3456 = vrot.slane %v3437, %v3455
        %v3457 = vcombine.low %v3449, %v3456
        %v3459 = vunpack.c.l.s4 1966171168
        %v3460 = vunpack.c.0.s8 %v3459
        %v3461 = vlaneseq
        %v3462 = vshrl.u32 %v3461, 7
        %v3463 = vsub.s32 %v3460, %v3462
        %v3464 = vrot.slane %v3457, %v3463
        %v3466 = vadd.f32 %v3438, %v3464
        %3467 = vst.msk [vmem:[#allocation3] sm:$0x7] %vm340, %v3466
        %3468 = vrot.lane.b32.xlu0 %v3236, 49
        %v3469 = vpop.permute.xlu0 %3468
        %3470 = vrot.lane.b32.xlu0 %v3240, 49
        %v3471 = vpop.permute.xlu0 %3470
        %3472 = vrot.lane.b32.xlu0 %v3244, 49
        %v3473 = vpop.permute.xlu0 %3472
        %v3474 = vsel %vm1196, %v3471, %v3473
        %v3475 = vsel %vm1196, %v3469, %v3471
        %v3476 = vsel %vm1196, %v3473, %v3469
        %s3477 = sld [smem:[#allocation5 + $0x56]]
        %v3478 = vstv %s3477
        %v3479 = vmul.f32 %v3478, %v3475
        %v3480 = vmul.f32 %v3478, %v3474
        %v3481 = vmul.f32 %v3478, %v3476
        %v3482 = vld [vmem:[#allocation3] sm:$0x7]
        %v3486 = vcombine.low %v3479, %v3480
        %v3488 = vunpack.c.l.s4 1966171168
        %v3489 = vunpack.c.0.s8 %v3488
        %v3490 = vlaneseq
        %v3491 = vshrl.u32 %v3490, 7
        %v3492 = vsub.s32 %v3489, %v3491
        %v3493 = vrot.slane %v3486, %v3492
        %v3495 = vunpack.c.l.s4 1966171168
        %v3496 = vunpack.c.0.s8 %v3495
        %v3497 = vlaneseq
        %v3498 = vshrl.u32 %v3497, 7
        %v3499 = vsub.s32 %v3496, %v3498
        %v3500 = vrot.slane %v3481, %v3499
        %v3501 = vcombine.low %v3493, %v3500
        %v3503 = vunpack.c.l.s4 1966171168
        %v3504 = vunpack.c.0.s8 %v3503
        %v3505 = vlaneseq
        %v3506 = vshrl.u32 %v3505, 7
        %v3507 = vsub.s32 %v3504, %v3506
        %v3508 = vrot.slane %v3501, %v3507
        %v3510 = vadd.f32 %v3482, %v3508
        %3511 = vst.msk [vmem:[#allocation3] sm:$0x7] %vm340, %v3510
        %3512 = vrot.lane.b32.xlu0 %v3236, 33
        %v3513 = vpop.permute.xlu0 %3512
        %3514 = vrot.lane.b32.xlu0 %v3240, 33
        %v3515 = vpop.permute.xlu0 %3514
        %3516 = vrot.lane.b32.xlu0 %v3244, 33
        %v3517 = vpop.permute.xlu0 %3516
        %v3518 = vsel %vm1241, %v3515, %v3517
        %v3519 = vsel %vm1241, %v3513, %v3515
        %v3520 = vsel %vm1241, %v3517, %v3513
        %s3521 = sld [smem:[#allocation5 + $0x5d]]
        %v3522 = vstv %s3521
        %v3523 = vmul.f32 %v3522, %v3519
        %v3524 = vmul.f32 %v3522, %v3518
        %v3525 = vmul.f32 %v3522, %v3520
        %v3526 = vld [vmem:[#allocation3] sm:$0x7]
        %v3530 = vcombine.low %v3523, %v3524
        %v3532 = vunpack.c.l.s4 1966171168
        %v3533 = vunpack.c.0.s8 %v3532
        %v3534 = vlaneseq
        %v3535 = vshrl.u32 %v3534, 7
        %v3536 = vsub.s32 %v3533, %v3535
        %v3537 = vrot.slane %v3530, %v3536
        %v3539 = vunpack.c.l.s4 1966171168
        %v3540 = vunpack.c.0.s8 %v3539
        %v3541 = vlaneseq
        %v3542 = vshrl.u32 %v3541, 7
        %v3543 = vsub.s32 %v3540, %v3542
        %v3544 = vrot.slane %v3525, %v3543
        %v3545 = vcombine.low %v3537, %v3544
        %v3547 = vunpack.c.l.s4 1966171168
        %v3548 = vunpack.c.0.s8 %v3547
        %v3549 = vlaneseq
        %v3550 = vshrl.u32 %v3549, 7
        %v3551 = vsub.s32 %v3548, %v3550
        %v3552 = vrot.slane %v3545, %v3551
        %v3554 = vadd.f32 %v3526, %v3552
        %3555 = vst.msk [vmem:[#allocation3] sm:$0x7] %vm340, %v3554
        %v3556 = vld [vmem:[%s1280] ss:$8 sm:$0x7]
        %v3557 = vmul.f32 %v2577, %v3556
        %s3558 = sld [smem:[#allocation5 + $0x34]]
        %v3559 = vstv %s3558
        %v3560 = vmul.f32 %v3559, %v3557
        %v3561 = vld [vmem:[#allocation3] sm:$0x7]
        %v3562 = vadd.f32 %v3561, %v3560
        %3563 = vst.msk [vmem:[#allocation3] sm:$0x7] %vm340, %v3562
        %v3565 = vlaneseq
        %v3566 = vshrl.u32 %v3565, 7
        %v3567 = vsub.s32 0, %v3566
        %v3568 = vrot.slane %v3557, %v3567
        %v3569 = vlaneseq
        %v3570 = vshrl.u32 %v3569, 7
        %v3571 = vsub.s32 1, %v3570
        %v3572 = vrot.slane %v3557, %v3571
        %v3573 = vlaneseq
        %v3574 = vshrl.u32 %v3573, 7
        %v3575 = vsub.s32 2, %v3574
        %v3576 = vrot.slane %v3557, %v3575
        %3580 = vrot.lane.b32.xlu0 %v3568, 112
        %v3581 = vpop.permute.xlu0 %3580
        %3582 = vrot.lane.b32.xlu0 %v3572, 112
        %v3583 = vpop.permute.xlu0 %3582
        %3584 = vrot.lane.b32.xlu0 %v3576, 112
        %v3585 = vpop.permute.xlu0 %3584
        %v3586 = vsel %vm1311, %v3583, %v3585
        %v3587 = vsel %vm1311, %v3581, %v3583
        %v3588 = vsel %vm1311, %v3585, %v3581
        %s3589 = sld [smem:[#allocation5 + $0x3b]]
        %v3590 = vstv %s3589
        %v3591 = vmul.f32 %v3590, %v3587
        %v3592 = vmul.f32 %v3590, %v3586
        %v3593 = vmul.f32 %v3590, %v3588
        %v3594 = vld [vmem:[#allocation3] sm:$0x7]
        %v3598 = vcombine.low %v3591, %v3592
        %v3600 = vunpack.c.l.s4 1966171168
        %v3601 = vunpack.c.0.s8 %v3600
        %v3602 = vlaneseq
        %v3603 = vshrl.u32 %v3602, 7
        %v3604 = vsub.s32 %v3601, %v3603
        %v3605 = vrot.slane %v3598, %v3604
        %v3607 = vunpack.c.l.s4 1966171168
        %v3608 = vunpack.c.0.s8 %v3607
        %v3609 = vlaneseq
        %v3610 = vshrl.u32 %v3609, 7
        %v3611 = vsub.s32 %v3608, %v3610
        %v3612 = vrot.slane %v3593, %v3611
        %v3613 = vcombine.low %v3605, %v3612
        %v3615 = vunpack.c.l.s4 1966171168
        %v3616 = vunpack.c.0.s8 %v3615
        %v3617 = vlaneseq
        %v3618 = vshrl.u32 %v3617, 7
        %v3619 = vsub.s32 %v3616, %v3618
        %v3620 = vrot.slane %v3613, %v3619
        %v3622 = vadd.f32 %v3594, %v3620
        %3623 = vst.msk [vmem:[#allocation3] sm:$0x7] %vm340, %v3622
        %3624 = vrot.lane.b32.xlu0 %v3568, 96
        %v3625 = vpop.permute.xlu0 %3624
        %3626 = vrot.lane.b32.xlu0 %v3572, 96
        %v3627 = vpop.permute.xlu0 %3626
        %3628 = vrot.lane.b32.xlu0 %v3576, 96
        %v3629 = vpop.permute.xlu0 %3628
        %v3630 = vsel %vm1356, %v3627, %v3629
        %v3631 = vsel %vm1356, %v3625, %v3627
        %v3632 = vsel %vm1356, %v3629, %v3625
        %s3633 = sld [smem:[#allocation5 + $0x42]]
        %v3634 = vstv %s3633
        %v3635 = vmul.f32 %v3634, %v3631
        %v3636 = vmul.f32 %v3634, %v3630
        %v3637 = vmul.f32 %v3634, %v3632
        %v3638 = vld [vmem:[#allocation3] sm:$0x7]
        %v3642 = vcombine.low %v3635, %v3636
        %v3644 = vunpack.c.l.s4 1966171168
        %v3645 = vunpack.c.0.s8 %v3644
        %v3646 = vlaneseq
        %v3647 = vshrl.u32 %v3646, 7
        %v3648 = vsub.s32 %v3645, %v3647
        %v3649 = vrot.slane %v3642, %v3648
        %v3651 = vunpack.c.l.s4 1966171168
        %v3652 = vunpack.c.0.s8 %v3651
        %v3653 = vlaneseq
        %v3654 = vshrl.u32 %v3653, 7
        %v3655 = vsub.s32 %v3652, %v3654
        %v3656 = vrot.slane %v3637, %v3655
        %v3657 = vcombine.low %v3649, %v3656
        %v3659 = vunpack.c.l.s4 1966171168
        %v3660 = vunpack.c.0.s8 %v3659
        %v3661 = vlaneseq
        %v3662 = vshrl.u32 %v3661, 7
        %v3663 = vsub.s32 %v3660, %v3662
        %v3664 = vrot.slane %v3657, %v3663
        %v3666 = vadd.f32 %v3638, %v3664
        %3667 = vst.msk [vmem:[#allocation3] sm:$0x7] %vm340, %v3666
        %3668 = vrot.lane.b32.xlu0 %v3568, 80
        %v3669 = vpop.permute.xlu0 %3668
        %3670 = vrot.lane.b32.xlu0 %v3572, 80
        %v3671 = vpop.permute.xlu0 %3670
        %3672 = vrot.lane.b32.xlu0 %v3576, 80
        %v3673 = vpop.permute.xlu0 %3672
        %v3674 = vsel %vm1401, %v3671, %v3673
        %v3675 = vsel %vm1401, %v3669, %v3671
        %v3676 = vsel %vm1401, %v3673, %v3669
        %s3677 = sld [smem:[#allocation5 + $0x49]]
        %v3678 = vstv %s3677
        %v3679 = vmul.f32 %v3678, %v3675
        %v3680 = vmul.f32 %v3678, %v3674
        %v3681 = vmul.f32 %v3678, %v3676
        %v3682 = vld [vmem:[#allocation3] sm:$0x7]
        %v3686 = vcombine.low %v3679, %v3680
        %v3688 = vunpack.c.l.s4 1966171168
        %v3689 = vunpack.c.0.s8 %v3688
        %v3690 = vlaneseq
        %v3691 = vshrl.u32 %v3690, 7
        %v3692 = vsub.s32 %v3689, %v3691
        %v3693 = vrot.slane %v3686, %v3692
        %v3695 = vunpack.c.l.s4 1966171168
        %v3696 = vunpack.c.0.s8 %v3695
        %v3697 = vlaneseq
        %v3698 = vshrl.u32 %v3697, 7
        %v3699 = vsub.s32 %v3696, %v3698
        %v3700 = vrot.slane %v3681, %v3699
        %v3701 = vcombine.low %v3693, %v3700
        %v3703 = vunpack.c.l.s4 1966171168
        %v3704 = vunpack.c.0.s8 %v3703
        %v3705 = vlaneseq
        %v3706 = vshrl.u32 %v3705, 7
        %v3707 = vsub.s32 %v3704, %v3706
        %v3708 = vrot.slane %v3701, %v3707
        %v3710 = vadd.f32 %v3682, %v3708
        %3711 = vst.msk [vmem:[#allocation3] sm:$0x7] %vm340, %v3710
        %3712 = vrot.lane.b32.xlu0 %v3568, 64
        %v3713 = vpop.permute.xlu0 %3712
        %3714 = vrot.lane.b32.xlu0 %v3572, 64
        %v3715 = vpop.permute.xlu0 %3714
        %3716 = vrot.lane.b32.xlu0 %v3576, 64
        %v3717 = vpop.permute.xlu0 %3716
        %v3718 = vsel %vm1446, %v3715, %v3717
        %v3719 = vsel %vm1446, %v3713, %v3715
        %v3720 = vsel %vm1446, %v3717, %v3713
        %s3721 = sld [smem:[#allocation5 + $0x50]]
        %v3722 = vstv %s3721
        %v3723 = vmul.f32 %v3722, %v3719
        %v3724 = vmul.f32 %v3722, %v3718
        %v3725 = vmul.f32 %v3722, %v3720
        %v3726 = vld [vmem:[#allocation3] sm:$0x7]
        %v3730 = vcombine.low %v3723, %v3724
        %v3732 = vunpack.c.l.s4 1966171168
        %v3733 = vunpack.c.0.s8 %v3732
        %v3734 = vlaneseq
        %v3735 = vshrl.u32 %v3734, 7
        %v3736 = vsub.s32 %v3733, %v3735
        %v3737 = vrot.slane %v3730, %v3736
        %v3739 = vunpack.c.l.s4 1966171168
        %v3740 = vunpack.c.0.s8 %v3739
        %v3741 = vlaneseq
        %v3742 = vshrl.u32 %v3741, 7
        %v3743 = vsub.s32 %v3740, %v3742
        %v3744 = vrot.slane %v3725, %v3743
        %v3745 = vcombine.low %v3737, %v3744
        %v3747 = vunpack.c.l.s4 1966171168
        %v3748 = vunpack.c.0.s8 %v3747
        %v3749 = vlaneseq
        %v3750 = vshrl.u32 %v3749, 7
        %v3751 = vsub.s32 %v3748, %v3750
        %v3752 = vrot.slane %v3745, %v3751
        %v3754 = vadd.f32 %v3726, %v3752
        %3755 = vst.msk [vmem:[#allocation3] sm:$0x7] %vm340, %v3754
        %3756 = vrot.lane.b32.xlu0 %v3568, 48
        %v3757 = vpop.permute.xlu0 %3756
        %3758 = vrot.lane.b32.xlu0 %v3572, 48
        %v3759 = vpop.permute.xlu0 %3758
        %3760 = vrot.lane.b32.xlu0 %v3576, 48
        %v3761 = vpop.permute.xlu0 %3760
        %v3762 = vsel %vm1491, %v3759, %v3761
        %v3763 = vsel %vm1491, %v3757, %v3759
        %v3764 = vsel %vm1491, %v3761, %v3757
        %s3765 = sld [smem:[#allocation5 + $0x57]]
        %v3766 = vstv %s3765
        %v3767 = vmul.f32 %v3766, %v3763
        %v3768 = vmul.f32 %v3766, %v3762
        %v3769 = vmul.f32 %v3766, %v3764
        %v3770 = vld [vmem:[#allocation3] sm:$0x7]
        %v3774 = vcombine.low %v3767, %v3768
        %v3776 = vunpack.c.l.s4 1966171168
        %v3777 = vunpack.c.0.s8 %v3776
        %v3778 = vlaneseq
        %v3779 = vshrl.u32 %v3778, 7
        %v3780 = vsub.s32 %v3777, %v3779
        %v3781 = vrot.slane %v3774, %v3780
        %v3783 = vunpack.c.l.s4 1966171168
        %v3784 = vunpack.c.0.s8 %v3783
        %v3785 = vlaneseq
        %v3786 = vshrl.u32 %v3785, 7
        %v3787 = vsub.s32 %v3784, %v3786
        %v3788 = vrot.slane %v3769, %v3787
        %v3789 = vcombine.low %v3781, %v3788
        %v3791 = vunpack.c.l.s4 1966171168
        %v3792 = vunpack.c.0.s8 %v3791
        %v3793 = vlaneseq
        %v3794 = vshrl.u32 %v3793, 7
        %v3795 = vsub.s32 %v3792, %v3794
        %v3796 = vrot.slane %v3789, %v3795
        %v3798 = vadd.f32 %v3770, %v3796
        %3799 = vst.msk [vmem:[#allocation3] sm:$0x7] %vm340, %v3798
        %3800 = vrot.lane.b32.xlu0 %v3568, 32
        %v3801 = vpop.permute.xlu0 %3800
        %3802 = vrot.lane.b32.xlu0 %v3572, 32
        %v3803 = vpop.permute.xlu0 %3802
        %3804 = vrot.lane.b32.xlu0 %v3576, 32
        %v3805 = vpop.permute.xlu0 %3804
        %v3806 = vsel %vm1536, %v3803, %v3805
        %v3807 = vsel %vm1536, %v3801, %v3803
        %v3808 = vsel %vm1536, %v3805, %v3801
        %s3809 = sld [smem:[#allocation5 + $0x5e]]
        %v3810 = vstv %s3809
        %v3811 = vmul.f32 %v3810, %v3807
        %v3812 = vmul.f32 %v3810, %v3806
        %v3813 = vmul.f32 %v3810, %v3808
        %v3814 = vld [vmem:[#allocation3] sm:$0x7]
        %v3818 = vcombine.low %v3811, %v3812
        %v3820 = vunpack.c.l.s4 1966171168
        %v3821 = vunpack.c.0.s8 %v3820
        %v3822 = vlaneseq
        %v3823 = vshrl.u32 %v3822, 7
        %v3824 = vsub.s32 %v3821, %v3823
        %v3825 = vrot.slane %v3818, %v3824
        %v3827 = vunpack.c.l.s4 1966171168
        %v3828 = vunpack.c.0.s8 %v3827
        %v3829 = vlaneseq
        %v3830 = vshrl.u32 %v3829, 7
        %v3831 = vsub.s32 %v3828, %v3830
        %v3832 = vrot.slane %v3813, %v3831
        %v3833 = vcombine.low %v3825, %v3832
        %v3835 = vunpack.c.l.s4 1966171168
        %v3836 = vunpack.c.0.s8 %v3835
        %v3837 = vlaneseq
        %v3838 = vshrl.u32 %v3837, 7
        %v3839 = vsub.s32 %v3836, %v3838
        %v3840 = vrot.slane %v3833, %v3839
        %v3842 = vadd.f32 %v3814, %v3840
        %3843 = vst.msk [vmem:[#allocation3] sm:$0x7] %vm340, %v3842
        %v3844 = vld [vmem:[%s1575] ss:$8 sm:$0x7]
        %v3845 = vmul.f32 %v2577, %v3844
        %v3847 = vlaneseq
        %v3848 = vshrl.u32 %v3847, 7
        %v3849 = vsub.s32 0, %v3848
        %v3850 = vrot.slane %v3845, %v3849
        %v3851 = vlaneseq
        %v3852 = vshrl.u32 %v3851, 7
        %v3853 = vsub.s32 1, %v3852
        %v3854 = vrot.slane %v3845, %v3853
        %v3855 = vlaneseq
        %v3856 = vshrl.u32 %v3855, 7
        %v3857 = vsub.s32 2, %v3856
        %v3858 = vrot.slane %v3845, %v3857
        %3862 = vrot.lane.b32.xlu0 %v3850, 127
        %v3863 = vpop.permute.xlu0 %3862
        %3864 = vrot.lane.b32.xlu0 %v3854, 127
        %v3865 = vpop.permute.xlu0 %3864
        %3866 = vrot.lane.b32.xlu0 %v3858, 127
        %v3867 = vpop.permute.xlu0 %3866
        %v3868 = vsel %vm1600, %v3865, %v3867
        %v3869 = vsel %vm1600, %v3863, %v3865
        %v3870 = vsel %vm1600, %v3867, %v3863
        %s3871 = sld [smem:[#allocation5 + $0x35]]
        %v3872 = vstv %s3871
        %v3873 = vmul.f32 %v3872, %v3869
        %v3874 = vmul.f32 %v3872, %v3868
        %v3875 = vmul.f32 %v3872, %v3870
        %v3876 = vld [vmem:[#allocation3] sm:$0x7]
        %v3880 = vcombine.low %v3873, %v3874
        %v3882 = vunpack.c.l.s4 1966171168
        %v3883 = vunpack.c.0.s8 %v3882
        %v3884 = vlaneseq
        %v3885 = vshrl.u32 %v3884, 7
        %v3886 = vsub.s32 %v3883, %v3885
        %v3887 = vrot.slane %v3880, %v3886
        %v3889 = vunpack.c.l.s4 1966171168
        %v3890 = vunpack.c.0.s8 %v3889
        %v3891 = vlaneseq
        %v3892 = vshrl.u32 %v3891, 7
        %v3893 = vsub.s32 %v3890, %v3892
        %v3894 = vrot.slane %v3875, %v3893
        %v3895 = vcombine.low %v3887, %v3894
        %v3897 = vunpack.c.l.s4 1966171168
        %v3898 = vunpack.c.0.s8 %v3897
        %v3899 = vlaneseq
        %v3900 = vshrl.u32 %v3899, 7
        %v3901 = vsub.s32 %v3898, %v3900
        %v3902 = vrot.slane %v3895, %v3901
        %v3904 = vadd.f32 %v3876, %v3902
        %3905 = vst.msk [vmem:[#allocation3] sm:$0x7] %vm340, %v3904
        %3906 = vrot.lane.b32.xlu0 %v3850, 111
        %v3907 = vpop.permute.xlu0 %3906
        %3908 = vrot.lane.b32.xlu0 %v3854, 111
        %v3909 = vpop.permute.xlu0 %3908
        %3910 = vrot.lane.b32.xlu0 %v3858, 111
        %v3911 = vpop.permute.xlu0 %3910
        %v3912 = vsel %vm1645, %v3909, %v3911
        %v3913 = vsel %vm1645, %v3907, %v3909
        %v3914 = vsel %vm1645, %v3911, %v3907
        %s3915 = sld [smem:[#allocation5 + $0x3c]]
        %v3916 = vstv %s3915
        %v3917 = vmul.f32 %v3916, %v3913
        %v3918 = vmul.f32 %v3916, %v3912
        %v3919 = vmul.f32 %v3916, %v3914
        %v3920 = vld [vmem:[#allocation3] sm:$0x7]
        %v3924 = vcombine.low %v3917, %v3918
        %v3926 = vunpack.c.l.s4 1966171168
        %v3927 = vunpack.c.0.s8 %v3926
        %v3928 = vlaneseq
        %v3929 = vshrl.u32 %v3928, 7
        %v3930 = vsub.s32 %v3927, %v3929
        %v3931 = vrot.slane %v3924, %v3930
        %v3933 = vunpack.c.l.s4 1966171168
        %v3934 = vunpack.c.0.s8 %v3933
        %v3935 = vlaneseq
        %v3936 = vshrl.u32 %v3935, 7
        %v3937 = vsub.s32 %v3934, %v3936
        %v3938 = vrot.slane %v3919, %v3937
        %v3939 = vcombine.low %v3931, %v3938
        %v3941 = vunpack.c.l.s4 1966171168
        %v3942 = vunpack.c.0.s8 %v3941
        %v3943 = vlaneseq
        %v3944 = vshrl.u32 %v3943, 7
        %v3945 = vsub.s32 %v3942, %v3944
        %v3946 = vrot.slane %v3939, %v3945
        %v3948 = vadd.f32 %v3920, %v3946
        %3949 = vst.msk [vmem:[#allocation3] sm:$0x7] %vm340, %v3948
        %3950 = vrot.lane.b32.xlu0 %v3850, 95
        %v3951 = vpop.permute.xlu0 %3950
        %3952 = vrot.lane.b32.xlu0 %v3854, 95
        %v3953 = vpop.permute.xlu0 %3952
        %3954 = vrot.lane.b32.xlu0 %v3858, 95
        %v3955 = vpop.permute.xlu0 %3954
        %v3956 = vsel %vm1690, %v3953, %v3955
        %v3957 = vsel %vm1690, %v3951, %v3953
        %v3958 = vsel %vm1690, %v3955, %v3951
        %s3959 = sld [smem:[#allocation5 + $0x43]]
        %v3960 = vstv %s3959
        %v3961 = vmul.f32 %v3960, %v3957
        %v3962 = vmul.f32 %v3960, %v3956
        %v3963 = vmul.f32 %v3960, %v3958
        %v3964 = vld [vmem:[#allocation3] sm:$0x7]
        %v3968 = vcombine.low %v3961, %v3962
        %v3970 = vunpack.c.l.s4 1966171168
        %v3971 = vunpack.c.0.s8 %v3970
        %v3972 = vlaneseq
        %v3973 = vshrl.u32 %v3972, 7
        %v3974 = vsub.s32 %v3971, %v3973
        %v3975 = vrot.slane %v3968, %v3974
        %v3977 = vunpack.c.l.s4 1966171168
        %v3978 = vunpack.c.0.s8 %v3977
        %v3979 = vlaneseq
        %v3980 = vshrl.u32 %v3979, 7
        %v3981 = vsub.s32 %v3978, %v3980
        %v3982 = vrot.slane %v3963, %v3981
        %v3983 = vcombine.low %v3975, %v3982
        %v3985 = vunpack.c.l.s4 1966171168
        %v3986 = vunpack.c.0.s8 %v3985
        %v3987 = vlaneseq
        %v3988 = vshrl.u32 %v3987, 7
        %v3989 = vsub.s32 %v3986, %v3988
        %v3990 = vrot.slane %v3983, %v3989
        %v3992 = vadd.f32 %v3964, %v3990
        %3993 = vst.msk [vmem:[#allocation3] sm:$0x7] %vm340, %v3992
        %3994 = vrot.lane.b32.xlu0 %v3850, 79
        %v3995 = vpop.permute.xlu0 %3994
        %3996 = vrot.lane.b32.xlu0 %v3854, 79
        %v3997 = vpop.permute.xlu0 %3996
        %3998 = vrot.lane.b32.xlu0 %v3858, 79
        %v3999 = vpop.permute.xlu0 %3998
        %v4000 = vsel %vm1735, %v3997, %v3999
        %v4001 = vsel %vm1735, %v3995, %v3997
        %v4002 = vsel %vm1735, %v3999, %v3995
        %s4003 = sld [smem:[#allocation5 + $0x4a]]
        %v4004 = vstv %s4003
        %v4005 = vmul.f32 %v4004, %v4001
        %v4006 = vmul.f32 %v4004, %v4000
        %v4007 = vmul.f32 %v4004, %v4002
        %v4008 = vld [vmem:[#allocation3] sm:$0x7]
        %v4012 = vcombine.low %v4005, %v4006
        %v4014 = vunpack.c.l.s4 1966171168
        %v4015 = vunpack.c.0.s8 %v4014
        %v4016 = vlaneseq
        %v4017 = vshrl.u32 %v4016, 7
        %v4018 = vsub.s32 %v4015, %v4017
        %v4019 = vrot.slane %v4012, %v4018
        %v4021 = vunpack.c.l.s4 1966171168
        %v4022 = vunpack.c.0.s8 %v4021
        %v4023 = vlaneseq
        %v4024 = vshrl.u32 %v4023, 7
        %v4025 = vsub.s32 %v4022, %v4024
        %v4026 = vrot.slane %v4007, %v4025
        %v4027 = vcombine.low %v4019, %v4026
        %v4029 = vunpack.c.l.s4 1966171168
        %v4030 = vunpack.c.0.s8 %v4029
        %v4031 = vlaneseq
        %v4032 = vshrl.u32 %v4031, 7
        %v4033 = vsub.s32 %v4030, %v4032
        %v4034 = vrot.slane %v4027, %v4033
        %v4036 = vadd.f32 %v4008, %v4034
        %4037 = vst.msk [vmem:[#allocation3] sm:$0x7] %vm340, %v4036
        %4038 = vrot.lane.b32.xlu0 %v3850, 63
        %v4039 = vpop.permute.xlu0 %4038
        %4040 = vrot.lane.b32.xlu0 %v3854, 63
        %v4041 = vpop.permute.xlu0 %4040
        %4042 = vrot.lane.b32.xlu0 %v3858, 63
        %v4043 = vpop.permute.xlu0 %4042
        %v4044 = vsel %vm1780, %v4041, %v4043
        %v4045 = vsel %vm1780, %v4039, %v4041
        %v4046 = vsel %vm1780, %v4043, %v4039
        %s4047 = sld [smem:[#allocation5 + $0x51]]
        %v4048 = vstv %s4047
        %v4049 = vmul.f32 %v4048, %v4045
        %v4050 = vmul.f32 %v4048, %v4044
        %v4051 = vmul.f32 %v4048, %v4046
        %v4052 = vld [vmem:[#allocation3] sm:$0x7]
        %v4056 = vcombine.low %v4049, %v4050
        %v4058 = vunpack.c.l.s4 1966171168
        %v4059 = vunpack.c.0.s8 %v4058
        %v4060 = vlaneseq
        %v4061 = vshrl.u32 %v4060, 7
        %v4062 = vsub.s32 %v4059, %v4061
        %v4063 = vrot.slane %v4056, %v4062
        %v4065 = vunpack.c.l.s4 1966171168
        %v4066 = vunpack.c.0.s8 %v4065
        %v4067 = vlaneseq
        %v4068 = vshrl.u32 %v4067, 7
        %v4069 = vsub.s32 %v4066, %v4068
        %v4070 = vrot.slane %v4051, %v4069
        %v4071 = vcombine.low %v4063, %v4070
        %v4073 = vunpack.c.l.s4 1966171168
        %v4074 = vunpack.c.0.s8 %v4073
        %v4075 = vlaneseq
        %v4076 = vshrl.u32 %v4075, 7
        %v4077 = vsub.s32 %v4074, %v4076
        %v4078 = vrot.slane %v4071, %v4077
        %v4080 = vadd.f32 %v4052, %v4078
        %4081 = vst.msk [vmem:[#allocation3] sm:$0x7] %vm340, %v4080
        %4082 = vrot.lane.b32.xlu0 %v3850, 47
        %v4083 = vpop.permute.xlu0 %4082
        %4084 = vrot.lane.b32.xlu0 %v3854, 47
        %v4085 = vpop.permute.xlu0 %4084
        %4086 = vrot.lane.b32.xlu0 %v3858, 47
        %v4087 = vpop.permute.xlu0 %4086
        %v4088 = vsel %vm1825, %v4085, %v4087
        %v4089 = vsel %vm1825, %v4083, %v4085
        %v4090 = vsel %vm1825, %v4087, %v4083
        %s4091 = sld [smem:[#allocation5 + $0x58]]
        %v4092 = vstv %s4091
        %v4093 = vmul.f32 %v4092, %v4089
        %v4094 = vmul.f32 %v4092, %v4088
        %v4095 = vmul.f32 %v4092, %v4090
        %v4096 = vld [vmem:[#allocation3] sm:$0x7]
        %v4100 = vcombine.low %v4093, %v4094
        %v4102 = vunpack.c.l.s4 1966171168
        %v4103 = vunpack.c.0.s8 %v4102
        %v4104 = vlaneseq
        %v4105 = vshrl.u32 %v4104, 7
        %v4106 = vsub.s32 %v4103, %v4105
        %v4107 = vrot.slane %v4100, %v4106
        %v4109 = vunpack.c.l.s4 1966171168
        %v4110 = vunpack.c.0.s8 %v4109
        %v4111 = vlaneseq
        %v4112 = vshrl.u32 %v4111, 7
        %v4113 = vsub.s32 %v4110, %v4112
        %v4114 = vrot.slane %v4095, %v4113
        %v4115 = vcombine.low %v4107, %v4114
        %v4117 = vunpack.c.l.s4 1966171168
        %v4118 = vunpack.c.0.s8 %v4117
        %v4119 = vlaneseq
        %v4120 = vshrl.u32 %v4119, 7
        %v4121 = vsub.s32 %v4118, %v4120
        %v4122 = vrot.slane %v4115, %v4121
        %v4124 = vadd.f32 %v4096, %v4122
        %4125 = vst.msk [vmem:[#allocation3] sm:$0x7] %vm340, %v4124
        %4126 = vrot.lane.b32.xlu0 %v3850, 31
        %v4127 = vpop.permute.xlu0 %4126
        %4128 = vrot.lane.b32.xlu0 %v3854, 31
        %v4129 = vpop.permute.xlu0 %4128
        %4130 = vrot.lane.b32.xlu0 %v3858, 31
        %v4131 = vpop.permute.xlu0 %4130
        %v4132 = vsel %vm1870, %v4129, %v4131
        %v4133 = vsel %vm1870, %v4127, %v4129
        %v4134 = vsel %vm1870, %v4131, %v4127
        %s4135 = sld [smem:[#allocation5 + $0x5f]]
        %v4136 = vstv %s4135
        %v4137 = vmul.f32 %v4136, %v4133
        %v4138 = vmul.f32 %v4136, %v4132
        %v4139 = vmul.f32 %v4136, %v4134
        %v4140 = vld [vmem:[#allocation3] sm:$0x7]
        %v4144 = vcombine.low %v4137, %v4138
        %v4146 = vunpack.c.l.s4 1966171168
        %v4147 = vunpack.c.0.s8 %v4146
        %v4148 = vlaneseq
        %v4149 = vshrl.u32 %v4148, 7
        %v4150 = vsub.s32 %v4147, %v4149
        %v4151 = vrot.slane %v4144, %v4150
        %v4153 = vunpack.c.l.s4 1966171168
        %v4154 = vunpack.c.0.s8 %v4153
        %v4155 = vlaneseq
        %v4156 = vshrl.u32 %v4155, 7
        %v4157 = vsub.s32 %v4154, %v4156
        %v4158 = vrot.slane %v4139, %v4157
        %v4159 = vcombine.low %v4151, %v4158
        %v4161 = vunpack.c.l.s4 1966171168
        %v4162 = vunpack.c.0.s8 %v4161
        %v4163 = vlaneseq
        %v4164 = vshrl.u32 %v4163, 7
        %v4165 = vsub.s32 %v4162, %v4164
        %v4166 = vrot.slane %v4159, %v4165
        %v4168 = vadd.f32 %v4140, %v4166
        %4169 = vst.msk [vmem:[#allocation3] sm:$0x7] %vm340, %v4168
        %v4170 = vld [vmem:[%s1909] ss:$8 sm:$0x7]
        %v4171 = vmul.f32 %v2577, %v4170
        %v4173 = vlaneseq
        %v4174 = vshrl.u32 %v4173, 7
        %v4175 = vsub.s32 0, %v4174
        %v4176 = vrot.slane %v4171, %v4175
        %v4177 = vlaneseq
        %v4178 = vshrl.u32 %v4177, 7
        %v4179 = vsub.s32 1, %v4178
        %v4180 = vrot.slane %v4171, %v4179
        %v4181 = vlaneseq
        %v4182 = vshrl.u32 %v4181, 7
        %v4183 = vsub.s32 2, %v4182
        %v4184 = vrot.slane %v4171, %v4183
        %4188 = vrot.lane.b32.xlu0 %v4176, 126
        %v4189 = vpop.permute.xlu0 %4188
        %4190 = vrot.lane.b32.xlu0 %v4180, 126
        %v4191 = vpop.permute.xlu0 %4190
        %4192 = vrot.lane.b32.xlu0 %v4184, 126
        %v4193 = vpop.permute.xlu0 %4192
        %v4194 = vsel %vm1934, %v4191, %v4193
        %v4195 = vsel %vm1934, %v4189, %v4191
        %v4196 = vsel %vm1934, %v4193, %v4189
        %s4197 = sld [smem:[#allocation5 + $0x36]]
        %v4198 = vstv %s4197
        %v4199 = vmul.f32 %v4198, %v4195
        %v4200 = vmul.f32 %v4198, %v4194
        %v4201 = vmul.f32 %v4198, %v4196
        %v4202 = vld [vmem:[#allocation3] sm:$0x7]
        %v4206 = vcombine.low %v4199, %v4200
        %v4208 = vunpack.c.l.s4 1966171168
        %v4209 = vunpack.c.0.s8 %v4208
        %v4210 = vlaneseq
        %v4211 = vshrl.u32 %v4210, 7
        %v4212 = vsub.s32 %v4209, %v4211
        %v4213 = vrot.slane %v4206, %v4212
        %v4215 = vunpack.c.l.s4 1966171168
        %v4216 = vunpack.c.0.s8 %v4215
        %v4217 = vlaneseq
        %v4218 = vshrl.u32 %v4217, 7
        %v4219 = vsub.s32 %v4216, %v4218
        %v4220 = vrot.slane %v4201, %v4219
        %v4221 = vcombine.low %v4213, %v4220
        %v4223 = vunpack.c.l.s4 1966171168
        %v4224 = vunpack.c.0.s8 %v4223
        %v4225 = vlaneseq
        %v4226 = vshrl.u32 %v4225, 7
        %v4227 = vsub.s32 %v4224, %v4226
        %v4228 = vrot.slane %v4221, %v4227
        %v4230 = vadd.f32 %v4202, %v4228
        %4231 = vst.msk [vmem:[#allocation3] sm:$0x7] %vm340, %v4230
        %4232 = vrot.lane.b32.xlu0 %v4176, 110
        %v4233 = vpop.permute.xlu0 %4232
        %4234 = vrot.lane.b32.xlu0 %v4180, 110
        %v4235 = vpop.permute.xlu0 %4234
        %4236 = vrot.lane.b32.xlu0 %v4184, 110
        %v4237 = vpop.permute.xlu0 %4236
        %v4238 = vsel %vm1979, %v4235, %v4237
        %v4239 = vsel %vm1979, %v4233, %v4235
        %v4240 = vsel %vm1979, %v4237, %v4233
        %s4241 = sld [smem:[#allocation5 + $0x3d]]
        %v4242 = vstv %s4241
        %v4243 = vmul.f32 %v4242, %v4239
        %v4244 = vmul.f32 %v4242, %v4238
        %v4245 = vmul.f32 %v4242, %v4240
        %v4246 = vld [vmem:[#allocation3] sm:$0x7]
        %v4250 = vcombine.low %v4243, %v4244
        %v4252 = vunpack.c.l.s4 1966171168
        %v4253 = vunpack.c.0.s8 %v4252
        %v4254 = vlaneseq
        %v4255 = vshrl.u32 %v4254, 7
        %v4256 = vsub.s32 %v4253, %v4255
        %v4257 = vrot.slane %v4250, %v4256
        %v4259 = vunpack.c.l.s4 1966171168
        %v4260 = vunpack.c.0.s8 %v4259
        %v4261 = vlaneseq
        %v4262 = vshrl.u32 %v4261, 7
        %v4263 = vsub.s32 %v4260, %v4262
        %v4264 = vrot.slane %v4245, %v4263
        %v4265 = vcombine.low %v4257, %v4264
        %v4267 = vunpack.c.l.s4 1966171168
        %v4268 = vunpack.c.0.s8 %v4267
        %v4269 = vlaneseq
        %v4270 = vshrl.u32 %v4269, 7
        %v4271 = vsub.s32 %v4268, %v4270
        %v4272 = vrot.slane %v4265, %v4271
        %v4274 = vadd.f32 %v4246, %v4272
        %4275 = vst.msk [vmem:[#allocation3] sm:$0x7] %vm340, %v4274
        %4276 = vrot.lane.b32.xlu0 %v4176, 94
        %v4277 = vpop.permute.xlu0 %4276
        %4278 = vrot.lane.b32.xlu0 %v4180, 94
        %v4279 = vpop.permute.xlu0 %4278
        %4280 = vrot.lane.b32.xlu0 %v4184, 94
        %v4281 = vpop.permute.xlu0 %4280
        %v4282 = vsel %vm2024, %v4279, %v4281
        %v4283 = vsel %vm2024, %v4277, %v4279
        %v4284 = vsel %vm2024, %v4281, %v4277
        %s4285 = sld [smem:[#allocation5 + $0x44]]
        %v4286 = vstv %s4285
        %v4287 = vmul.f32 %v4286, %v4283
        %v4288 = vmul.f32 %v4286, %v4282
        %v4289 = vmul.f32 %v4286, %v4284
        %v4290 = vld [vmem:[#allocation3] sm:$0x7]
        %v4294 = vcombine.low %v4287, %v4288
        %v4296 = vunpack.c.l.s4 1966171168
        %v4297 = vunpack.c.0.s8 %v4296
        %v4298 = vlaneseq
        %v4299 = vshrl.u32 %v4298, 7
        %v4300 = vsub.s32 %v4297, %v4299
        %v4301 = vrot.slane %v4294, %v4300
        %v4303 = vunpack.c.l.s4 1966171168
        %v4304 = vunpack.c.0.s8 %v4303
        %v4305 = vlaneseq
        %v4306 = vshrl.u32 %v4305, 7
        %v4307 = vsub.s32 %v4304, %v4306
        %v4308 = vrot.slane %v4289, %v4307
        %v4309 = vcombine.low %v4301, %v4308
        %v4311 = vunpack.c.l.s4 1966171168
        %v4312 = vunpack.c.0.s8 %v4311
        %v4313 = vlaneseq
        %v4314 = vshrl.u32 %v4313, 7
        %v4315 = vsub.s32 %v4312, %v4314
        %v4316 = vrot.slane %v4309, %v4315
        %v4318 = vadd.f32 %v4290, %v4316
        %4319 = vst.msk [vmem:[#allocation3] sm:$0x7] %vm340, %v4318
        %4320 = vrot.lane.b32.xlu0 %v4176, 78
        %v4321 = vpop.permute.xlu0 %4320
        %4322 = vrot.lane.b32.xlu0 %v4180, 78
        %v4323 = vpop.permute.xlu0 %4322
        %4324 = vrot.lane.b32.xlu0 %v4184, 78
        %v4325 = vpop.permute.xlu0 %4324
        %v4326 = vsel %vm2069, %v4323, %v4325
        %v4327 = vsel %vm2069, %v4321, %v4323
        %v4328 = vsel %vm2069, %v4325, %v4321
        %s4329 = sld [smem:[#allocation5 + $0x4b]]
        %v4330 = vstv %s4329
        %v4331 = vmul.f32 %v4330, %v4327
        %v4332 = vmul.f32 %v4330, %v4326
        %v4333 = vmul.f32 %v4330, %v4328
        %v4334 = vld [vmem:[#allocation3] sm:$0x7]
        %v4338 = vcombine.low %v4331, %v4332
        %v4340 = vunpack.c.l.s4 1966171168
        %v4341 = vunpack.c.0.s8 %v4340
        %v4342 = vlaneseq
        %v4343 = vshrl.u32 %v4342, 7
        %v4344 = vsub.s32 %v4341, %v4343
        %v4345 = vrot.slane %v4338, %v4344
        %v4347 = vunpack.c.l.s4 1966171168
        %v4348 = vunpack.c.0.s8 %v4347
        %v4349 = vlaneseq
        %v4350 = vshrl.u32 %v4349, 7
        %v4351 = vsub.s32 %v4348, %v4350
        %v4352 = vrot.slane %v4333, %v4351
        %v4353 = vcombine.low %v4345, %v4352
        %v4355 = vunpack.c.l.s4 1966171168
        %v4356 = vunpack.c.0.s8 %v4355
        %v4357 = vlaneseq
        %v4358 = vshrl.u32 %v4357, 7
        %v4359 = vsub.s32 %v4356, %v4358
        %v4360 = vrot.slane %v4353, %v4359
        %v4362 = vadd.f32 %v4334, %v4360
        %4363 = vst.msk [vmem:[#allocation3] sm:$0x7] %vm340, %v4362
        %4364 = vrot.lane.b32.xlu0 %v4176, 62
        %v4365 = vpop.permute.xlu0 %4364
        %4366 = vrot.lane.b32.xlu0 %v4180, 62
        %v4367 = vpop.permute.xlu0 %4366
        %4368 = vrot.lane.b32.xlu0 %v4184, 62
        %v4369 = vpop.permute.xlu0 %4368
        %v4370 = vsel %vm2114, %v4367, %v4369
        %v4371 = vsel %vm2114, %v4365, %v4367
        %v4372 = vsel %vm2114, %v4369, %v4365
        %s4373 = sld [smem:[#allocation5 + $0x52]]
        %v4374 = vstv %s4373
        %v4375 = vmul.f32 %v4374, %v4371
        %v4376 = vmul.f32 %v4374, %v4370
        %v4377 = vmul.f32 %v4374, %v4372
        %v4378 = vld [vmem:[#allocation3] sm:$0x7]
        %v4382 = vcombine.low %v4375, %v4376
        %v4384 = vunpack.c.l.s4 1966171168
        %v4385 = vunpack.c.0.s8 %v4384
        %v4386 = vlaneseq
        %v4387 = vshrl.u32 %v4386, 7
        %v4388 = vsub.s32 %v4385, %v4387
        %v4389 = vrot.slane %v4382, %v4388
        %v4391 = vunpack.c.l.s4 1966171168
        %v4392 = vunpack.c.0.s8 %v4391
        %v4393 = vlaneseq
        %v4394 = vshrl.u32 %v4393, 7
        %v4395 = vsub.s32 %v4392, %v4394
        %v4396 = vrot.slane %v4377, %v4395
        %v4397 = vcombine.low %v4389, %v4396
        %v4399 = vunpack.c.l.s4 1966171168
        %v4400 = vunpack.c.0.s8 %v4399
        %v4401 = vlaneseq
        %v4402 = vshrl.u32 %v4401, 7
        %v4403 = vsub.s32 %v4400, %v4402
        %v4404 = vrot.slane %v4397, %v4403
        %v4406 = vadd.f32 %v4378, %v4404
        %4407 = vst.msk [vmem:[#allocation3] sm:$0x7] %vm340, %v4406
        %4408 = vrot.lane.b32.xlu0 %v4176, 46
        %v4409 = vpop.permute.xlu0 %4408
        %4410 = vrot.lane.b32.xlu0 %v4180, 46
        %v4411 = vpop.permute.xlu0 %4410
        %4412 = vrot.lane.b32.xlu0 %v4184, 46
        %v4413 = vpop.permute.xlu0 %4412
        %v4414 = vsel %vm2159, %v4411, %v4413
        %v4415 = vsel %vm2159, %v4409, %v4411
        %v4416 = vsel %vm2159, %v4413, %v4409
        %s4417 = sld [smem:[#allocation5 + $0x59]]
        %v4418 = vstv %s4417
        %v4419 = vmul.f32 %v4418, %v4415
        %v4420 = vmul.f32 %v4418, %v4414
        %v4421 = vmul.f32 %v4418, %v4416
        %v4422 = vld [vmem:[#allocation3] sm:$0x7]
        %v4426 = vcombine.low %v4419, %v4420
        %v4428 = vunpack.c.l.s4 1966171168
        %v4429 = vunpack.c.0.s8 %v4428
        %v4430 = vlaneseq
        %v4431 = vshrl.u32 %v4430, 7
        %v4432 = vsub.s32 %v4429, %v4431
        %v4433 = vrot.slane %v4426, %v4432
        %v4435 = vunpack.c.l.s4 1966171168
        %v4436 = vunpack.c.0.s8 %v4435
        %v4437 = vlaneseq
        %v4438 = vshrl.u32 %v4437, 7
        %v4439 = vsub.s32 %v4436, %v4438
        %v4440 = vrot.slane %v4421, %v4439
        %v4441 = vcombine.low %v4433, %v4440
        %v4443 = vunpack.c.l.s4 1966171168
        %v4444 = vunpack.c.0.s8 %v4443
        %v4445 = vlaneseq
        %v4446 = vshrl.u32 %v4445, 7
        %v4447 = vsub.s32 %v4444, %v4446
        %v4448 = vrot.slane %v4441, %v4447
        %v4450 = vadd.f32 %v4422, %v4448
        %4451 = vst.msk [vmem:[#allocation3] sm:$0x7] %vm340, %v4450
        %4452 = vrot.lane.b32.xlu0 %v4176, 30
        %v4453 = vpop.permute.xlu0 %4452
        %4454 = vrot.lane.b32.xlu0 %v4180, 30
        %v4455 = vpop.permute.xlu0 %4454
        %4456 = vrot.lane.b32.xlu0 %v4184, 30
        %v4457 = vpop.permute.xlu0 %4456
        %v4458 = vsel %vm2204, %v4455, %v4457
        %v4459 = vsel %vm2204, %v4453, %v4455
        %v4460 = vsel %vm2204, %v4457, %v4453
        %s4461 = sld [smem:[#allocation5 + $0x60]]
        %v4462 = vstv %s4461
        %v4463 = vmul.f32 %v4462, %v4459
        %v4464 = vmul.f32 %v4462, %v4458
        %v4465 = vmul.f32 %v4462, %v4460
        %v4466 = vld [vmem:[#allocation3] sm:$0x7]
        %v4470 = vcombine.low %v4463, %v4464
        %v4472 = vunpack.c.l.s4 1966171168
        %v4473 = vunpack.c.0.s8 %v4472
        %v4474 = vlaneseq
        %v4475 = vshrl.u32 %v4474, 7
        %v4476 = vsub.s32 %v4473, %v4475
        %v4477 = vrot.slane %v4470, %v4476
        %v4479 = vunpack.c.l.s4 1966171168
        %v4480 = vunpack.c.0.s8 %v4479
        %v4481 = vlaneseq
        %v4482 = vshrl.u32 %v4481, 7
        %v4483 = vsub.s32 %v4480, %v4482
        %v4484 = vrot.slane %v4465, %v4483
        %v4485 = vcombine.low %v4477, %v4484
        %v4487 = vunpack.c.l.s4 1966171168
        %v4488 = vunpack.c.0.s8 %v4487
        %v4489 = vlaneseq
        %v4490 = vshrl.u32 %v4489, 7
        %v4491 = vsub.s32 %v4488, %v4490
        %v4492 = vrot.slane %v4485, %v4491
        %v4494 = vadd.f32 %v4466, %v4492
        %4495 = vst.msk [vmem:[#allocation3] sm:$0x7] %vm340, %v4494
        %v4496 = vld [vmem:[%s2243] ss:$8 sm:$0x7]
        %v4497 = vmul.f32 %v2577, %v4496
        %v4499 = vlaneseq
        %v4500 = vshrl.u32 %v4499, 7
        %v4501 = vsub.s32 0, %v4500
        %v4502 = vrot.slane %v4497, %v4501
        %v4503 = vlaneseq
        %v4504 = vshrl.u32 %v4503, 7
        %v4505 = vsub.s32 1, %v4504
        %v4506 = vrot.slane %v4497, %v4505
        %v4507 = vlaneseq
        %v4508 = vshrl.u32 %v4507, 7
        %v4509 = vsub.s32 2, %v4508
        %v4510 = vrot.slane %v4497, %v4509
        %4514 = vrot.lane.b32.xlu0 %v4502, 125
        %v4515 = vpop.permute.xlu0 %4514
        %4516 = vrot.lane.b32.xlu0 %v4506, 125
        %v4517 = vpop.permute.xlu0 %4516
        %4518 = vrot.lane.b32.xlu0 %v4510, 125
        %v4519 = vpop.permute.xlu0 %4518
        %v4520 = vsel %vm2268, %v4517, %v4519
        %v4521 = vsel %vm2268, %v4515, %v4517
        %v4522 = vsel %vm2268, %v4519, %v4515
        %s4523 = sld [smem:[#allocation5 + $0x37]]
        %v4524 = vstv %s4523
        %v4525 = vmul.f32 %v4524, %v4521
        %v4526 = vmul.f32 %v4524, %v4520
        %v4527 = vmul.f32 %v4524, %v4522
        %v4528 = vld [vmem:[#allocation3] sm:$0x7]
        %v4532 = vcombine.low %v4525, %v4526
        %v4534 = vunpack.c.l.s4 1966171168
        %v4535 = vunpack.c.0.s8 %v4534
        %v4536 = vlaneseq
        %v4537 = vshrl.u32 %v4536, 7
        %v4538 = vsub.s32 %v4535, %v4537
        %v4539 = vrot.slane %v4532, %v4538
        %v4541 = vunpack.c.l.s4 1966171168
        %v4542 = vunpack.c.0.s8 %v4541
        %v4543 = vlaneseq
        %v4544 = vshrl.u32 %v4543, 7
        %v4545 = vsub.s32 %v4542, %v4544
        %v4546 = vrot.slane %v4527, %v4545
        %v4547 = vcombine.low %v4539, %v4546
        %v4549 = vunpack.c.l.s4 1966171168
        %v4550 = vunpack.c.0.s8 %v4549
        %v4551 = vlaneseq
        %v4552 = vshrl.u32 %v4551, 7
        %v4553 = vsub.s32 %v4550, %v4552
        %v4554 = vrot.slane %v4547, %v4553
        %v4556 = vadd.f32 %v4528, %v4554
        %4557 = vst.msk [vmem:[#allocation3] sm:$0x7] %vm340, %v4556
        %4558 = vrot.lane.b32.xlu0 %v4502, 109
        %v4559 = vpop.permute.xlu0 %4558
        %4560 = vrot.lane.b32.xlu0 %v4506, 109
        %v4561 = vpop.permute.xlu0 %4560
        %4562 = vrot.lane.b32.xlu0 %v4510, 109
        %v4563 = vpop.permute.xlu0 %4562
        %v4564 = vsel %vm2313, %v4561, %v4563
        %v4565 = vsel %vm2313, %v4559, %v4561
        %v4566 = vsel %vm2313, %v4563, %v4559
        %s4567 = sld [smem:[#allocation5 + $0x3e]]
        %v4568 = vstv %s4567
        %v4569 = vmul.f32 %v4568, %v4565
        %v4570 = vmul.f32 %v4568, %v4564
        %v4571 = vmul.f32 %v4568, %v4566
        %v4572 = vld [vmem:[#allocation3] sm:$0x7]
        %v4576 = vcombine.low %v4569, %v4570
        %v4578 = vunpack.c.l.s4 1966171168
        %v4579 = vunpack.c.0.s8 %v4578
        %v4580 = vlaneseq
        %v4581 = vshrl.u32 %v4580, 7
        %v4582 = vsub.s32 %v4579, %v4581
        %v4583 = vrot.slane %v4576, %v4582
        %v4585 = vunpack.c.l.s4 1966171168
        %v4586 = vunpack.c.0.s8 %v4585
        %v4587 = vlaneseq
        %v4588 = vshrl.u32 %v4587, 7
        %v4589 = vsub.s32 %v4586, %v4588
        %v4590 = vrot.slane %v4571, %v4589
        %v4591 = vcombine.low %v4583, %v4590
        %v4593 = vunpack.c.l.s4 1966171168
        %v4594 = vunpack.c.0.s8 %v4593
        %v4595 = vlaneseq
        %v4596 = vshrl.u32 %v4595, 7
        %v4597 = vsub.s32 %v4594, %v4596
        %v4598 = vrot.slane %v4591, %v4597
        %v4600 = vadd.f32 %v4572, %v4598
        %4601 = vst.msk [vmem:[#allocation3] sm:$0x7] %vm340, %v4600
        %4602 = vrot.lane.b32.xlu0 %v4502, 93
        %v4603 = vpop.permute.xlu0 %4602
        %4604 = vrot.lane.b32.xlu0 %v4506, 93
        %v4605 = vpop.permute.xlu0 %4604
        %4606 = vrot.lane.b32.xlu0 %v4510, 93
        %v4607 = vpop.permute.xlu0 %4606
        %v4608 = vsel %vm2358, %v4605, %v4607
        %v4609 = vsel %vm2358, %v4603, %v4605
        %v4610 = vsel %vm2358, %v4607, %v4603
        %s4611 = sld [smem:[#allocation5 + $0x45]]
        %v4612 = vstv %s4611
        %v4613 = vmul.f32 %v4612, %v4609
        %v4614 = vmul.f32 %v4612, %v4608
        %v4615 = vmul.f32 %v4612, %v4610
        %v4616 = vld [vmem:[#allocation3] sm:$0x7]
        %v4620 = vcombine.low %v4613, %v4614
        %v4622 = vunpack.c.l.s4 1966171168
        %v4623 = vunpack.c.0.s8 %v4622
        %v4624 = vlaneseq
        %v4625 = vshrl.u32 %v4624, 7
        %v4626 = vsub.s32 %v4623, %v4625
        %v4627 = vrot.slane %v4620, %v4626
        %v4629 = vunpack.c.l.s4 1966171168
        %v4630 = vunpack.c.0.s8 %v4629
        %v4631 = vlaneseq
        %v4632 = vshrl.u32 %v4631, 7
        %v4633 = vsub.s32 %v4630, %v4632
        %v4634 = vrot.slane %v4615, %v4633
        %v4635 = vcombine.low %v4627, %v4634
        %v4637 = vunpack.c.l.s4 1966171168
        %v4638 = vunpack.c.0.s8 %v4637
        %v4639 = vlaneseq
        %v4640 = vshrl.u32 %v4639, 7
        %v4641 = vsub.s32 %v4638, %v4640
        %v4642 = vrot.slane %v4635, %v4641
        %v4644 = vadd.f32 %v4616, %v4642
        %4645 = vst.msk [vmem:[#allocation3] sm:$0x7] %vm340, %v4644
        %4646 = vrot.lane.b32.xlu0 %v4502, 77
        %v4647 = vpop.permute.xlu0 %4646
        %4648 = vrot.lane.b32.xlu0 %v4506, 77
        %v4649 = vpop.permute.xlu0 %4648
        %4650 = vrot.lane.b32.xlu0 %v4510, 77
        %v4651 = vpop.permute.xlu0 %4650
        %v4652 = vsel %vm2403, %v4649, %v4651
        %v4653 = vsel %vm2403, %v4647, %v4649
        %v4654 = vsel %vm2403, %v4651, %v4647
        %s4655 = sld [smem:[#allocation5 + $0x4c]]
        %v4656 = vstv %s4655
        %v4657 = vmul.f32 %v4656, %v4653
        %v4658 = vmul.f32 %v4656, %v4652
        %v4659 = vmul.f32 %v4656, %v4654
        %v4660 = vld [vmem:[#allocation3] sm:$0x7]
        %v4664 = vcombine.low %v4657, %v4658
        %v4666 = vunpack.c.l.s4 1966171168
        %v4667 = vunpack.c.0.s8 %v4666
        %v4668 = vlaneseq
        %v4669 = vshrl.u32 %v4668, 7
        %v4670 = vsub.s32 %v4667, %v4669
        %v4671 = vrot.slane %v4664, %v4670
        %v4673 = vunpack.c.l.s4 1966171168
        %v4674 = vunpack.c.0.s8 %v4673
        %v4675 = vlaneseq
        %v4676 = vshrl.u32 %v4675, 7
        %v4677 = vsub.s32 %v4674, %v4676
        %v4678 = vrot.slane %v4659, %v4677
        %v4679 = vcombine.low %v4671, %v4678
        %v4681 = vunpack.c.l.s4 1966171168
        %v4682 = vunpack.c.0.s8 %v4681
        %v4683 = vlaneseq
        %v4684 = vshrl.u32 %v4683, 7
        %v4685 = vsub.s32 %v4682, %v4684
        %v4686 = vrot.slane %v4679, %v4685
        %v4688 = vadd.f32 %v4660, %v4686
        %4689 = vst.msk [vmem:[#allocation3] sm:$0x7] %vm340, %v4688
        %4690 = vrot.lane.b32.xlu0 %v4502, 61
        %v4691 = vpop.permute.xlu0 %4690
        %4692 = vrot.lane.b32.xlu0 %v4506, 61
        %v4693 = vpop.permute.xlu0 %4692
        %4694 = vrot.lane.b32.xlu0 %v4510, 61
        %v4695 = vpop.permute.xlu0 %4694
        %v4696 = vsel %vm2448, %v4693, %v4695
        %v4697 = vsel %vm2448, %v4691, %v4693
        %v4698 = vsel %vm2448, %v4695, %v4691
        %s4699 = sld [smem:[#allocation5 + $0x53]]
        %v4700 = vstv %s4699
        %v4701 = vmul.f32 %v4700, %v4697
        %v4702 = vmul.f32 %v4700, %v4696
        %v4703 = vmul.f32 %v4700, %v4698
        %v4704 = vld [vmem:[#allocation3] sm:$0x7]
        %v4708 = vcombine.low %v4701, %v4702
        %v4710 = vunpack.c.l.s4 1966171168
        %v4711 = vunpack.c.0.s8 %v4710
        %v4712 = vlaneseq
        %v4713 = vshrl.u32 %v4712, 7
        %v4714 = vsub.s32 %v4711, %v4713
        %v4715 = vrot.slane %v4708, %v4714
        %v4717 = vunpack.c.l.s4 1966171168
        %v4718 = vunpack.c.0.s8 %v4717
        %v4719 = vlaneseq
        %v4720 = vshrl.u32 %v4719, 7
        %v4721 = vsub.s32 %v4718, %v4720
        %v4722 = vrot.slane %v4703, %v4721
        %v4723 = vcombine.low %v4715, %v4722
        %v4725 = vunpack.c.l.s4 1966171168
        %v4726 = vunpack.c.0.s8 %v4725
        %v4727 = vlaneseq
        %v4728 = vshrl.u32 %v4727, 7
        %v4729 = vsub.s32 %v4726, %v4728
        %v4730 = vrot.slane %v4723, %v4729
        %v4732 = vadd.f32 %v4704, %v4730
        %4733 = vst.msk [vmem:[#allocation3] sm:$0x7] %vm340, %v4732
        %4734 = vrot.lane.b32.xlu0 %v4502, 45
        %v4735 = vpop.permute.xlu0 %4734
        %4736 = vrot.lane.b32.xlu0 %v4506, 45
        %v4737 = vpop.permute.xlu0 %4736
        %4738 = vrot.lane.b32.xlu0 %v4510, 45
        %v4739 = vpop.permute.xlu0 %4738
        %v4740 = vsel %vm2493, %v4737, %v4739
        %v4741 = vsel %vm2493, %v4735, %v4737
        %v4742 = vsel %vm2493, %v4739, %v4735
        %s4743 = sld [smem:[#allocation5 + $0x5a]]
        %v4744 = vstv %s4743
        %v4745 = vmul.f32 %v4744, %v4741
        %v4746 = vmul.f32 %v4744, %v4740
        %v4747 = vmul.f32 %v4744, %v4742
        %v4748 = vld [vmem:[#allocation3] sm:$0x7]
        %v4752 = vcombine.low %v4745, %v4746
        %v4754 = vunpack.c.l.s4 1966171168
        %v4755 = vunpack.c.0.s8 %v4754
        %v4756 = vlaneseq
        %v4757 = vshrl.u32 %v4756, 7
        %v4758 = vsub.s32 %v4755, %v4757
        %v4759 = vrot.slane %v4752, %v4758
        %v4761 = vunpack.c.l.s4 1966171168
        %v4762 = vunpack.c.0.s8 %v4761
        %v4763 = vlaneseq
        %v4764 = vshrl.u32 %v4763, 7
        %v4765 = vsub.s32 %v4762, %v4764
        %v4766 = vrot.slane %v4747, %v4765
        %v4767 = vcombine.low %v4759, %v4766
        %v4769 = vunpack.c.l.s4 1966171168
        %v4770 = vunpack.c.0.s8 %v4769
        %v4771 = vlaneseq
        %v4772 = vshrl.u32 %v4771, 7
        %v4773 = vsub.s32 %v4770, %v4772
        %v4774 = vrot.slane %v4767, %v4773
        %v4776 = vadd.f32 %v4748, %v4774
        %4777 = vst.msk [vmem:[#allocation3] sm:$0x7] %vm340, %v4776
        %4778 = vrot.lane.b32.xlu0 %v4502, 29
        %v4779 = vpop.permute.xlu0 %4778
        %4780 = vrot.lane.b32.xlu0 %v4506, 29
        %v4781 = vpop.permute.xlu0 %4780
        %4782 = vrot.lane.b32.xlu0 %v4510, 29
        %v4783 = vpop.permute.xlu0 %4782
        %v4784 = vsel %vm2538, %v4781, %v4783
        %v4785 = vsel %vm2538, %v4779, %v4781
        %v4786 = vsel %vm2538, %v4783, %v4779
        %s4787 = sld [smem:[#allocation5 + $0x61]]
        %v4788 = vstv %s4787
        %v4789 = vmul.f32 %v4788, %v4785
        %v4790 = vmul.f32 %v4788, %v4784
        %v4791 = vmul.f32 %v4788, %v4786
        %v4792 = vld [vmem:[#allocation3] sm:$0x7]
        %v4796 = vcombine.low %v4789, %v4790
        %v4798 = vunpack.c.l.s4 1966171168
        %v4799 = vunpack.c.0.s8 %v4798
        %v4800 = vlaneseq
        %v4801 = vshrl.u32 %v4800, 7
        %v4802 = vsub.s32 %v4799, %v4801
        %v4803 = vrot.slane %v4796, %v4802
        %v4805 = vunpack.c.l.s4 1966171168
        %v4806 = vunpack.c.0.s8 %v4805
        %v4807 = vlaneseq
        %v4808 = vshrl.u32 %v4807, 7
        %v4809 = vsub.s32 %v4806, %v4808
        %v4810 = vrot.slane %v4791, %v4809
        %v4811 = vcombine.low %v4803, %v4810
        %v4813 = vunpack.c.l.s4 1966171168
        %v4814 = vunpack.c.0.s8 %v4813
        %v4815 = vlaneseq
        %v4816 = vshrl.u32 %v4815, 7
        %v4817 = vsub.s32 %v4814, %v4816
        %v4818 = vrot.slane %v4811, %v4817
        %v4820 = vadd.f32 %v4792, %v4818
        %4821 = vst.msk [vmem:[#allocation3] sm:$0x7] %vm340, %v4820
        %v4822 = vld [vmem:[#allocation3] sm:$0x3]
        %v4823 = vxor.u32 %v4822, 2147483648
        %v4824 = vmul.f32 %v4823, 1.442695
        %v4825 = vpow.pop %v4824
        %v4826 = vadd.f32 %v4825, 1.0
        %v4827 = vrcp.pop %v4826
        %v4828 = vmul.f32 1.0, %v4827
        %vm4829 = vcmp.lt.s32.totalorder %v246, 256
        %vm4830 = vmand %vm338, %vm4829
        %4831 = vst.msk [vmem:[#allocation4] sm:$0x3] %vm4830, %v4828
        %v4832 = vld [vmem:[#allocation4] sm:$0x3]
        %v4833 = vld [vmem:[%s179] sm:$0xff]
        %v4835 = vlaneseq
        %v4836 = vshrl.u32 %v4835, 7
        %v4837 = vsub.s32 0, %v4836
        %v4838 = vrot.slane %v4832, %v4837
        %v4839 = vlaneseq
        %v4840 = vshrl.u32 %v4839, 7
        %v4841 = vsub.s32 1, %v4840
        %v4842 = vrot.slane %v4832, %v4841
        %v4843 = vcombine.low %v4838, %v4842
        %v4845 = vmul.f32 %v4833, %v4843
        %4846 = vst [vmem:[%s184] sm:$0xff] %v4845
        %p4847 = scmp.lt.s32.totalorder %s15, 1
        %s4848 = scalar_select %p4847, %s15, 1
        %s4849 = smul.addr %s4848, 2
        %s4850 = smul.addr %s4849, 4
        %s4851 = scalar_lea.vmem %s3, %s4850
        // Predicated region
        $region37: #{spatial_attention.1} parent=31 // pred_check
          %p4852 = pneg %p101
        $region38: #{spatial_attention.1} parent=31 // pred_check_branch
          %4854 = sbr.rel (%p4852) target = $region40
        $region39: #{spatial_attention.1} parent=31 // pred_region
          _
        $region40: #{spatial_attention.1} parent=31 // pred_fallthru
          _
      $region32: #{spatial_attention.1} parent=5 // pred_fallthru
        _
      %p4855 = scmp.le.s32.totalorder 2, %s10
      // Predicated region
      $region41: #{spatial_attention.1} parent=5 // pred_check
        %p4856 = pneg %p4855
      $region42: #{spatial_attention.1} parent=5 // pred_check_branch
        %4858 = sbr.rel (%p4856) target = $region44
      $region43: #{spatial_attention.1} parent=5 // pred_region
        %s4859 = ssub.s32 %s10, 2
        // Predicated region
        $region45: #{spatial_attention.1} parent=43 // pred_check
          %p4860 = pneg %p107
        $region46: #{spatial_attention.1} parent=43 // pred_check_branch
          %4862 = sbr.rel (%p4860) target = $region48
        $region47: #{spatial_attention.1} parent=43 // pred_region
          %p4863 = scmp.lt.s32.totalorder %s16, 1
          %s4864 = scalar_select %p4863, %s16, 1
          %s4865 = smul.addr %s4864, 2
          %s4866 = smul.addr %s4865, 4
          %s4867 = scalar_lea.vmem %s3, %s4866
        $region48: #{spatial_attention.1} parent=43 // pred_fallthru
          _
      $region44: #{spatial_attention.1} parent=5 // pred_fallthru
        _
    $region6: #{spatial_attention.1} parent=1 // loop_footer
      %s14 = sadd.s32 1, %s10
    $region7: #{spatial_attention.1} parent=1 // loop_footer_branch
      %9 = sbr.rel target = $region3
    $region8: #{spatial_attention.1} parent=1 // loop_exit
      _
    %4868 = vsyncpa [#allocation6], 1
    %s4869 = scalar_lea.sflag [#allocation6], 1
    %4870 = vsyncpa %s4869, 1

</llo_original>
